<compile_context>
chip_gen: v7x
topology: tpu7x:2x2x1
jax: 0.10.0
libtpu: 0.0.40
codegen_flags: <defaults>
</compile_context>

<pallas_src>
import functools

import jax
import jax.numpy as jnp
from jax.experimental import pallas as pl
from jax.experimental.pallas import tpu as pltpu


# ------------------------------ helpers -------------------------------------

def _round_up(x, m):
    return ((x + m - 1) // m) * m


def _fold_bn(bn, eps=1e-5):
    scale = bn["gamma"] / jnp.sqrt(bn["var"] + eps)
    shift = bn["beta"] - bn["mean"] * scale
    return scale, shift


def _prep_conv_weight(w_oihw, bn, cin_pad, cout_pad, eps=1e-5):
    """PyTorch (Cout, Cin, 3, 3) -> (3, 3, cin_pad, cout_pad) bf16 with BN scale
    folded in, plus the (1, cout_pad) f32 BN shift."""
    cout, cin, kh, kw = w_oihw.shape
    assert kh == 3 and kw == 3
    scale, shift = _fold_bn(bn, eps)
    w = jnp.transpose(w_oihw, (2, 3, 1, 0)) * scale[None, None, None, :]
    w = jnp.pad(w, ((0, 0), (0, 0), (0, cin_pad - cin), (0, cout_pad - cout)))
    shift_p = jnp.pad(shift, (0, cout_pad - cout)).reshape(1, cout_pad)
    return w.astype(jnp.bfloat16), shift_p.astype(jnp.float32)


# Row order of the packed DownConv weight.  Taps whose space-to-depth phases
# are channel-contiguous are merged into one wide-K matmul inside the kernel:
#   rows [0:4C]  : group (a,b)=(0,0), phases 0..3  -> one K=4C matmul
#   rows [4C:6C] : group (1,0),      phases 0,1    -> one K=2C matmul
#   rows [6C:7C] : tap (0,2) (group (0,1), phase 0)
#   rows [7C:8C] : tap (1,2) (group (0,1), phase 2)
#   rows [8C:9C] : tap (2,2) (group (1,1), phase 0)
_DOWN_TAP_ORDER = ((0, 0), (0, 1), (1, 0), (1, 1),
                   (2, 0), (2, 1),
                   (0, 2), (1, 2),
                   (2, 2))


def _pack_down_weight(w_hwio):
    return jnp.concatenate([w_hwio[kh, kw] for kh, kw in _DOWN_TAP_ORDER], axis=0)


def _space_to_depth_pad(x_nchw, cin_pad):
    """NCHW -> bf16 padded NHWC -> 4-phase space-to-depth.

    Returns (N, Ho+1, Wo+1, 4*cin_pad) bf16 where phase ph = 2p+q holds
    x_pad[2i+p, 2j+q], so the stride-2 3x3 conv becomes stride-1 taps.
    """
    x = jnp.transpose(x_nchw, (0, 2, 3, 1)).astype(jnp.bfloat16)    # NHWC bf16
    n, h, w, c = x.shape
    ho, wo = h // 2, w // 2
    xp = jnp.pad(x, ((0, 0), (1, 1), (1, 1), (0, cin_pad - c)))
    phases = []
    for p in range(2):
        for q in range(2):
            phases.append(xp[:, p::2, q::2, :][:, :ho + 1, :wo + 1, :])
    return jnp.concatenate(phases, axis=-1)


def _vmem_capacity_bytes():
    """Physical VMEM of the current generation (fallback: v7x-sized 64 MiB)."""
    try:
        info = pltpu.get_tpu_info()
        cap = getattr(info, "vmem_capacity_bytes", None)
        if cap:
            return int(cap)
    except Exception:
        pass
    return 64 << 20


def _pick_batch_tile(n, m_img, per_img_bytes, budget_bytes, row_cap=1024):
    """Largest divisor of n that fattens M without blowing VMEM, keeping at
    least 2 grid steps (when n >= 2) so both v7x TensorCores stay busy."""
    best = 1
    for cand in range(1, n + 1):
        if n % cand:
            continue
        if cand * m_img > row_cap:
            continue
        if n >= 2 and n // cand < 2:
            continue
        if cand * per_img_bytes > budget_bytes:
            continue
        best = cand
    return best


# ------------------------------ Pallas kernel --------------------------------

def _zero_halo(ref):
    """Zero only the 1-element spatial halo of a (Bt, H+2, W+2, C) scratch.

    Done every grid step (NOT only at program_id==0): with a "parallel" batch
    axis a TensorCore may never see step 0, and scratch is per-core."""
    bt, hp, wp, c = ref.shape
    zr = jnp.zeros((bt, 1, wp, c), ref.dtype)
    ref[:, 0:1, :, :] = zr
    ref[:, hp - 1:hp, :, :] = zr
    zc = jnp.zeros((bt, hp, 1, c), ref.dtype)
    ref[:, :, 0:1, :] = zc
    ref[:, :, wp - 1:wp, :] = zc


def _bottleneck_kernel(xs2d_ref, wd_ref, sd_ref, w1_ref, s1_ref, w2_ref, s2_ref,
                       out_ref, down_pad_ref, h1_pad_ref,
                       *, Bt, Ho, Wo, cin_p, cmid_p, cout_p, residual):
    f32 = jnp.float32
    bf16 = jnp.bfloat16
    R = Bt * Ho * Wo
    c = cin_p
    dot = functools.partial(jnp.dot, preferred_element_type=f32)

    # ---- DownConv: 3x3 stride-2 conv on the space-to-depth input.
    #      Taps are merged along K into 5 matmuls; patches sliced off the ref.
    def tap(dh, dw, c0, c1):
        return xs2d_ref[:, dh:dh + Ho, dw:dw + Wo, c0:c1].reshape(R, c1 - c0)

    acc = dot(tap(0, 0, 0, 4 * c), wd_ref[0:4 * c])                    # K = 4C
    acc = acc + dot(tap(1, 0, 0, 2 * c), wd_ref[4 * c:6 * c])          # K = 2C
    acc = acc + (dot(tap(0, 1, 0, c), wd_ref[6 * c:7 * c])
                 + dot(tap(0, 1, 2 * c, 3 * c), wd_ref[7 * c:8 * c])
                 + dot(tap(1, 1, 0, c), wd_ref[8 * c:9 * c]))
    down = jnp.maximum(acc + sd_ref[...], 0.0)                         # (R, C) f32

    _zero_halo(down_pad_ref)
    down_pad_ref[:, 1:Ho + 1, 1:Wo + 1, :] = (
        down.astype(bf16).reshape(Bt, Ho, Wo, cin_p))

    # ---- 3x3 stride-1 conv + BN + ReLU (+ Dropout = identity) ---------------
    def conv3x3_s1(src_ref, w_ref, shift_ref, cin, cout):
        # Two partial accumulators shorten the serial add chain behind the MXU.
        acc0 = jnp.zeros((R, cout), f32)
        acc1 = jnp.zeros((R, cout), f32)
        for kh in range(3):
            for kw in range(3):
                patch = src_ref[:, kh:kh + Ho, kw:kw + Wo, :].reshape(R, cin)
                t = dot(patch, w_ref[kh * 3 + kw])
                if (kh * 3 + kw) % 2 == 0:
                    acc0 = acc0 + t
                else:
                    acc1 = acc1 + t
        return jnp.maximum((acc0 + acc1) + shift_ref[...], 0.0)

    h1 = conv3x3_s1(down_pad_ref, w1_ref, s1_ref, cin_p, cmid_p)       # (R, Cm)
    _zero_halo(h1_pad_ref)
    h1_pad_ref[:, 1:Ho + 1, 1:Wo + 1, :] = h1.astype(bf16).reshape(Bt, Ho, Wo, cmid_p)

    y = conv3x3_s1(h1_pad_ref, w2_ref, s2_ref, cmid_p, cout_p)         # (R, Co)
    if residual:
        res = down_pad_ref[:, 1:Ho + 1, 1:Wo + 1, :].reshape(R, cin_p)
        y = y + res.astype(f32)
    out_ref[...] = y.astype(out_ref.dtype).reshape(Bt, Ho * Wo, cout_p)


# ------------------------------ wrapper --------------------------------------

def bottleneck_forward(x_nchw, params, residual_connection=True, eps=1e-5):
    n, in_ch, h, w = x_nchw.shape
    out_ch = params["w2"].shape[0]
    mid_ch = params["w1"].shape[0]
    assert mid_ch == 2 * in_ch
    assert h % 2 == 0 and w % 2 == 0
    if residual_connection:
        assert out_ch == in_ch, "residual add requires out_ch == in_ch"

    cin_p = _round_up(in_ch, 128)
    cmid_p = _round_up(mid_ch, 128)
    cout_p = _round_up(out_ch, 128)
    ho, wo = h // 2, w // 2
    m_img = ho * wo

    xs2d = _space_to_depth_pad(x_nchw, cin_p)          # (N, Ho+1, Wo+1, 4*cin_p) bf16
    wd_hwio, sd = _prep_conv_weight(params["w_down"], params["bn_down"], cin_p, cin_p, eps)
    wd = _pack_down_weight(wd_hwio)                    # (9*cin_p, cin_p), tap-merged order
    w1_hwio, s1 = _prep_conv_weight(params["w1"], params["bn1"], cin_p, cmid_p, eps)
    w1 = w1_hwio.reshape(9, cin_p, cmid_p)
    w2_hwio, s2 = _prep_conv_weight(params["w2"], params["bn2"], cmid_p, cout_p, eps)
    w2 = w2_hwio.reshape(9, cmid_p, cout_p)

    # Generation-aware VMEM budget (128 MiB class on v5e/v6e, 64 MiB on v7x).
    vmem_cap = _vmem_capacity_bytes()

    # Per-image VMEM footprint: bf16 in/out blocks + bf16 scratch + f32 live values.
    per_img = (2 * ((ho + 1) * (wo + 1) * 4 * cin_p + m_img * cout_p)
               + 2 * (ho + 2) * (wo + 2) * (cin_p + cmid_p)
               + 4 * m_img * (cin_p + cmid_p + cout_p)
               + 2 * m_img * 4 * cin_p)
    bt = _pick_batch_tile(n, m_img, per_img, budget_bytes=int(0.4 * vmem_cap))

    weight_bytes = (9 * (cin_p * cin_p + cin_p * cmid_p + cmid_p * cout_p) * 2
                    + (cin_p + cmid_p + cout_p) * 4)
    vmem_est = 2 * bt * per_img + 2 * weight_bytes
    vmem_limit = int(min(max(int(1.5 * vmem_est), 32 << 20), int(0.8 * vmem_cap)))

    flops = 2 * n * m_img * 9 * (cin_p * cin_p + cin_p * cmid_p + cmid_p * cout_p)
    bytes_accessed = (n * (ho + 1) * (wo + 1) * 4 * cin_p * 2      # xs2d (bf16)
                      + weight_bytes                               # resident weights
                      + n * m_img * cout_p * 2)                    # bf16 output

    kernel = functools.partial(
        _bottleneck_kernel, Bt=bt, Ho=ho, Wo=wo,
        cin_p=cin_p, cmid_p=cmid_p, cout_p=cout_p,
        residual=residual_connection)

    grid_spec = pltpu.PrefetchScalarGridSpec(
        num_scalar_prefetch=0,
        grid=(n // bt,),
        in_specs=[
            pl.BlockSpec((bt, ho + 1, wo + 1, 4 * cin_p), lambda b: (b, 0, 0, 0)),
            pl.BlockSpec((9 * cin_p, cin_p), lambda b: (0, 0)),
            pl.BlockSpec((1, cin_p), lambda b: (0, 0)),
            pl.BlockSpec((9, cin_p, cmid_p), lambda b: (0, 0, 0)),
            pl.BlockSpec((1, cmid_p), lambda b: (0, 0)),
            pl.BlockSpec((9, cmid_p, cout_p), lambda b: (0, 0, 0)),
            pl.BlockSpec((1, cout_p), lambda b: (0, 0)),
        ],
        out_specs=pl.BlockSpec((bt, m_img, cout_p), lambda b: (b, 0, 0)),
        scratch_shapes=[
            pltpu.VMEM((bt, ho + 2, wo + 2, cin_p), jnp.bfloat16),   # padded `down`
            pltpu.VMEM((bt, ho + 2, wo + 2, cmid_p), jnp.bfloat16),  # padded `h1`
        ],
    )

    out_flat = pl.pallas_call(
        kernel,
        out_shape=jax.ShapeDtypeStruct((n, m_img, cout_p), jnp.bfloat16),
        grid_spec=grid_spec,
        compiler_params=pltpu.CompilerParams(
            dimension_semantics=("parallel",),
            vmem_limit_bytes=vmem_limit),
        cost_estimate=pl.CostEstimate(
            flops=flops, transcendentals=0, bytes_accessed=bytes_accessed),
    )(xs2d, wd, sd, w1, s1, w2, s2)

    out = out_flat.reshape(n, ho, wo, cout_p)[:, :, :, :out_ch]
    return jnp.transpose(out, (0, 3, 1, 2)).astype(jnp.float32)     # NHWC -> NCHW


# ------------------------------ reference & params ---------------------------

def bottleneck_ref(x_nchw, params, residual_connection=True, eps=1e-5):
    """Plain-JAX f32 reference matching the PyTorch module in eval mode."""
    def conv_bn_relu(x, w_oihw, bn, stride):
        y = jax.lax.conv_general_dilated(
            x, jnp.transpose(w_oihw, (2, 3, 1, 0)),
            window_strides=(stride, stride), padding=((1, 1), (1, 1)),
            dimension_numbers=("NHWC", "HWIO", "NHWC"))
        scale, shift = _fold_bn(bn, eps)
        return jnp.maximum(y * scale + shift, 0.0)

    x = jnp.transpose(x_nchw, (0, 2, 3, 1))
    down = conv_bn_relu(x, params["w_down"], params["bn_down"], 2)
    h1 = conv_bn_relu(down, params["w1"], params["bn1"], 1)
    y = conv_bn_relu(h1, params["w2"], params["bn2"], 1)
    if residual_connection:
        y = y + down
    return jnp.transpose(y, (0, 3, 1, 2))


def make_params(key, in_ch, out_ch):
    ks = jax.random.split(key, 3)
    p = {}
    p["w_down"] = 0.1 * jax.random.normal(ks[0], (in_ch, in_ch, 3, 3), jnp.float32)
    p["w1"] = 0.1 * jax.random.normal(ks[1], (2 * in_ch, in_ch, 3, 3), jnp.float32)
    p["w2"] = 0.1 * jax.random.normal(ks[2], (out_ch, 2 * in_ch, 3, 3), jnp.float32)

    def bn(c):
        return dict(
            gamma=1.0 + 0.1 * jnp.arange(c, dtype=jnp.float32),
            beta=0.05 * jnp.arange(c, dtype=jnp.float32),
            mean=0.01 * jnp.arange(c, dtype=jnp.float32),
            var=1.0 + 0.02 * jnp.arange(c, dtype=jnp.float32),
        )

    p["bn_down"] = bn(in_ch)
    p["bn1"] = bn(2 * in_ch)
    p["bn2"] = bn(out_ch)
    return p


if __name__ == "__main__":
    in_ch, out_ch = 4, 4          # out_ch == in_ch so the residual is well-formed
    batch, H, W = 2, 16, 16

    key = jax.random.PRNGKey(0)
    k_x, k_p = jax.random.split(key)
    x = jax.random.normal(k_x, (batch, in_ch, H, W), jnp.float32)
    params = make_params(k_p, in_ch, out_ch)

    y = bottleneck_forward(x, params, residual_connection=True)
    jax.block_until_ready(y)
    assert y.shape == (batch, out_ch, H // 2, W // 2), y.shape

    y_ref = bottleneck_ref(x, params, residual_connection=True)
    err = float(jnp.max(jnp.abs(y - y_ref)))
    ref_mag = float(jnp.max(jnp.abs(y_ref)))
    # bf16 activations / weights / output vs f32 reference: mixed abs+rel tolerance.
    assert err <= 5e-2 + 2e-2 * ref_mag, f"max abs error {err} (ref max {ref_mag})"

    print("KERNEL_OK")
</pallas_src>

<mosaic_0001>
module attributes {stable_mosaic.version = 11 : i64} {
  func.func @_bottleneck_kernel(%arg0: i32, %arg1: memref<1x9x9x512xbf16, #tpu.memory_space<vmem>>, %arg2: memref<1152x128xbf16, #tpu.memory_space<vmem>>, %arg3: memref<1x128xf32, #tpu.memory_space<vmem>>, %arg4: memref<9x128x128xbf16, #tpu.memory_space<vmem>>, %arg5: memref<1x128xf32, #tpu.memory_space<vmem>>, %arg6: memref<9x128x128xbf16, #tpu.memory_space<vmem>>, %arg7: memref<1x128xf32, #tpu.memory_space<vmem>>, %arg8: memref<1x64x128xbf16, #tpu.memory_space<vmem>>, %arg9: memref<1x10x10x128xbf16, #tpu.memory_space<vmem>>, %arg10: memref<1x10x10x128xbf16, #tpu.memory_space<vmem>>) attributes {dimension_semantics = [#tpu.dimension_semantics<parallel>], iteration_bounds = array<i64: 2>, scalar_prefetch = 0 : i64, scratch_operands = 2 : i64, tpu.core_type = #tpu.core_type<tc>, window_params = [{transform_indices = @transform_0, window_bounds = array<i64: 1, 9, 9, 512>}, {pipeline_mode = #tpu.pipeline_mode<synchronous>, transform_indices = @transform_1, window_bounds = array<i64: 1152, 128>}, {pipeline_mode = #tpu.pipeline_mode<synchronous>, transform_indices = @transform_2, window_bounds = array<i64: 1, 128>}, {pipeline_mode = #tpu.pipeline_mode<synchronous>, transform_indices = @transform_3, window_bounds = array<i64: 9, 128, 128>}, {pipeline_mode = #tpu.pipeline_mode<synchronous>, transform_indices = @transform_4, window_bounds = array<i64: 1, 128>}, {pipeline_mode = #tpu.pipeline_mode<synchronous>, transform_indices = @transform_5, window_bounds = array<i64: 9, 128, 128>}, {pipeline_mode = #tpu.pipeline_mode<synchronous>, transform_indices = @transform_6, window_bounds = array<i64: 1, 128>}, {transform_indices = @transform_7, window_bounds = array<i64: 1, 64, 128>}]} {
    %c0 = arith.constant 0 : index
    %c0_0 = arith.constant 0 : index
    %c0_1 = arith.constant 0 : index
    %c0_2 = arith.constant 0 : index
    %0 = vector.load %arg1[%c0, %c0_0, %c0_1, %c0_2] : memref<1x9x9x512xbf16, #tpu.memory_space<vmem>>, vector<1x8x8x512xbf16>
    %1 = vector.shape_cast %0 : vector<1x8x8x512xbf16> to vector<64x512xbf16>
    %c0_3 = arith.constant 0 : index
    %c0_4 = arith.constant 0 : index
    %2 = vector.load %arg2[%c0_3, %c0_4] : memref<1152x128xbf16, #tpu.memory_space<vmem>>, vector<512x128xbf16>
    %cst = arith.constant dense<0.000000e+00> : vector<64x128xf32>
    %3 = tpu.matmul %1, %2, %cst {dimension_numbers = #tpu.dot_dimension_numbers<[1], [0], [0], [1], [0, 0, 1, 1], [], []>} : vector<64x512xbf16>, vector<512x128xbf16>, vector<64x128xf32> -> vector<64x128xf32>
    %c0_5 = arith.constant 0 : index
    %c1 = arith.constant 1 : index
    %c0_6 = arith.constant 0 : index
    %c0_7 = arith.constant 0 : index
    %4 = vector.load %arg1[%c0_5, %c1, %c0_6, %c0_7] : memref<1x9x9x512xbf16, #tpu.memory_space<vmem>>, vector<1x8x8x256xbf16>
    %5 = vector.shape_cast %4 : vector<1x8x8x256xbf16> to vector<64x256xbf16>
    %c512 = arith.constant 512 : index
    %c0_8 = arith.constant 0 : index
    %6 = vector.load %arg2[%c512, %c0_8] : memref<1152x128xbf16, #tpu.memory_space<vmem>>, vector<256x128xbf16>
    %cst_9 = arith.constant dense<0.000000e+00> : vector<64x128xf32>
    %7 = tpu.matmul %5, %6, %cst_9 {dimension_numbers = #tpu.dot_dimension_numbers<[1], [0], [0], [1], [0, 0, 1, 1], [], []>} : vector<64x256xbf16>, vector<256x128xbf16>, vector<64x128xf32> -> vector<64x128xf32>
    %8 = arith.addf %3, %7 : vector<64x128xf32>
    %c0_10 = arith.constant 0 : index
    %c0_11 = arith.constant 0 : index
    %c1_12 = arith.constant 1 : index
    %c0_13 = arith.constant 0 : index
    %9 = vector.load %arg1[%c0_10, %c0_11, %c1_12, %c0_13] : memref<1x9x9x512xbf16, #tpu.memory_space<vmem>>, vector<1x8x8x128xbf16>
    %10 = vector.shape_cast %9 : vector<1x8x8x128xbf16> to vector<64x128xbf16>
    %c768 = arith.constant 768 : index
    %c0_14 = arith.constant 0 : index
    %11 = vector.load %arg2[%c768, %c0_14] : memref<1152x128xbf16, #tpu.memory_space<vmem>>, vector<128x128xbf16>
    %cst_15 = arith.constant dense<0.000000e+00> : vector<64x128xf32>
    %12 = tpu.matmul %10, %11, %cst_15 {dimension_numbers = #tpu.dot_dimension_numbers<[1], [0], [0], [1], [0, 0, 1, 1], [], []>} : vector<64x128xbf16>, vector<128x128xbf16>, vector<64x128xf32> -> vector<64x128xf32>
    %c0_16 = arith.constant 0 : index
    %c0_17 = arith.constant 0 : index
    %c1_18 = arith.constant 1 : index
    %c256 = arith.constant 256 : index
    %13 = vector.load %arg1[%c0_16, %c0_17, %c1_18, %c256] : memref<1x9x9x512xbf16, #tpu.memory_space<vmem>>, vector<1x8x8x128xbf16>
    %14 = vector.shape_cast %13 : vector<1x8x8x128xbf16> to vector<64x128xbf16>
    %c896 = arith.constant 896 : index
    %c0_19 = arith.constant 0 : index
    %15 = vector.load %arg2[%c896, %c0_19] : memref<1152x128xbf16, #tpu.memory_space<vmem>>, vector<128x128xbf16>
    %cst_20 = arith.constant dense<0.000000e+00> : vector<64x128xf32>
    %16 = tpu.matmul %14, %15, %cst_20 {dimension_numbers = #tpu.dot_dimension_numbers<[1], [0], [0], [1], [0, 0, 1, 1], [], []>} : vector<64x128xbf16>, vector<128x128xbf16>, vector<64x128xf32> -> vector<64x128xf32>
    %17 = arith.addf %12, %16 : vector<64x128xf32>
    %c0_21 = arith.constant 0 : index
    %c1_22 = arith.constant 1 : index
    %c1_23 = arith.constant 1 : index
    %c0_24 = arith.constant 0 : index
    %18 = vector.load %arg1[%c0_21, %c1_22, %c1_23, %c0_24] : memref<1x9x9x512xbf16, #tpu.memory_space<vmem>>, vector<1x8x8x128xbf16>
    %19 = vector.shape_cast %18 : vector<1x8x8x128xbf16> to vector<64x128xbf16>
    %c1024 = arith.constant 1024 : index
    %c0_25 = arith.constant 0 : index
    %20 = vector.load %arg2[%c1024, %c0_25] : memref<1152x128xbf16, #tpu.memory_space<vmem>>, vector<128x128xbf16>
    %cst_26 = arith.constant dense<0.000000e+00> : vector<64x128xf32>
    %21 = tpu.matmul %19, %20, %cst_26 {dimension_numbers = #tpu.dot_dimension_numbers<[1], [0], [0], [1], [0, 0, 1, 1], [], []>} : vector<64x128xbf16>, vector<128x128xbf16>, vector<64x128xf32> -> vector<64x128xf32>
    %22 = arith.addf %17, %21 : vector<64x128xf32>
    %23 = arith.addf %8, %22 : vector<64x128xf32>
    %c0_27 = arith.constant 0 : index
    %c0_28 = arith.constant 0 : index
    %24 = vector.load %arg3[%c0_27, %c0_28] : memref<1x128xf32, #tpu.memory_space<vmem>>, vector<1x128xf32>
    %25 = vector.broadcast %24 : vector<1x128xf32> to vector<64x128xf32>
    %26 = arith.addf %23, %25 : vector<64x128xf32>
    %cst_29 = arith.constant 0.000000e+00 : f32
    %27 = vector.broadcast %cst_29 : f32 to vector<64x128xf32>
    %28 = arith.maximumf %26, %27 : vector<64x128xf32>
    %cst_30 = arith.constant 0.000000e+00 : bf16
    %29 = vector.broadcast %cst_30 : bf16 to vector<1x1x10x128xbf16>
    %c0_31 = arith.constant 0 : index
    %c0_32 = arith.constant 0 : index
    %c0_33 = arith.constant 0 : index
    %c0_34 = arith.constant 0 : index
    %30 = vector.load %arg9[%c0_31, %c0_32, %c0_33, %c0_34] : memref<1x10x10x128xbf16, #tpu.memory_space<vmem>>, vector<1x1x10x128xbf16>
    tpu.vector_store %arg9[%c0_31, %c0_32, %c0_33, %c0_34], %29 {strides = array<i32>} : memref<1x10x10x128xbf16, #tpu.memory_space<vmem>>, vector<1x1x10x128xbf16>,
    %c0_35 = arith.constant 0 : index
    %c9 = arith.constant 9 : index
    %c0_36 = arith.constant 0 : index
    %c0_37 = arith.constant 0 : index
    %31 = vector.load %arg9[%c0_35, %c9, %c0_36, %c0_37] : memref<1x10x10x128xbf16, #tpu.memory_space<vmem>>, vector<1x1x10x128xbf16>
    tpu.vector_store %arg9[%c0_35, %c9, %c0_36, %c0_37], %29 {strides = array<i32>} : memref<1x10x10x128xbf16, #tpu.memory_space<vmem>>, vector<1x1x10x128xbf16>,
    %cst_38 = arith.constant 0.000000e+00 : bf16
    %32 = vector.broadcast %cst_38 : bf16 to vector<1x10x1x128xbf16>
    %c0_39 = arith.constant 0 : index
    %c0_40 = arith.constant 0 : index
    %c0_41 = arith.constant 0 : index
    %c0_42 = arith.constant 0 : index
    %33 = vector.load %arg9[%c0_39, %c0_40, %c0_41, %c0_42] : memref<1x10x10x128xbf16, #tpu.memory_space<vmem>>, vector<1x10x1x128xbf16>
    tpu.vector_store %arg9[%c0_39, %c0_40, %c0_41, %c0_42], %32 {strides = array<i32>} : memref<1x10x10x128xbf16, #tpu.memory_space<vmem>>, vector<1x10x1x128xbf16>,
    %c0_43 = arith.constant 0 : index
    %c0_44 = arith.constant 0 : index
    %c9_45 = arith.constant 9 : index
    %c0_46 = arith.constant 0 : index
    %34 = vector.load %arg9[%c0_43, %c0_44, %c9_45, %c0_46] : memref<1x10x10x128xbf16, #tpu.memory_space<vmem>>, vector<1x10x1x128xbf16>
    tpu.vector_store %arg9[%c0_43, %c0_44, %c9_45, %c0_46], %32 {strides = array<i32>} : memref<1x10x10x128xbf16, #tpu.memory_space<vmem>>, vector<1x10x1x128xbf16>,
    %35 = arith.truncf %28 : vector<64x128xf32> to vector<64x128xbf16>
    %36 = vector.shape_cast %35 : vector<64x128xbf16> to vector<1x8x8x128xbf16>
    %c0_47 = arith.constant 0 : index
    %c1_48 = arith.constant 1 : index
    %c1_49 = arith.constant 1 : index
    %c0_50 = arith.constant 0 : index
    %37 = vector.load %arg9[%c0_47, %c1_48, %c1_49, %c0_50] : memref<1x10x10x128xbf16, #tpu.memory_space<vmem>>, vector<1x8x8x128xbf16>
    tpu.vector_store %arg9[%c0_47, %c1_48, %c1_49, %c0_50], %36 {strides = array<i32>} : memref<1x10x10x128xbf16, #tpu.memory_space<vmem>>, vector<1x8x8x128xbf16>,
    %cst_51 = arith.constant 0.000000e+00 : f32
    %38 = vector.broadcast %cst_51 : f32 to vector<64x128xf32>
    %cst_52 = arith.constant 0.000000e+00 : f32
    %39 = vector.broadcast %cst_52 : f32 to vector<64x128xf32>
    %c0_53 = arith.constant 0 : index
    %c0_54 = arith.constant 0 : index
    %c0_55 = arith.constant 0 : index
    %c0_56 = arith.constant 0 : index
    %40 = vector.load %arg9[%c0_53, %c0_54, %c0_55, %c0_56] : memref<1x10x10x128xbf16, #tpu.memory_space<vmem>>, vector<1x8x8x128xbf16>
    %41 = vector.shape_cast %40 : vector<1x8x8x128xbf16> to vector<64x128xbf16>
    %c0_57 = arith.constant 0 : index
    %c0_58 = arith.constant 0 : index
    %c0_59 = arith.constant 0 : index
    %42 = vector.load %arg4[%c0_57, %c0_58, %c0_59] : memref<9x128x128xbf16, #tpu.memory_space<vmem>>, vector<1x128x128xbf16>
    %43 = vector.shape_cast %42 : vector<1x128x128xbf16> to vector<128x128xbf16>
    %cst_60 = arith.constant dense<0.000000e+00> : vector<64x128xf32>
    %44 = tpu.matmul %41, %43, %cst_60 {dimension_numbers = #tpu.dot_dimension_numbers<[1], [0], [0], [1], [0, 0, 1, 1], [], []>} : vector<64x128xbf16>, vector<128x128xbf16>, vector<64x128xf32> -> vector<64x128xf32>
    %45 = arith.addf %38, %44 : vector<64x128xf32>
    %c0_61 = arith.constant 0 : index
    %c0_62 = arith.constant 0 : index
    %c1_63 = arith.constant 1 : index
    %c0_64 = arith.constant 0 : index
    %46 = vector.load %arg9[%c0_61, %c0_62, %c1_63, %c0_64] : memref<1x10x10x128xbf16, #tpu.memory_space<vmem>>, vector<1x8x8x128xbf16>
    %47 = vector.shape_cast %46 : vector<1x8x8x128xbf16> to vector<64x128xbf16>
    %c1_65 = arith.constant 1 : index
    %c0_66 = arith.constant 0 : index
    %c0_67 = arith.constant 0 : index
    %48 = vector.load %arg4[%c1_65, %c0_66, %c0_67] : memref<9x128x128xbf16, #tpu.memory_space<vmem>>, vector<1x128x128xbf16>
    %49 = vector.shape_cast %48 : vector<1x128x128xbf16> to vector<128x128xbf16>
    %cst_68 = arith.constant dense<0.000000e+00> : vector<64x128xf32>
    %50 = tpu.matmul %47, %49, %cst_68 {dimension_numbers = #tpu.dot_dimension_numbers<[1], [0], [0], [1], [0, 0, 1, 1], [], []>} : vector<64x128xbf16>, vector<128x128xbf16>, vector<64x128xf32> -> vector<64x128xf32>
    %51 = arith.addf %39, %50 : vector<64x128xf32>
    %c0_69 = arith.constant 0 : index
    %c0_70 = arith.constant 0 : index
    %c2 = arith.constant 2 : index
    %c0_71 = arith.constant 0 : index
    %52 = vector.load %arg9[%c0_69, %c0_70, %c2, %c0_71] : memref<1x10x10x128xbf16, #tpu.memory_space<vmem>>, vector<1x8x8x128xbf16>
    %53 = vector.shape_cast %52 : vector<1x8x8x128xbf16> to vector<64x128xbf16>
    %c2_72 = arith.constant 2 : index
    %c0_73 = arith.constant 0 : index
    %c0_74 = arith.constant 0 : index
    %54 = vector.load %arg4[%c2_72, %c0_73, %c0_74] : memref<9x128x128xbf16, #tpu.memory_space<vmem>>, vector<1x128x128xbf16>
    %55 = vector.shape_cast %54 : vector<1x128x128xbf16> to vector<128x128xbf16>
    %cst_75 = arith.constant dense<0.000000e+00> : vector<64x128xf32>
    %56 = tpu.matmul %53, %55, %cst_75 {dimension_numbers = #tpu.dot_dimension_numbers<[1], [0], [0], [1], [0, 0, 1, 1], [], []>} : vector<64x128xbf16>, vector<128x128xbf16>, vector<64x128xf32> -> vector<64x128xf32>
    %57 = arith.addf %45, %56 : vector<64x128xf32>
    %c0_76 = arith.constant 0 : index
    %c1_77 = arith.constant 1 : index
    %c0_78 = arith.constant 0 : index
    %c0_79 = arith.constant 0 : index
    %58 = vector.load %arg9[%c0_76, %c1_77, %c0_78, %c0_79] : memref<1x10x10x128xbf16, #tpu.memory_space<vmem>>, vector<1x8x8x128xbf16>
    %59 = vector.shape_cast %58 : vector<1x8x8x128xbf16> to vector<64x128xbf16>
    %c3 = arith.constant 3 : index
    %c0_80 = arith.constant 0 : index
    %c0_81 = arith.constant 0 : index
    %60 = vector.load %arg4[%c3, %c0_80, %c0_81] : memref<9x128x128xbf16, #tpu.memory_space<vmem>>, vector<1x128x128xbf16>
    %61 = vector.shape_cast %60 : vector<1x128x128xbf16> to vector<128x128xbf16>
    %cst_82 = arith.constant dense<0.000000e+00> : vector<64x128xf32>
    %62 = tpu.matmul %59, %61, %cst_82 {dimension_numbers = #tpu.dot_dimension_numbers<[1], [0], [0], [1], [0, 0, 1, 1], [], []>} : vector<64x128xbf16>, vector<128x128xbf16>, vector<64x128xf32> -> vector<64x128xf32>
    %63 = arith.addf %51, %62 : vector<64x128xf32>
    %c0_83 = arith.constant 0 : index
    %c1_84 = arith.constant 1 : index
    %c1_85 = arith.constant 1 : index
    %c0_86 = arith.constant 0 : index
    %64 = vector.load %arg9[%c0_83, %c1_84, %c1_85, %c0_86] : memref<1x10x10x128xbf16, #tpu.memory_space<vmem>>, vector<1x8x8x128xbf16>
    %65 = vector.shape_cast %64 : vector<1x8x8x128xbf16> to vector<64x128xbf16>
    %c4 = arith.constant 4 : index
    %c0_87 = arith.constant 0 : index
    %c0_88 = arith.constant 0 : index
    %66 = vector.load %arg4[%c4, %c0_87, %c0_88] : memref<9x128x128xbf16, #tpu.memory_space<vmem>>, vector<1x128x128xbf16>
    %67 = vector.shape_cast %66 : vector<1x128x128xbf16> to vector<128x128xbf16>
    %cst_89 = arith.constant dense<0.000000e+00> : vector<64x128xf32>
    %68 = tpu.matmul %65, %67, %cst_89 {dimension_numbers = #tpu.dot_dimension_numbers<[1], [0], [0], [1], [0, 0, 1, 1], [], []>} : vector<64x128xbf16>, vector<128x128xbf16>, vector<64x128xf32> -> vector<64x128xf32>
    %69 = arith.addf %57, %68 : vector<64x128xf32>
    %c0_90 = arith.constant 0 : index
    %c1_91 = arith.constant 1 : index
    %c2_92 = arith.constant 2 : index
    %c0_93 = arith.constant 0 : index
    %70 = vector.load %arg9[%c0_90, %c1_91, %c2_92, %c0_93] : memref<1x10x10x128xbf16, #tpu.memory_space<vmem>>, vector<1x8x8x128xbf16>
    %71 = vector.shape_cast %70 : vector<1x8x8x128xbf16> to vector<64x128xbf16>
    %c5 = arith.constant 5 : index
    %c0_94 = arith.constant 0 : index
    %c0_95 = arith.constant 0 : index
    %72 = vector.load %arg4[%c5, %c0_94, %c0_95] : memref<9x128x128xbf16, #tpu.memory_space<vmem>>, vector<1x128x128xbf16>
    %73 = vector.shape_cast %72 : vector<1x128x128xbf16> to vector<128x128xbf16>
    %cst_96 = arith.constant dense<0.000000e+00> : vector<64x128xf32>
    %74 = tpu.matmul %71, %73, %cst_96 {dimension_numbers = #tpu.dot_dimension_numbers<[1], [0], [0], [1], [0, 0, 1, 1], [], []>} : vector<64x128xbf16>, vector<128x128xbf16>, vector<64x128xf32> -> vector<64x128xf32>
    %75 = arith.addf %63, %74 : vector<64x128xf32>
    %c0_97 = arith.constant 0 : index
    %c2_98 = arith.constant 2 : index
    %c0_99 = arith.constant 0 : index
    %c0_100 = arith.constant 0 : index
    %76 = vector.load %arg9[%c0_97, %c2_98, %c0_99, %c0_100] : memref<1x10x10x128xbf16, #tpu.memory_space<vmem>>, vector<1x8x8x128xbf16>
    %77 = vector.shape_cast %76 : vector<1x8x8x128xbf16> to vector<64x128xbf16>
    %c6 = arith.constant 6 : index
    %c0_101 = arith.constant 0 : index
    %c0_102 = arith.constant 0 : index
    %78 = vector.load %arg4[%c6, %c0_101, %c0_102] : memref<9x128x128xbf16, #tpu.memory_space<vmem>>, vector<1x128x128xbf16>
    %79 = vector.shape_cast %78 : vector<1x128x128xbf16> to vector<128x128xbf16>
    %cst_103 = arith.constant dense<0.000000e+00> : vector<64x128xf32>
    %80 = tpu.matmul %77, %79, %cst_103 {dimension_numbers = #tpu.dot_dimension_numbers<[1], [0], [0], [1], [0, 0, 1, 1], [], []>} : vector<64x128xbf16>, vector<128x128xbf16>, vector<64x128xf32> -> vector<64x128xf32>
    %81 = arith.addf %69, %80 : vector<64x128xf32>
    %c0_104 = arith.constant 0 : index
    %c2_105 = arith.constant 2 : index
    %c1_106 = arith.constant 1 : index
    %c0_107 = arith.constant 0 : index
    %82 = vector.load %arg9[%c0_104, %c2_105, %c1_106, %c0_107] : memref<1x10x10x128xbf16, #tpu.memory_space<vmem>>, vector<1x8x8x128xbf16>
    %83 = vector.shape_cast %82 : vector<1x8x8x128xbf16> to vector<64x128xbf16>
    %c7 = arith.constant 7 : index
    %c0_108 = arith.constant 0 : index
    %c0_109 = arith.constant 0 : index
    %84 = vector.load %arg4[%c7, %c0_108, %c0_109] : memref<9x128x128xbf16, #tpu.memory_space<vmem>>, vector<1x128x128xbf16>
    %85 = vector.shape_cast %84 : vector<1x128x128xbf16> to vector<128x128xbf16>
    %cst_110 = arith.constant dense<0.000000e+00> : vector<64x128xf32>
    %86 = tpu.matmul %83, %85, %cst_110 {dimension_numbers = #tpu.dot_dimension_numbers<[1], [0], [0], [1], [0, 0, 1, 1], [], []>} : vector<64x128xbf16>, vector<128x128xbf16>, vector<64x128xf32> -> vector<64x128xf32>
    %87 = arith.addf %75, %86 : vector<64x128xf32>
    %c0_111 = arith.constant 0 : index
    %c2_112 = arith.constant 2 : index
    %c2_113 = arith.constant 2 : index
    %c0_114 = arith.constant 0 : index
    %88 = vector.load %arg9[%c0_111, %c2_112, %c2_113, %c0_114] : memref<1x10x10x128xbf16, #tpu.memory_space<vmem>>, vector<1x8x8x128xbf16>
    %89 = vector.shape_cast %88 : vector<1x8x8x128xbf16> to vector<64x128xbf16>
    %c8 = arith.constant 8 : index
    %c0_115 = arith.constant 0 : index
    %c0_116 = arith.constant 0 : index
    %90 = vector.load %arg4[%c8, %c0_115, %c0_116] : memref<9x128x128xbf16, #tpu.memory_space<vmem>>, vector<1x128x128xbf16>
    %91 = vector.shape_cast %90 : vector<1x128x128xbf16> to vector<128x128xbf16>
    %cst_117 = arith.constant dense<0.000000e+00> : vector<64x128xf32>
    %92 = tpu.matmul %89, %91, %cst_117 {dimension_numbers = #tpu.dot_dimension_numbers<[1], [0], [0], [1], [0, 0, 1, 1], [], []>} : vector<64x128xbf16>, vector<128x128xbf16>, vector<64x128xf32> -> vector<64x128xf32>
    %93 = arith.addf %81, %92 : vector<64x128xf32>
    %94 = arith.addf %93, %87 : vector<64x128xf32>
    %c0_118 = arith.constant 0 : index
    %c0_119 = arith.constant 0 : index
    %95 = vector.load %arg5[%c0_118, %c0_119] : memref<1x128xf32, #tpu.memory_space<vmem>>, vector<1x128xf32>
    %96 = vector.broadcast %95 : vector<1x128xf32> to vector<64x128xf32>
    %97 = arith.addf %94, %96 : vector<64x128xf32>
    %cst_120 = arith.constant 0.000000e+00 : f32
    %98 = vector.broadcast %cst_120 : f32 to vector<64x128xf32>
    %99 = arith.maximumf %97, %98 : vector<64x128xf32>
    %cst_121 = arith.constant 0.000000e+00 : bf16
    %100 = vector.broadcast %cst_121 : bf16 to vector<1x1x10x128xbf16>
    %c0_122 = arith.constant 0 : index
    %c0_123 = arith.constant 0 : index
    %c0_124 = arith.constant 0 : index
    %c0_125 = arith.constant 0 : index
    %101 = vector.load %arg10[%c0_122, %c0_123, %c0_124, %c0_125] : memref<1x10x10x128xbf16, #tpu.memory_space<vmem>>, vector<1x1x10x128xbf16>
    tpu.vector_store %arg10[%c0_122, %c0_123, %c0_124, %c0_125], %100 {strides = array<i32>} : memref<1x10x10x128xbf16, #tpu.memory_space<vmem>>, vector<1x1x10x128xbf16>,
    %c0_126 = arith.constant 0 : index
    %c9_127 = arith.constant 9 : index
    %c0_128 = arith.constant 0 : index
    %c0_129 = arith.constant 0 : index
    %102 = vector.load %arg10[%c0_126, %c9_127, %c0_128, %c0_129] : memref<1x10x10x128xbf16, #tpu.memory_space<vmem>>, vector<1x1x10x128xbf16>
    tpu.vector_store %arg10[%c0_126, %c9_127, %c0_128, %c0_129], %100 {strides = array<i32>} : memref<1x10x10x128xbf16, #tpu.memory_space<vmem>>, vector<1x1x10x128xbf16>,
    %cst_130 = arith.constant 0.000000e+00 : bf16
    %103 = vector.broadcast %cst_130 : bf16 to vector<1x10x1x128xbf16>
    %c0_131 = arith.constant 0 : index
    %c0_132 = arith.constant 0 : index
    %c0_133 = arith.constant 0 : index
    %c0_134 = arith.constant 0 : index
    %104 = vector.load %arg10[%c0_131, %c0_132, %c0_133, %c0_134] : memref<1x10x10x128xbf16, #tpu.memory_space<vmem>>, vector<1x10x1x128xbf16>
    tpu.vector_store %arg10[%c0_131, %c0_132, %c0_133, %c0_134], %103 {strides = array<i32>} : memref<1x10x10x128xbf16, #tpu.memory_space<vmem>>, vector<1x10x1x128xbf16>,
    %c0_135 = arith.constant 0 : index
    %c0_136 = arith.constant 0 : index
    %c9_137 = arith.constant 9 : index
    %c0_138 = arith.constant 0 : index
    %105 = vector.load %arg10[%c0_135, %c0_136, %c9_137, %c0_138] : memref<1x10x10x128xbf16, #tpu.memory_space<vmem>>, vector<1x10x1x128xbf16>
    tpu.vector_store %arg10[%c0_135, %c0_136, %c9_137, %c0_138], %103 {strides = array<i32>} : memref<1x10x10x128xbf16, #tpu.memory_space<vmem>>, vector<1x10x1x128xbf16>,
    %106 = arith.truncf %99 : vector<64x128xf32> to vector<64x128xbf16>
    %107 = vector.shape_cast %106 : vector<64x128xbf16> to vector<1x8x8x128xbf16>
    %c0_139 = arith.constant 0 : index
    %c1_140 = arith.constant 1 : index
    %c1_141 = arith.constant 1 : index
    %c0_142 = arith.constant 0 : index
    %108 = vector.load %arg10[%c0_139, %c1_140, %c1_141, %c0_142] : memref<1x10x10x128xbf16, #tpu.memory_space<vmem>>, vector<1x8x8x128xbf16>
    tpu.vector_store %arg10[%c0_139, %c1_140, %c1_141, %c0_142], %107 {strides = array<i32>} : memref<1x10x10x128xbf16, #tpu.memory_space<vmem>>, vector<1x8x8x128xbf16>,
    %cst_143 = arith.constant 0.000000e+00 : f32
    %109 = vector.broadcast %cst_143 : f32 to vector<64x128xf32>
    %cst_144 = arith.constant 0.000000e+00 : f32
    %110 = vector.broadcast %cst_144 : f32 to vector<64x128xf32>
    %c0_145 = arith.constant 0 : index
    %c0_146 = arith.constant 0 : index
    %c0_147 = arith.constant 0 : index
    %c0_148 = arith.constant 0 : index
    %111 = vector.load %arg10[%c0_145, %c0_146, %c0_147, %c0_148] : memref<1x10x10x128xbf16, #tpu.memory_space<vmem>>, vector<1x8x8x128xbf16>
    %112 = vector.shape_cast %111 : vector<1x8x8x128xbf16> to vector<64x128xbf16>
    %c0_149 = arith.constant 0 : index
    %c0_150 = arith.constant 0 : index
    %c0_151 = arith.constant 0 : index
    %113 = vector.load %arg6[%c0_149, %c0_150, %c0_151] : memref<9x128x128xbf16, #tpu.memory_space<vmem>>, vector<1x128x128xbf16>
    %114 = vector.shape_cast %113 : vector<1x128x128xbf16> to vector<128x128xbf16>
    %cst_152 = arith.constant dense<0.000000e+00> : vector<64x128xf32>
    %115 = tpu.matmul %112, %114, %cst_152 {dimension_numbers = #tpu.dot_dimension_numbers<[1], [0], [0], [1], [0, 0, 1, 1], [], []>} : vector<64x128xbf16>, vector<128x128xbf16>, vector<64x128xf32> -> vector<64x128xf32>
    %116 = arith.addf %109, %115 : vector<64x128xf32>
    %c0_153 = arith.constant 0 : index
    %c0_154 = arith.constant 0 : index
    %c1_155 = arith.constant 1 : index
    %c0_156 = arith.constant 0 : index
    %117 = vector.load %arg10[%c0_153, %c0_154, %c1_155, %c0_156] : memref<1x10x10x128xbf16, #tpu.memory_space<vmem>>, vector<1x8x8x128xbf16>
    %118 = vector.shape_cast %117 : vector<1x8x8x128xbf16> to vector<64x128xbf16>
    %c1_157 = arith.constant 1 : index
    %c0_158 = arith.constant 0 : index
    %c0_159 = arith.constant 0 : index
    %119 = vector.load %arg6[%c1_157, %c0_158, %c0_159] : memref<9x128x128xbf16, #tpu.memory_space<vmem>>, vector<1x128x128xbf16>
    %120 = vector.shape_cast %119 : vector<1x128x128xbf16> to vector<128x128xbf16>
    %cst_160 = arith.constant dense<0.000000e+00> : vector<64x128xf32>
    %121 = tpu.matmul %118, %120, %cst_160 {dimension_numbers = #tpu.dot_dimension_numbers<[1], [0], [0], [1], [0, 0, 1, 1], [], []>} : vector<64x128xbf16>, vector<128x128xbf16>, vector<64x128xf32> -> vector<64x128xf32>
    %122 = arith.addf %110, %121 : vector<64x128xf32>
    %c0_161 = arith.constant 0 : index
    %c0_162 = arith.constant 0 : index
    %c2_163 = arith.constant 2 : index
    %c0_164 = arith.constant 0 : index
    %123 = vector.load %arg10[%c0_161, %c0_162, %c2_163, %c0_164] : memref<1x10x10x128xbf16, #tpu.memory_space<vmem>>, vector<1x8x8x128xbf16>
    %124 = vector.shape_cast %123 : vector<1x8x8x128xbf16> to vector<64x128xbf16>
    %c2_165 = arith.constant 2 : index
    %c0_166 = arith.constant 0 : index
    %c0_167 = arith.constant 0 : index
    %125 = vector.load %arg6[%c2_165, %c0_166, %c0_167] : memref<9x128x128xbf16, #tpu.memory_space<vmem>>, vector<1x128x128xbf16>
    %126 = vector.shape_cast %125 : vector<1x128x128xbf16> to vector<128x128xbf16>
    %cst_168 = arith.constant dense<0.000000e+00> : vector<64x128xf32>
    %127 = tpu.matmul %124, %126, %cst_168 {dimension_numbers = #tpu.dot_dimension_numbers<[1], [0], [0], [1], [0, 0, 1, 1], [], []>} : vector<64x128xbf16>, vector<128x128xbf16>, vector<64x128xf32> -> vector<64x128xf32>
    %128 = arith.addf %116, %127 : vector<64x128xf32>
    %c0_169 = arith.constant 0 : index
    %c1_170 = arith.constant 1 : index
    %c0_171 = arith.constant 0 : index
    %c0_172 = arith.constant 0 : index
    %129 = vector.load %arg10[%c0_169, %c1_170, %c0_171, %c0_172] : memref<1x10x10x128xbf16, #tpu.memory_space<vmem>>, vector<1x8x8x128xbf16>
    %130 = vector.shape_cast %129 : vector<1x8x8x128xbf16> to vector<64x128xbf16>
    %c3_173 = arith.constant 3 : index
    %c0_174 = arith.constant 0 : index
    %c0_175 = arith.constant 0 : index
    %131 = vector.load %arg6[%c3_173, %c0_174, %c0_175] : memref<9x128x128xbf16, #tpu.memory_space<vmem>>, vector<1x128x128xbf16>
    %132 = vector.shape_cast %131 : vector<1x128x128xbf16> to vector<128x128xbf16>
    %cst_176 = arith.constant dense<0.000000e+00> : vector<64x128xf32>
    %133 = tpu.matmul %130, %132, %cst_176 {dimension_numbers = #tpu.dot_dimension_numbers<[1], [0], [0], [1], [0, 0, 1, 1], [], []>} : vector<64x128xbf16>, vector<128x128xbf16>, vector<64x128xf32> -> vector<64x128xf32>
    %134 = arith.addf %122, %133 : vector<64x128xf32>
    %c0_177 = arith.constant 0 : index
    %c1_178 = arith.constant 1 : index
    %c1_179 = arith.constant 1 : index
    %c0_180 = arith.constant 0 : index
    %135 = vector.load %arg10[%c0_177, %c1_178, %c1_179, %c0_180] : memref<1x10x10x128xbf16, #tpu.memory_space<vmem>>, vector<1x8x8x128xbf16>
    %136 = vector.shape_cast %135 : vector<1x8x8x128xbf16> to vector<64x128xbf16>
    %c4_181 = arith.constant 4 : index
    %c0_182 = arith.constant 0 : index
    %c0_183 = arith.constant 0 : index
    %137 = vector.load %arg6[%c4_181, %c0_182, %c0_183] : memref<9x128x128xbf16, #tpu.memory_space<vmem>>, vector<1x128x128xbf16>
    %138 = vector.shape_cast %137 : vector<1x128x128xbf16> to vector<128x128xbf16>
    %cst_184 = arith.constant dense<0.000000e+00> : vector<64x128xf32>
    %139 = tpu.matmul %136, %138, %cst_184 {dimension_numbers = #tpu.dot_dimension_numbers<[1], [0], [0], [1], [0, 0, 1, 1], [], []>} : vector<64x128xbf16>, vector<128x128xbf16>, vector<64x128xf32> -> vector<64x128xf32>
    %140 = arith.addf %128, %139 : vector<64x128xf32>
    %c0_185 = arith.constant 0 : index
    %c1_186 = arith.constant 1 : index
    %c2_187 = arith.constant 2 : index
    %c0_188 = arith.constant 0 : index
    %141 = vector.load %arg10[%c0_185, %c1_186, %c2_187, %c0_188] : memref<1x10x10x128xbf16, #tpu.memory_space<vmem>>, vector<1x8x8x128xbf16>
    %142 = vector.shape_cast %141 : vector<1x8x8x128xbf16> to vector<64x128xbf16>
    %c5_189 = arith.constant 5 : index
    %c0_190 = arith.constant 0 : index
    %c0_191 = arith.constant 0 : index
    %143 = vector.load %arg6[%c5_189, %c0_190, %c0_191] : memref<9x128x128xbf16, #tpu.memory_space<vmem>>, vector<1x128x128xbf16>
    %144 = vector.shape_cast %143 : vector<1x128x128xbf16> to vector<128x128xbf16>
    %cst_192 = arith.constant dense<0.000000e+00> : vector<64x128xf32>
    %145 = tpu.matmul %142, %144, %cst_192 {dimension_numbers = #tpu.dot_dimension_numbers<[1], [0], [0], [1], [0, 0, 1, 1], [], []>} : vector<64x128xbf16>, vector<128x128xbf16>, vector<64x128xf32> -> vector<64x128xf32>
    %146 = arith.addf %134, %145 : vector<64x128xf32>
    %c0_193 = arith.constant 0 : index
    %c2_194 = arith.constant 2 : index
    %c0_195 = arith.constant 0 : index
    %c0_196 = arith.constant 0 : index
    %147 = vector.load %arg10[%c0_193, %c2_194, %c0_195, %c0_196] : memref<1x10x10x128xbf16, #tpu.memory_space<vmem>>, vector<1x8x8x128xbf16>
    %148 = vector.shape_cast %147 : vector<1x8x8x128xbf16> to vector<64x128xbf16>
    %c6_197 = arith.constant 6 : index
    %c0_198 = arith.constant 0 : index
    %c0_199 = arith.constant 0 : index
    %149 = vector.load %arg6[%c6_197, %c0_198, %c0_199] : memref<9x128x128xbf16, #tpu.memory_space<vmem>>, vector<1x128x128xbf16>
    %150 = vector.shape_cast %149 : vector<1x128x128xbf16> to vector<128x128xbf16>
    %cst_200 = arith.constant dense<0.000000e+00> : vector<64x128xf32>
    %151 = tpu.matmul %148, %150, %cst_200 {dimension_numbers = #tpu.dot_dimension_numbers<[1], [0], [0], [1], [0, 0, 1, 1], [], []>} : vector<64x128xbf16>, vector<128x128xbf16>, vector<64x128xf32> -> vector<64x128xf32>
    %152 = arith.addf %140, %151 : vector<64x128xf32>
    %c0_201 = arith.constant 0 : index
    %c2_202 = arith.constant 2 : index
    %c1_203 = arith.constant 1 : index
    %c0_204 = arith.constant 0 : index
    %153 = vector.load %arg10[%c0_201, %c2_202, %c1_203, %c0_204] : memref<1x10x10x128xbf16, #tpu.memory_space<vmem>>, vector<1x8x8x128xbf16>
    %154 = vector.shape_cast %153 : vector<1x8x8x128xbf16> to vector<64x128xbf16>
    %c7_205 = arith.constant 7 : index
    %c0_206 = arith.constant 0 : index
    %c0_207 = arith.constant 0 : index
    %155 = vector.load %arg6[%c7_205, %c0_206, %c0_207] : memref<9x128x128xbf16, #tpu.memory_space<vmem>>, vector<1x128x128xbf16>
    %156 = vector.shape_cast %155 : vector<1x128x128xbf16> to vector<128x128xbf16>
    %cst_208 = arith.constant dense<0.000000e+00> : vector<64x128xf32>
    %157 = tpu.matmul %154, %156, %cst_208 {dimension_numbers = #tpu.dot_dimension_numbers<[1], [0], [0], [1], [0, 0, 1, 1], [], []>} : vector<64x128xbf16>, vector<128x128xbf16>, vector<64x128xf32> -> vector<64x128xf32>
    %158 = arith.addf %146, %157 : vector<64x128xf32>
    %c0_209 = arith.constant 0 : index
    %c2_210 = arith.constant 2 : index
    %c2_211 = arith.constant 2 : index
    %c0_212 = arith.constant 0 : index
    %159 = vector.load %arg10[%c0_209, %c2_210, %c2_211, %c0_212] : memref<1x10x10x128xbf16, #tpu.memory_space<vmem>>, vector<1x8x8x128xbf16>
    %160 = vector.shape_cast %159 : vector<1x8x8x128xbf16> to vector<64x128xbf16>
    %c8_213 = arith.constant 8 : index
    %c0_214 = arith.constant 0 : index
    %c0_215 = arith.constant 0 : index
    %161 = vector.load %arg6[%c8_213, %c0_214, %c0_215] : memref<9x128x128xbf16, #tpu.memory_space<vmem>>, vector<1x128x128xbf16>
    %162 = vector.shape_cast %161 : vector<1x128x128xbf16> to vector<128x128xbf16>
    %cst_216 = arith.constant dense<0.000000e+00> : vector<64x128xf32>
    %163 = tpu.matmul %160, %162, %cst_216 {dimension_numbers = #tpu.dot_dimension_numbers<[1], [0], [0], [1], [0, 0, 1, 1], [], []>} : vector<64x128xbf16>, vector<128x128xbf16>, vector<64x128xf32> -> vector<64x128xf32>
    %164 = arith.addf %152, %163 : vector<64x128xf32>
    %165 = arith.addf %164, %158 : vector<64x128xf32>
    %c0_217 = arith.constant 0 : index
    %c0_218 = arith.constant 0 : index
    %166 = vector.load %arg7[%c0_217, %c0_218] : memref<1x128xf32, #tpu.memory_space<vmem>>, vector<1x128xf32>
    %167 = vector.broadcast %166 : vector<1x128xf32> to vector<64x128xf32>
    %168 = arith.addf %165, %167 : vector<64x128xf32>
    %cst_219 = arith.constant 0.000000e+00 : f32
    %169 = vector.broadcast %cst_219 : f32 to vector<64x128xf32>
    %170 = arith.maximumf %168, %169 : vector<64x128xf32>
    %c0_220 = arith.constant 0 : index
    %c1_221 = arith.constant 1 : index
    %c1_222 = arith.constant 1 : index
    %c0_223 = arith.constant 0 : index
    %171 = vector.load %arg9[%c0_220, %c1_221, %c1_222, %c0_223] : memref<1x10x10x128xbf16, #tpu.memory_space<vmem>>, vector<1x8x8x128xbf16>
    %172 = vector.shape_cast %171 : vector<1x8x8x128xbf16> to vector<64x128xbf16>
    %173 = arith.extf %172 : vector<64x128xbf16> to vector<64x128xf32>
    %174 = arith.addf %170, %173 : vector<64x128xf32>
    %175 = arith.truncf %174 : vector<64x128xf32> to vector<64x128xbf16>
    %176 = vector.shape_cast %175 : vector<64x128xbf16> to vector<1x64x128xbf16>
    %c0_224 = arith.constant 0 : index
    %c0_225 = arith.constant 0 : index
    %c0_226 = arith.constant 0 : index
    %177 = vector.load %arg8[%c0_224, %c0_225, %c0_226] : memref<1x64x128xbf16, #tpu.memory_space<vmem>>, vector<1x64x128xbf16>
    tpu.vector_store %arg8[%c0_224, %c0_225, %c0_226], %176 {strides = array<i32>} : memref<1x64x128xbf16, #tpu.memory_space<vmem>>, vector<1x64x128xbf16>,
    return
  }
  func.func @transform_0(%arg0: i32) -> (i32, i32, i32, i32) {
    %c0_i32 = arith.constant 0 : i32
    %c0_i32_0 = arith.constant 0 : i32
    %c0_i32_1 = arith.constant 0 : i32
    %c0_i32_2 = arith.constant 0 : i32
    return %arg0, %c0_i32, %c0_i32_0, %c0_i32_1 : i32, i32, i32, i32
  }
  func.func @transform_1(%arg0: i32) -> (i32, i32) {
    %c0_i32 = arith.constant 0 : i32
    %c0_i32_0 = arith.constant 0 : i32
    %c0_i32_1 = arith.constant 0 : i32
    return %c0_i32, %c0_i32_0 : i32, i32
  }
  func.func @transform_2(%arg0: i32) -> (i32, i32) {
    %c0_i32 = arith.constant 0 : i32
    %c0_i32_0 = arith.constant 0 : i32
    %c0_i32_1 = arith.constant 0 : i32
    return %c0_i32, %c0_i32_0 : i32, i32
  }
  func.func @transform_3(%arg0: i32) -> (i32, i32, i32) {
    %c0_i32 = arith.constant 0 : i32
    %c0_i32_0 = arith.constant 0 : i32
    %c0_i32_1 = arith.constant 0 : i32
    %c0_i32_2 = arith.constant 0 : i32
    return %c0_i32, %c0_i32_0, %c0_i32_1 : i32, i32, i32
  }
  func.func @transform_4(%arg0: i32) -> (i32, i32) {
    %c0_i32 = arith.constant 0 : i32
    %c0_i32_0 = arith.constant 0 : i32
    %c0_i32_1 = arith.constant 0 : i32
    return %c0_i32, %c0_i32_0 : i32, i32
  }
  func.func @transform_5(%arg0: i32) -> (i32, i32, i32) {
    %c0_i32 = arith.constant 0 : i32
    %c0_i32_0 = arith.constant 0 : i32
    %c0_i32_1 = arith.constant 0 : i32
    %c0_i32_2 = arith.constant 0 : i32
    return %c0_i32, %c0_i32_0, %c0_i32_1 : i32, i32, i32
  }
  func.func @transform_6(%arg0: i32) -> (i32, i32) {
    %c0_i32 = arith.constant 0 : i32
    %c0_i32_0 = arith.constant 0 : i32
    %c0_i32_1 = arith.constant 0 : i32
    return %c0_i32, %c0_i32_0 : i32, i32
  }
  func.func @transform_7(%arg0: i32) -> (i32, i32, i32) {
    %c0_i32 = arith.constant 0 : i32
    %c0_i32_0 = arith.constant 0 : i32
    %c0_i32_1 = arith.constant 0 : i32
    return %arg0, %c0_i32, %c0_i32_0 : i32, i32, i32
  }
}

</mosaic_0001>

<llo_original>
// kernel: tpu_custom_call.1
$region0: #{tpu_custom_call.1}
  #allocation0 [shape = 'u32[]', space=smem, size = 0x4, offset = 0x4, fixed_abs, tag = 'smem constant byte address 0x4 - core index']
  #allocation1 [shape = 'u32[144,128]{1,0:T(1,128)}', space=vmem, size = 0x12000, scoped, tag = 'internal scratch']
  #allocation2 [shape = 'bf16[1,10,10,128]{3,2,1,0:T(8,128)(2,1)}', space=vmem, size = 0xa000, scoped, tag = 'scratch operand']
  #allocation3 [shape = 'bf16[1,10,10,128]{3,2,1,0:T(8,128)(2,1)}', space=vmem, size = 0xa000, scoped, tag = 'scratch operand']
  %s0 = inlined_call_operand.vmem [shape: bf16[2,9,9,512], index: 0, kind: input, shape index: {}]
  %s1 = inlined_call_operand.vmem [shape: bf16[1152,128], index: 1, kind: input, shape index: {}]
  %s2 = inlined_call_operand.vmem [shape: f32[1,128], index: 2, kind: input, shape index: {}]
  %s3 = inlined_call_operand.hbm [shape: bf16[9,128,128], index: 3, kind: input, shape index: {}]
  %s4 = inlined_call_operand.vmem [shape: f32[1,128], index: 4, kind: input, shape index: {}]
  %s5 = inlined_call_operand.hbm [shape: bf16[9,128,128], index: 5, kind: input, shape index: {}]
  %s6 = inlined_call_operand.vmem [shape: f32[1,128], index: 6, kind: input, shape index: {}]
  %s7 = inlined_call_operand.hbm [shape: bf16[2,64,128], index: 7, kind: output, shape index: {}]
  %s8 = sld [smem:[#allocation0]]
  $region69: #{tpu_custom_call.1} parent=0
    _
  %s10 = ssub.s32 1, %s8
  %s11 = scalar_select 0, %s10, %s8
  $region1: #{tpu_custom_call.1} parent=0
    #allocation4 [shape = 'u8[294912]{0}', space=vmem, size = 0x48000, scoped, tag = 'input window, operand 3, single buffered']
    #allocation5 [shape = 's32[2]{0}', space=sflag, size = 0x8, scoped, tag = 'scoped memory for tpu_custom_call.1']
    #allocation6 [shape = 's32[2]{0}', space=sflag, size = 0x8, scoped, tag = 'scoped memory for tpu_custom_call.1']
    #allocation7 [shape = 'u8[294912]{0}', space=vmem, size = 0x48000, scoped, tag = 'input window, operand 5, single buffered']
    #allocation8 [shape = 's32[1]{0}', space=sflag, size = 0x4, scoped, tag = 'scoped memory for tpu_custom_call.1']
    #allocation9 [shape = 'u8[32768]{0}', space=vmem, size = 0x8000, scoped, tag = 'output window, operand 0']
    %12 = vsyncpa [#allocation5], 0
    %13 = vsyncpa [#allocation8], 0
    %14 = vsyncpa [#allocation6], 0
    %s15 = scalar_lea.sflag [#allocation6], 1
    %16 = vsyncpa %s15, 0
    loop: start=0, step=1, limit=4
    $region2: #{tpu_custom_call.1} parent=1 // loop_pre_header
      _
    $region3: #{tpu_custom_call.1} parent=1 // loop_header
      %s18 = sphi 0, %s22
      %p19 = scmp.ge.s32.totalorder %s18, 4
      %s28 = sphi 0, %s30
      %s31 = sphi 0, %s28
      %s32 = sphi 0, %s31
      %s48 = sphi 0, %s32
      %s52 = sphi 0, %s52
      %s54 = sphi 0, %s52
      %s55 = sphi 0, %s54
      %s69 = sphi 0, %s55
      %s73 = sphi 0, %s73
      %s75 = sphi 0, %s73
      %s76 = sphi 0, %s75
      %s90 = sphi 0, %s76
      %s94 = sphi 0, %s94
      %s96 = sphi 0, %s94
      %s97 = sphi 0, %s96
      %s111 = sphi 0, %s97
      %s115 = sphi 0, %s115
      %s117 = sphi 0, %s115
      %s118 = sphi 0, %s117
      %s132 = sphi 0, %s118
      %s136 = sphi 0, %s136
      %s138 = sphi 0, %s136
      %s139 = sphi 0, %s138
      %s153 = sphi 0, %s139
      %s157 = sphi 0, %s157
      %s159 = sphi 0, %s157
      %s160 = sphi 0, %s159
      %s174 = sphi 0, %s160
      %s180 = sphi 0, %s182
      %s183 = sphi 0, %s180
      %s184 = sphi 0, %s183
      %s200 = sphi 0, %s184
    $region4: #{tpu_custom_call.1} parent=1 // loop_header_branch
      %21 = sbr.rel (%p19) target = $region8
    $region5: #{tpu_custom_call.1} parent=1 // loop_body
      %s23 = ssub.s32 %s18, 1
      %s24 = ssub.s32 %s18, 2
      %s25 = sadd.s32 %s18, 1
      %s26 = ssub.s32 %s18, %s25
      %p27 = scmp.eq.s32.totalorder %s26, 0
      %s29 = sadd.s32 %s28, 1
      %s30 = scalar_select %p27, %s28, %s29
      %p33 = pneg %p27
      %p34 = scmp.eq.s32.totalorder %s18, 1
      %p35 = por %p33, %p34
      %p36 = scmp.ne.s32.totalorder %s28, %s31
      %p37 = scmp.eq.s32.totalorder %s18, 0
      %p38 = por %p36, %p37
      %p39 = scmp.ne.s32.totalorder %s28, %s31
      %p40 = scmp.eq.s32.totalorder %s23, 1
      %p41 = por %p39, %p40
      %p42 = scmp.ne.s32.totalorder %s31, %s32
      %p43 = scmp.eq.s32.totalorder %s23, 0
      %p44 = por %p42, %p43
      %p45 = scmp.ne.s32.totalorder %s31, %s32
      %p46 = scmp.eq.s32.totalorder %s24, 1
      %p47 = por %p45, %p46
      %p49 = scmp.ne.s32.totalorder %s32, %s48
      %p50 = scmp.eq.s32.totalorder %s24, 0
      %p51 = por %p49, %p50
      %s53 = sadd.s32 %s52, 1
      %p56 = scmp.eq.s32.totalorder %s18, 1
      %p57 = scmp.ne.s32.totalorder %s52, %s54
      %p58 = scmp.eq.s32.totalorder %s18, 0
      %p59 = por %p57, %p58
      %p60 = scmp.ne.s32.totalorder %s52, %s54
      %p61 = scmp.eq.s32.totalorder %s23, 1
      %p62 = por %p60, %p61
      %p63 = scmp.ne.s32.totalorder %s54, %s55
      %p64 = scmp.eq.s32.totalorder %s23, 0
      %p65 = por %p63, %p64
      %p66 = scmp.ne.s32.totalorder %s54, %s55
      %p67 = scmp.eq.s32.totalorder %s24, 1
      %p68 = por %p66, %p67
      %p70 = scmp.ne.s32.totalorder %s55, %s69
      %p71 = scmp.eq.s32.totalorder %s24, 0
      %p72 = por %p70, %p71
      %s74 = sadd.s32 %s73, 1
      %p77 = scmp.eq.s32.totalorder %s18, 1
      %p78 = scmp.ne.s32.totalorder %s73, %s75
      %p79 = scmp.eq.s32.totalorder %s18, 0
      %p80 = por %p78, %p79
      %p81 = scmp.ne.s32.totalorder %s73, %s75
      %p82 = scmp.eq.s32.totalorder %s23, 1
      %p83 = por %p81, %p82
      %p84 = scmp.ne.s32.totalorder %s75, %s76
      %p85 = scmp.eq.s32.totalorder %s23, 0
      %p86 = por %p84, %p85
      %p87 = scmp.ne.s32.totalorder %s75, %s76
      %p88 = scmp.eq.s32.totalorder %s24, 1
      %p89 = por %p87, %p88
      %p91 = scmp.ne.s32.totalorder %s76, %s90
      %p92 = scmp.eq.s32.totalorder %s24, 0
      %p93 = por %p91, %p92
      %s95 = sadd.s32 %s94, 1
      %p98 = scmp.eq.s32.totalorder %s18, 1
      %p99 = scmp.ne.s32.totalorder %s94, %s96
      %p100 = scmp.eq.s32.totalorder %s18, 0
      %p101 = por %p99, %p100
      %p102 = scmp.ne.s32.totalorder %s94, %s96
      %p103 = scmp.eq.s32.totalorder %s23, 1
      %p104 = por %p102, %p103
      %p105 = scmp.ne.s32.totalorder %s96, %s97
      %p106 = scmp.eq.s32.totalorder %s23, 0
      %p107 = por %p105, %p106
      %p108 = scmp.ne.s32.totalorder %s96, %s97
      %p109 = scmp.eq.s32.totalorder %s24, 1
      %p110 = por %p108, %p109
      %p112 = scmp.ne.s32.totalorder %s97, %s111
      %p113 = scmp.eq.s32.totalorder %s24, 0
      %p114 = por %p112, %p113
      %s116 = sadd.s32 %s115, 1
      %p119 = scmp.eq.s32.totalorder %s18, 1
      %p120 = scmp.ne.s32.totalorder %s115, %s117
      %p121 = scmp.eq.s32.totalorder %s18, 0
      %p122 = por %p120, %p121
      %p123 = scmp.ne.s32.totalorder %s115, %s117
      %p124 = scmp.eq.s32.totalorder %s23, 1
      %p125 = por %p123, %p124
      %p126 = scmp.ne.s32.totalorder %s117, %s118
      %p127 = scmp.eq.s32.totalorder %s23, 0
      %p128 = por %p126, %p127
      %p129 = scmp.ne.s32.totalorder %s117, %s118
      %p130 = scmp.eq.s32.totalorder %s24, 1
      %p131 = por %p129, %p130
      %p133 = scmp.ne.s32.totalorder %s118, %s132
      %p134 = scmp.eq.s32.totalorder %s24, 0
      %p135 = por %p133, %p134
      %s137 = sadd.s32 %s136, 1
      %p140 = scmp.eq.s32.totalorder %s18, 1
      %p141 = scmp.ne.s32.totalorder %s136, %s138
      %p142 = scmp.eq.s32.totalorder %s18, 0
      %p143 = por %p141, %p142
      %p144 = scmp.ne.s32.totalorder %s136, %s138
      %p145 = scmp.eq.s32.totalorder %s23, 1
      %p146 = por %p144, %p145
      %p147 = scmp.ne.s32.totalorder %s138, %s139
      %p148 = scmp.eq.s32.totalorder %s23, 0
      %p149 = por %p147, %p148
      %p150 = scmp.ne.s32.totalorder %s138, %s139
      %p151 = scmp.eq.s32.totalorder %s24, 1
      %p152 = por %p150, %p151
      %p154 = scmp.ne.s32.totalorder %s139, %s153
      %p155 = scmp.eq.s32.totalorder %s24, 0
      %p156 = por %p154, %p155
      %s158 = sadd.s32 %s157, 1
      %p161 = scmp.eq.s32.totalorder %s18, 1
      %p162 = scmp.ne.s32.totalorder %s157, %s159
      %p163 = scmp.eq.s32.totalorder %s18, 0
      %p164 = por %p162, %p163
      %p165 = scmp.ne.s32.totalorder %s157, %s159
      %p166 = scmp.eq.s32.totalorder %s23, 1
      %p167 = por %p165, %p166
      %p168 = scmp.ne.s32.totalorder %s159, %s160
      %p169 = scmp.eq.s32.totalorder %s23, 0
      %p170 = por %p168, %p169
      %p171 = scmp.ne.s32.totalorder %s159, %s160
      %p172 = scmp.eq.s32.totalorder %s24, 1
      %p173 = por %p171, %p172
      %p175 = scmp.ne.s32.totalorder %s160, %s174
      %p176 = scmp.eq.s32.totalorder %s24, 0
      %p177 = por %p175, %p176
      %s178 = ssub.s32 %s18, %s25
      %p179 = scmp.eq.s32.totalorder %s178, 0
      %s181 = sadd.s32 %s180, 1
      %s182 = scalar_select %p179, %s180, %s181
      %p185 = pneg %p179
      %p186 = scmp.eq.s32.totalorder %s18, 1
      %p187 = por %p185, %p186
      %p188 = scmp.ne.s32.totalorder %s180, %s183
      %p189 = scmp.eq.s32.totalorder %s18, 0
      %p190 = por %p188, %p189
      %p191 = scmp.ne.s32.totalorder %s180, %s183
      %p192 = scmp.eq.s32.totalorder %s23, 1
      %p193 = por %p191, %p192
      %p194 = scmp.ne.s32.totalorder %s183, %s184
      %p195 = scmp.eq.s32.totalorder %s23, 0
      %p196 = por %p194, %p195
      %p197 = scmp.ne.s32.totalorder %s183, %s184
      %p198 = scmp.eq.s32.totalorder %s24, 1
      %p199 = por %p197, %p198
      %p201 = scmp.ne.s32.totalorder %s184, %s200
      %p202 = scmp.eq.s32.totalorder %s24, 0
      %p203 = por %p201, %p202
      %p204 = scmp.le.s32.totalorder 1, %s18
      %p205 = scmp.lt.s32.totalorder %s18, 3
      %p206 = pnand %p204, %p205
      %p207 = pneg %p206
      // Predicated region
      $region9: #{tpu_custom_call.1} parent=5 // pred_check
        _
      $region10: #{tpu_custom_call.1} parent=5 // pred_check_branch
        %209 = sbr.rel (%p206) target = $region12
      $region11: #{tpu_custom_call.1} parent=5 // pred_region
        %s210 = ssub.s32 %s18, 1
        // Predicated region
        $region13: #{tpu_custom_call.1} parent=11 // pred_check
          %p211 = pneg %p65
        $region14: #{tpu_custom_call.1} parent=11 // pred_check_branch
          %213 = sbr.rel (%p211) target = $region16
        $region15: #{tpu_custom_call.1} parent=11 // pred_region
          _
        $region16: #{tpu_custom_call.1} parent=11 // pred_fallthru
          _
        // Predicated region
        $region17: #{tpu_custom_call.1} parent=11 // pred_check
          %p214 = pneg %p86
        $region18: #{tpu_custom_call.1} parent=11 // pred_check_branch
          %216 = sbr.rel (%p214) target = $region20
        $region19: #{tpu_custom_call.1} parent=11 // pred_region
          _
        $region20: #{tpu_custom_call.1} parent=11 // pred_fallthru
          _
        // Predicated region
        $region21: #{tpu_custom_call.1} parent=11 // pred_check
          %p217 = pneg %p107
        $region22: #{tpu_custom_call.1} parent=11 // pred_check_branch
          %219 = sbr.rel (%p217) target = $region24
        $region23: #{tpu_custom_call.1} parent=11 // pred_region
          %s221 = ssub.s32 9216, 9216
          %222 = vsyncadd [#allocation5], %s221
          %s223 = sshll.u32 [#allocation4], 4
          %s224 = int_to_ptr.vmem [resolvable:$true] %s223
          %229 = dma.hbm_to_vmem [thread:$0]  %s3, 9216, %s224, [#allocation5], 64, 64, 4
        $region24: #{tpu_custom_call.1} parent=11 // pred_fallthru
          _
        // Predicated region
        $region25: #{tpu_custom_call.1} parent=11 // pred_check
          %p230 = pneg %p128
        $region26: #{tpu_custom_call.1} parent=11 // pred_check_branch
          %232 = sbr.rel (%p230) target = $region28
        $region27: #{tpu_custom_call.1} parent=11 // pred_region
          _
        $region28: #{tpu_custom_call.1} parent=11 // pred_fallthru
          _
        // Predicated region
        $region29: #{tpu_custom_call.1} parent=11 // pred_check
          %p233 = pneg %p149
        $region30: #{tpu_custom_call.1} parent=11 // pred_check_branch
          %235 = sbr.rel (%p233) target = $region32
        $region31: #{tpu_custom_call.1} parent=11 // pred_region
          %s237 = ssub.s32 9216, 9216
          %238 = vsyncadd [#allocation8], %s237
          %s239 = sshll.u32 [#allocation7], 4
          %s240 = int_to_ptr.vmem [resolvable:$true] %s239
          %245 = dma.hbm_to_vmem [thread:$0]  %s5, 9216, %s240, [#allocation8], 64, 64, 4
        $region32: #{tpu_custom_call.1} parent=11 // pred_fallthru
          _
        // Predicated region
        $region33: #{tpu_custom_call.1} parent=11 // pred_check
          %p246 = pneg %p170
        $region34: #{tpu_custom_call.1} parent=11 // pred_check_branch
          %248 = sbr.rel (%p246) target = $region36
        $region35: #{tpu_custom_call.1} parent=11 // pred_region
          _
        $region36: #{tpu_custom_call.1} parent=11 // pred_fallthru
          _
      $region12: #{tpu_custom_call.1} parent=5 // pred_fallthru
        _
      %p249 = scmp.lt.s32.totalorder %s18, 2
      // Predicated region
      $region37: #{tpu_custom_call.1} parent=5 // pred_check
        %p250 = pneg %p249
      $region38: #{tpu_custom_call.1} parent=5 // pred_check_branch
        %252 = sbr.rel (%p250) target = $region40
      $region39: #{tpu_custom_call.1} parent=5 // pred_region
        // Predicated region
        $region41: #{tpu_custom_call.1} parent=39 // pred_check
          %p253 = pneg %p38
        $region42: #{tpu_custom_call.1} parent=39 // pred_check_branch
          %255 = sbr.rel (%p253) target = $region44
        $region43: #{tpu_custom_call.1} parent=39 // pred_region
          %p256 = scmp.lt.s32.totalorder %s18, 1
          %s257 = scalar_select %p256, %s18, 1
          %s258 = smul.addr %s257, 72
          %s259 = smul.addr %s258, 4
          %s260 = scalar_lea.vmem %s0, %s259
        $region44: #{tpu_custom_call.1} parent=39 // pred_fallthru
          _
      $region40: #{tpu_custom_call.1} parent=5 // pred_fallthru
        _
      %p261 = scmp.le.s32.totalorder 1, %s18
      %p262 = scmp.lt.s32.totalorder %s18, 3
      %p263 = pnand %p261, %p262
      %p264 = pneg %p263
      // Predicated region
      $region45: #{tpu_custom_call.1} parent=5 // pred_check
        _
      $region46: #{tpu_custom_call.1} parent=5 // pred_check_branch
        %266 = sbr.rel (%p263) target = $region48
      $region47: #{tpu_custom_call.1} parent=5 // pred_region
        %s267 = ssub.s32 %s18, 1
        // Predicated region
        $region49: #{tpu_custom_call.1} parent=47 // pred_check
          %p268 = pneg %p107
        $region50: #{tpu_custom_call.1} parent=47 // pred_check_branch
          %270 = sbr.rel (%p268) target = $region52
        $region51: #{tpu_custom_call.1} parent=47 // pred_region
          %271 = dma.done [#allocation5], 9216
        $region52: #{tpu_custom_call.1} parent=47 // pred_fallthru
          _
        // Predicated region
        $region53: #{tpu_custom_call.1} parent=47 // pred_check
          %p272 = pneg %p149
        $region54: #{tpu_custom_call.1} parent=47 // pred_check_branch
          %274 = sbr.rel (%p272) target = $region56
        $region55: #{tpu_custom_call.1} parent=47 // pred_region
          %275 = dma.done [#allocation8], 9216
        $region56: #{tpu_custom_call.1} parent=47 // pred_fallthru
          _
        %p276 = scmp.lt.s32.totalorder %s23, 1
        %s277 = scalar_select %p276, %s23, 1
        %s278 = smul.addr %s277, 72
        %s279 = smul.addr %s278, 4
        %s280 = scalar_lea.vmem %s0, %s279
        %p281 = pneg %p44
        %p282 = pneg %p41
        %p283 = pneg %p65
        %p284 = pneg %p62
        %p285 = pneg %p86
        %p286 = pneg %p83
        %p287 = pneg %p107
        %p288 = pneg %p104
        %p289 = pneg %p128
        %p290 = pneg %p125
        %p291 = pneg %p149
        %p292 = pneg %p146
        %p293 = pneg %p170
        %p294 = pneg %p167
        %p295 = pneg %p196
        %p296 = pneg %p193
        %s297 = sand.u32 %s183, 1
        %s298 = scalar_lea.sflag [#allocation6], %s297
        %s299 = sand.u32 %s183, 1
        %s300 = smul.addr %s299, 32
        %s301 = scalar_lea.vmem [#allocation9], %s300
        %p302 = scmp.lt.s32.totalorder %s23, 1
        %s303 = scalar_select %p302, %s23, 1
        %s304 = smul.addr %s303, 72
        %s305 = smul.addr %s304, 4
        %s306 = scalar_lea.vmem %s0, %s305
        %v308 = vld [vmem:[%s306] sm:$0xff]
        %v309 = vld [vmem:[%s306 + $0x8] sm:$0xff]
        %v310 = vld [vmem:[%s306 + $0x20] sm:$0xff]
        %v311 = vld [vmem:[%s306 + $0x28] sm:$0xff]
        %v312 = vld [vmem:[%s306 + $0x40] sm:$0xff]
        %v313 = vld [vmem:[%s306 + $0x48] sm:$0xff]
        %v314 = vld [vmem:[%s306 + $0x60] sm:$0xff]
        %v315 = vld [vmem:[%s306 + $0x68] sm:$0xff]
        %v316 = vld [vmem:[%s306 + $0x80] sm:$0xff]
        %v317 = vld [vmem:[%s306 + $0x88] sm:$0xff]
        %v318 = vld [vmem:[%s306 + $0xa0] sm:$0xff]
        %v319 = vld [vmem:[%s306 + $0xa8] sm:$0xff]
        %v320 = vld [vmem:[%s306 + $0xc0] sm:$0xff]
        %v321 = vld [vmem:[%s306 + $0xc8] sm:$0xff]
        %v322 = vld [vmem:[%s306 + $0xe0] sm:$0xff]
        %v323 = vld [vmem:[%s306 + $0xe8] sm:$0xff]
        %v324 = vld [vmem:[%s1] sm:$0xf]
        %v325 = vld [vmem:[%s1 + $0x4] sm:$0xf]
        %v326 = vld [vmem:[%s1 + $0x8] sm:$0xf]
        %v327 = vld [vmem:[%s1 + $0xc] sm:$0xf]
        %v328 = vld [vmem:[%s1 + $0x10] sm:$0xf]
        %v329 = vld [vmem:[%s1 + $0x14] sm:$0xf]
        %v330 = vld [vmem:[%s1 + $0x18] sm:$0xf]
        %v331 = vld [vmem:[%s1 + $0x1c] sm:$0xf]
        %v332 = vld [vmem:[%s1 + $0x20] sm:$0xf]
        %v333 = vld [vmem:[%s1 + $0x24] sm:$0xf]
        %v334 = vld [vmem:[%s1 + $0x28] sm:$0xf]
        %v335 = vld [vmem:[%s1 + $0x2c] sm:$0xf]
        %v336 = vld [vmem:[%s1 + $0x30] sm:$0xf]
        %v337 = vld [vmem:[%s1 + $0x34] sm:$0xf]
        %v338 = vld [vmem:[%s1 + $0x38] sm:$0xf]
        %v339 = vld [vmem:[%s1 + $0x3c] sm:$0xf]
        %v340 = vld [vmem:[%s1 + $0x40] sm:$0xf]
        %v341 = vld [vmem:[%s1 + $0x44] sm:$0xf]
        %v342 = vld [vmem:[%s1 + $0x48] sm:$0xf]
        %v343 = vld [vmem:[%s1 + $0x4c] sm:$0xf]
        %v344 = vld [vmem:[%s1 + $0x50] sm:$0xf]
        %v345 = vld [vmem:[%s1 + $0x54] sm:$0xf]
        %v346 = vld [vmem:[%s1 + $0x58] sm:$0xf]
        %v347 = vld [vmem:[%s1 + $0x5c] sm:$0xf]
        %v348 = vld [vmem:[%s1 + $0x60] sm:$0xf]
        %v349 = vld [vmem:[%s1 + $0x64] sm:$0xf]
        %v350 = vld [vmem:[%s1 + $0x68] sm:$0xf]
        %v351 = vld [vmem:[%s1 + $0x6c] sm:$0xf]
        %v352 = vld [vmem:[%s1 + $0x70] sm:$0xf]
        %v353 = vld [vmem:[%s1 + $0x74] sm:$0xf]
        %v354 = vld [vmem:[%s1 + $0x78] sm:$0xf]
        %v355 = vld [vmem:[%s1 + $0x7c] sm:$0xf]
        %v356 = vld [vmem:[%s1 + $0x80] sm:$0xf]
        %v357 = vld [vmem:[%s1 + $0x84] sm:$0xf]
        %v358 = vld [vmem:[%s1 + $0x88] sm:$0xf]
        %v359 = vld [vmem:[%s1 + $0x8c] sm:$0xf]
        %v360 = vld [vmem:[%s1 + $0x90] sm:$0xf]
        %v361 = vld [vmem:[%s1 + $0x94] sm:$0xf]
        %v362 = vld [vmem:[%s1 + $0x98] sm:$0xf]
        %v363 = vld [vmem:[%s1 + $0x9c] sm:$0xf]
        %v364 = vld [vmem:[%s1 + $0xa0] sm:$0xf]
        %v365 = vld [vmem:[%s1 + $0xa4] sm:$0xf]
        %v366 = vld [vmem:[%s1 + $0xa8] sm:$0xf]
        %v367 = vld [vmem:[%s1 + $0xac] sm:$0xf]
        %v368 = vld [vmem:[%s1 + $0xb0] sm:$0xf]
        %v369 = vld [vmem:[%s1 + $0xb4] sm:$0xf]
        %v370 = vld [vmem:[%s1 + $0xb8] sm:$0xf]
        %v371 = vld [vmem:[%s1 + $0xbc] sm:$0xf]
        %v372 = vld [vmem:[%s1 + $0xc0] sm:$0xf]
        %v373 = vld [vmem:[%s1 + $0xc4] sm:$0xf]
        %v374 = vld [vmem:[%s1 + $0xc8] sm:$0xf]
        %v375 = vld [vmem:[%s1 + $0xcc] sm:$0xf]
        %v376 = vld [vmem:[%s1 + $0xd0] sm:$0xf]
        %v377 = vld [vmem:[%s1 + $0xd4] sm:$0xf]
        %v378 = vld [vmem:[%s1 + $0xd8] sm:$0xf]
        %v379 = vld [vmem:[%s1 + $0xdc] sm:$0xf]
        %v380 = vld [vmem:[%s1 + $0xe0] sm:$0xf]
        %v381 = vld [vmem:[%s1 + $0xe4] sm:$0xf]
        %v382 = vld [vmem:[%s1 + $0xe8] sm:$0xf]
        %v383 = vld [vmem:[%s1 + $0xec] sm:$0xf]
        %v384 = vld [vmem:[%s1 + $0xf0] sm:$0xf]
        %v385 = vld [vmem:[%s1 + $0xf4] sm:$0xf]
        %v386 = vld [vmem:[%s1 + $0xf8] sm:$0xf]
        %v387 = vld [vmem:[%s1 + $0xfc] sm:$0xf]
        %s388 = scalar_lea.vmem %s306, 32
        %v389 = vld [vmem:[%s388] sm:$0xff]
        %v390 = vld [vmem:[%s388 + $0x20] sm:$0xff]
        %v391 = vld [vmem:[%s388 + $0x40] sm:$0xff]
        %v392 = vld [vmem:[%s388 + $0x60] sm:$0xff]
        %v393 = vld [vmem:[%s388 + $0x80] sm:$0xff]
        %v394 = vld [vmem:[%s388 + $0xa0] sm:$0xff]
        %v395 = vld [vmem:[%s388 + $0xc0] sm:$0xff]
        %v396 = vld [vmem:[%s388 + $0xe0] sm:$0xff]
        %v397 = vld [vmem:[%s1 + $0x100] sm:$0xf]
        %v398 = vld [vmem:[%s1 + $0x104] sm:$0xf]
        %v399 = vld [vmem:[%s1 + $0x108] sm:$0xf]
        %v400 = vld [vmem:[%s1 + $0x10c] sm:$0xf]
        %v401 = vld [vmem:[%s1 + $0x110] sm:$0xf]
        %v402 = vld [vmem:[%s1 + $0x114] sm:$0xf]
        %v403 = vld [vmem:[%s1 + $0x118] sm:$0xf]
        %v404 = vld [vmem:[%s1 + $0x11c] sm:$0xf]
        %v405 = vld [vmem:[%s1 + $0x120] sm:$0xf]
        %v406 = vld [vmem:[%s1 + $0x124] sm:$0xf]
        %v407 = vld [vmem:[%s1 + $0x128] sm:$0xf]
        %v408 = vld [vmem:[%s1 + $0x12c] sm:$0xf]
        %v409 = vld [vmem:[%s1 + $0x130] sm:$0xf]
        %v410 = vld [vmem:[%s1 + $0x134] sm:$0xf]
        %v411 = vld [vmem:[%s1 + $0x138] sm:$0xf]
        %v412 = vld [vmem:[%s1 + $0x13c] sm:$0xf]
        %v413 = vld [vmem:[%s1 + $0x140] sm:$0xf]
        %v414 = vld [vmem:[%s1 + $0x144] sm:$0xf]
        %v415 = vld [vmem:[%s1 + $0x148] sm:$0xf]
        %v416 = vld [vmem:[%s1 + $0x14c] sm:$0xf]
        %v417 = vld [vmem:[%s1 + $0x150] sm:$0xf]
        %v418 = vld [vmem:[%s1 + $0x154] sm:$0xf]
        %v419 = vld [vmem:[%s1 + $0x158] sm:$0xf]
        %v420 = vld [vmem:[%s1 + $0x15c] sm:$0xf]
        %v421 = vld [vmem:[%s1 + $0x160] sm:$0xf]
        %v422 = vld [vmem:[%s1 + $0x164] sm:$0xf]
        %v423 = vld [vmem:[%s1 + $0x168] sm:$0xf]
        %v424 = vld [vmem:[%s1 + $0x16c] sm:$0xf]
        %v425 = vld [vmem:[%s1 + $0x170] sm:$0xf]
        %v426 = vld [vmem:[%s1 + $0x174] sm:$0xf]
        %v427 = vld [vmem:[%s1 + $0x178] sm:$0xf]
        %v428 = vld [vmem:[%s1 + $0x17c] sm:$0xf]
        %v437 = vunpack.c.l.b16 %v389
        %v438 = vunpack.c.h.b16 %v389
        %v439 = vunpack.c.l.b16 %v390
        %v440 = vunpack.c.h.b16 %v390
        %v441 = vunpack.c.l.b16 %v391
        %v442 = vunpack.c.h.b16 %v391
        %v443 = vunpack.c.l.b16 %v392
        %v444 = vunpack.c.h.b16 %v392
        %v445 = vunpack.c.l.b16 %v393
        %v446 = vunpack.c.h.b16 %v393
        %v447 = vunpack.c.l.b16 %v394
        %v448 = vunpack.c.h.b16 %v394
        %v449 = vunpack.c.l.b16 %v395
        %v450 = vunpack.c.h.b16 %v395
        %v451 = vunpack.c.l.b16 %v396
        %v452 = vunpack.c.h.b16 %v396
        %v453 = vpack.c.b16 %v439, %v437
        %v454 = vpack.c.b16 %v440, %v438
        %v455 = vpack.c.b16 %v443, %v441
        %v456 = vpack.c.b16 %v444, %v442
        %v457 = vpack.c.b16 %v447, %v445
        %v458 = vpack.c.b16 %v448, %v446
        %v459 = vpack.c.b16 %v451, %v449
        %v460 = vpack.c.b16 %v452, %v450
        %v501 = vunpack.c.l.b16 %v397
        %v502 = vunpack.c.l.b16 %v398
        %v503 = vunpack.c.l.b16 %v399
        %v504 = vunpack.c.l.b16 %v400
        %v505 = vunpack.c.l.b16 %v401
        %v506 = vunpack.c.l.b16 %v402
        %v507 = vunpack.c.l.b16 %v403
        %v508 = vunpack.c.l.b16 %v404
        %v509 = vunpack.c.l.b16 %v405
        %v510 = vunpack.c.l.b16 %v406
        %v511 = vunpack.c.l.b16 %v407
        %v512 = vunpack.c.l.b16 %v408
        %v513 = vunpack.c.l.b16 %v409
        %v514 = vunpack.c.l.b16 %v410
        %v515 = vunpack.c.l.b16 %v411
        %v516 = vunpack.c.l.b16 %v412
        %v517 = vunpack.c.l.b16 %v413
        %v518 = vunpack.c.l.b16 %v414
        %v519 = vunpack.c.l.b16 %v415
        %v520 = vunpack.c.l.b16 %v416
        %v521 = vunpack.c.l.b16 %v417
        %v522 = vunpack.c.l.b16 %v418
        %v523 = vunpack.c.l.b16 %v419
        %v524 = vunpack.c.l.b16 %v420
        %v525 = vunpack.c.l.b16 %v421
        %v526 = vunpack.c.l.b16 %v422
        %v527 = vunpack.c.l.b16 %v423
        %v528 = vunpack.c.l.b16 %v424
        %v529 = vunpack.c.l.b16 %v425
        %v530 = vunpack.c.l.b16 %v426
        %v531 = vunpack.c.l.b16 %v427
        %v532 = vunpack.c.l.b16 %v428
        %v533 = vpack.c.b16 %v502, %v501
        %v534 = vpack.c.b16 %v504, %v503
        %v535 = vpack.c.b16 %v506, %v505
        %v536 = vpack.c.b16 %v508, %v507
        %v537 = vpack.c.b16 %v510, %v509
        %v538 = vpack.c.b16 %v512, %v511
        %v539 = vpack.c.b16 %v514, %v513
        %v540 = vpack.c.b16 %v516, %v515
        %v541 = vpack.c.b16 %v518, %v517
        %v542 = vpack.c.b16 %v520, %v519
        %v543 = vpack.c.b16 %v522, %v521
        %v544 = vpack.c.b16 %v524, %v523
        %v545 = vpack.c.b16 %v526, %v525
        %v546 = vpack.c.b16 %v528, %v527
        %v547 = vpack.c.b16 %v530, %v529
        %v548 = vpack.c.b16 %v532, %v531
        %565 = vmatprep.subr.bf16.mxu0 0
        %566 = vmatpush1.bf16.msra.mxu0 %v533
        %567 = vmatprep.subr.bf16.mxu0 0
        %568 = vmatpush1.bf16.msra.mxu0 %v534
        %569 = vmatprep.subr.bf16.mxu0 0
        %570 = vmatpush1.bf16.msra.mxu0 %v535
        %571 = vmatprep.subr.bf16.mxu0 0
        %572 = vmatpush1.bf16.msra.mxu0 %v536
        %573 = vmatprep.subr.bf16.mxu0 0
        %574 = vmatpush1.bf16.msra.mxu0 %v537
        %575 = vmatprep.subr.bf16.mxu0 0
        %576 = vmatpush1.bf16.msra.mxu0 %v538
        %577 = vmatprep.subr.bf16.mxu0 0
        %578 = vmatpush1.bf16.msra.mxu0 %v539
        %579 = vmatprep.subr.bf16.mxu0 0
        %580 = vmatpush1.bf16.msra.mxu0 %v540
        %581 = vmatprep.subr.bf16.mxu0 0
        %582 = vmatpush1.bf16.msra.mxu0 %v541
        %583 = vmatprep.subr.bf16.mxu0 0
        %584 = vmatpush1.bf16.msra.mxu0 %v542
        %585 = vmatprep.subr.bf16.mxu0 0
        %586 = vmatpush1.bf16.msra.mxu0 %v543
        %587 = vmatprep.subr.bf16.mxu0 0
        %588 = vmatpush1.bf16.msra.mxu0 %v544
        %589 = vmatprep.subr.bf16.mxu0 0
        %590 = vmatpush1.bf16.msra.mxu0 %v545
        %591 = vmatprep.subr.bf16.mxu0 0
        %592 = vmatpush1.bf16.msra.mxu0 %v546
        %593 = vmatprep.subr.bf16.mxu0 0
        %594 = vmatpush1.bf16.msra.mxu0 %v547
        %595 = vmatprep.subr.bf16.mxu0 0
        %596 = vmatpush1.bf16.msra.mxu0 %v548
        %597 = vmatprep.mubr.bf16.mxu0 %v454
        %598 = vmatmul.mubr.bf16.gmra.mrb[0].mxu0 %v453
        %v599 = vpop.f32.mrb[0].mxu0
        %v600 = vadd.f32 0.0, %v599
        %v601 = vpop.f32.mrb[0].mxu0
        %v602 = vpop.f32.mrb[0].mxu0
        %v603 = vadd.f32 0.0, %v602
        %v604 = vpop.f32.mrb[0].mxu0
        %605 = vmatprep.mubr.bf16.mxu0 %v456
        %606 = vmatmul.mubr.bf16.gmra.mrb[0].mxu0 %v455
        %v607 = vpop.f32.mrb[0].mxu0
        %v608 = vadd.f32 0.0, %v607
        %v609 = vpop.f32.mrb[0].mxu0
        %v610 = vpop.f32.mrb[0].mxu0
        %v611 = vadd.f32 0.0, %v610
        %v612 = vpop.f32.mrb[0].mxu0
        %613 = vmatprep.mubr.bf16.mxu0 %v458
        %614 = vmatmul.mubr.bf16.gmra.mrb[0].mxu0 %v457
        %v615 = vpop.f32.mrb[0].mxu0
        %v616 = vadd.f32 0.0, %v615
        %v617 = vpop.f32.mrb[0].mxu0
        %v618 = vpop.f32.mrb[0].mxu0
        %v619 = vadd.f32 0.0, %v618
        %v620 = vpop.f32.mrb[0].mxu0
        %621 = vmatprep.mubr.bf16.mxu0 %v460
        %622 = vmatmul.mubr.bf16.gmra.mrb[0].mxu0 %v459
        %v623 = vpop.f32.mrb[0].mxu0
        %v624 = vadd.f32 0.0, %v623
        %v625 = vpop.f32.mrb[0].mxu0
        %v626 = vpop.f32.mrb[0].mxu0
        %v627 = vadd.f32 0.0, %v626
        %v628 = vpop.f32.mrb[0].mxu0
        %629 = vdwg.mxu0
        %v646 = vunpack.c.l.b16 %v308
        %v647 = vunpack.c.h.b16 %v308
        %v648 = vunpack.c.l.b16 %v309
        %v649 = vunpack.c.h.b16 %v309
        %v650 = vunpack.c.l.b16 %v310
        %v651 = vunpack.c.h.b16 %v310
        %v652 = vunpack.c.l.b16 %v311
        %v653 = vunpack.c.h.b16 %v311
        %v654 = vunpack.c.l.b16 %v312
        %v655 = vunpack.c.h.b16 %v312
        %v656 = vunpack.c.l.b16 %v313
        %v657 = vunpack.c.h.b16 %v313
        %v658 = vunpack.c.l.b16 %v314
        %v659 = vunpack.c.h.b16 %v314
        %v660 = vunpack.c.l.b16 %v315
        %v661 = vunpack.c.h.b16 %v315
        %v662 = vunpack.c.l.b16 %v316
        %v663 = vunpack.c.h.b16 %v316
        %v664 = vunpack.c.l.b16 %v317
        %v665 = vunpack.c.h.b16 %v317
        %v666 = vunpack.c.l.b16 %v318
        %v667 = vunpack.c.h.b16 %v318
        %v668 = vunpack.c.l.b16 %v319
        %v669 = vunpack.c.h.b16 %v319
        %v670 = vunpack.c.l.b16 %v320
        %v671 = vunpack.c.h.b16 %v320
        %v672 = vunpack.c.l.b16 %v321
        %v673 = vunpack.c.h.b16 %v321
        %v674 = vunpack.c.l.b16 %v322
        %v675 = vunpack.c.h.b16 %v322
        %v676 = vunpack.c.l.b16 %v323
        %v677 = vunpack.c.h.b16 %v323
        %v678 = vpack.c.b16 %v650, %v646
        %v679 = vpack.c.b16 %v651, %v647
        %v680 = vpack.c.b16 %v652, %v648
        %v681 = vpack.c.b16 %v653, %v649
        %v682 = vpack.c.b16 %v658, %v654
        %v683 = vpack.c.b16 %v659, %v655
        %v684 = vpack.c.b16 %v660, %v656
        %v685 = vpack.c.b16 %v661, %v657
        %v686 = vpack.c.b16 %v666, %v662
        %v687 = vpack.c.b16 %v667, %v663
        %v688 = vpack.c.b16 %v668, %v664
        %v689 = vpack.c.b16 %v669, %v665
        %v690 = vpack.c.b16 %v674, %v670
        %v691 = vpack.c.b16 %v675, %v671
        %v692 = vpack.c.b16 %v676, %v672
        %v693 = vpack.c.b16 %v677, %v673
        %v774 = vunpack.c.l.b16 %v324
        %v775 = vunpack.c.l.b16 %v325
        %v776 = vunpack.c.l.b16 %v326
        %v777 = vunpack.c.l.b16 %v327
        %v778 = vunpack.c.l.b16 %v328
        %v779 = vunpack.c.l.b16 %v329
        %v780 = vunpack.c.l.b16 %v330
        %v781 = vunpack.c.l.b16 %v331
        %v782 = vunpack.c.l.b16 %v332
        %v783 = vunpack.c.l.b16 %v333
        %v784 = vunpack.c.l.b16 %v334
        %v785 = vunpack.c.l.b16 %v335
        %v786 = vunpack.c.l.b16 %v336
        %v787 = vunpack.c.l.b16 %v337
        %v788 = vunpack.c.l.b16 %v338
        %v789 = vunpack.c.l.b16 %v339
        %v790 = vunpack.c.l.b16 %v340
        %v791 = vunpack.c.l.b16 %v341
        %v792 = vunpack.c.l.b16 %v342
        %v793 = vunpack.c.l.b16 %v343
        %v794 = vunpack.c.l.b16 %v344
        %v795 = vunpack.c.l.b16 %v345
        %v796 = vunpack.c.l.b16 %v346
        %v797 = vunpack.c.l.b16 %v347
        %v798 = vunpack.c.l.b16 %v348
        %v799 = vunpack.c.l.b16 %v349
        %v800 = vunpack.c.l.b16 %v350
        %v801 = vunpack.c.l.b16 %v351
        %v802 = vunpack.c.l.b16 %v352
        %v803 = vunpack.c.l.b16 %v353
        %v804 = vunpack.c.l.b16 %v354
        %v805 = vunpack.c.l.b16 %v355
        %v806 = vunpack.c.l.b16 %v356
        %v807 = vunpack.c.l.b16 %v357
        %v808 = vunpack.c.l.b16 %v358
        %v809 = vunpack.c.l.b16 %v359
        %v810 = vunpack.c.l.b16 %v360
        %v811 = vunpack.c.l.b16 %v361
        %v812 = vunpack.c.l.b16 %v362
        %v813 = vunpack.c.l.b16 %v363
        %v814 = vunpack.c.l.b16 %v364
        %v815 = vunpack.c.l.b16 %v365
        %v816 = vunpack.c.l.b16 %v366
        %v817 = vunpack.c.l.b16 %v367
        %v818 = vunpack.c.l.b16 %v368
        %v819 = vunpack.c.l.b16 %v369
        %v820 = vunpack.c.l.b16 %v370
        %v821 = vunpack.c.l.b16 %v371
        %v822 = vunpack.c.l.b16 %v372
        %v823 = vunpack.c.l.b16 %v373
        %v824 = vunpack.c.l.b16 %v374
        %v825 = vunpack.c.l.b16 %v375
        %v826 = vunpack.c.l.b16 %v376
        %v827 = vunpack.c.l.b16 %v377
        %v828 = vunpack.c.l.b16 %v378
        %v829 = vunpack.c.l.b16 %v379
        %v830 = vunpack.c.l.b16 %v380
        %v831 = vunpack.c.l.b16 %v381
        %v832 = vunpack.c.l.b16 %v382
        %v833 = vunpack.c.l.b16 %v383
        %v834 = vunpack.c.l.b16 %v384
        %v835 = vunpack.c.l.b16 %v385
        %v836 = vunpack.c.l.b16 %v386
        %v837 = vunpack.c.l.b16 %v387
        %v838 = vpack.c.b16 %v775, %v774
        %v839 = vpack.c.b16 %v777, %v776
        %v840 = vpack.c.b16 %v779, %v778
        %v841 = vpack.c.b16 %v781, %v780
        %v842 = vpack.c.b16 %v783, %v782
        %v843 = vpack.c.b16 %v785, %v784
        %v844 = vpack.c.b16 %v787, %v786
        %v845 = vpack.c.b16 %v789, %v788
        %v846 = vpack.c.b16 %v791, %v790
        %v847 = vpack.c.b16 %v793, %v792
        %v848 = vpack.c.b16 %v795, %v794
        %v849 = vpack.c.b16 %v797, %v796
        %v850 = vpack.c.b16 %v799, %v798
        %v851 = vpack.c.b16 %v801, %v800
        %v852 = vpack.c.b16 %v803, %v802
        %v853 = vpack.c.b16 %v805, %v804
        %v854 = vpack.c.b16 %v807, %v806
        %v855 = vpack.c.b16 %v809, %v808
        %v856 = vpack.c.b16 %v811, %v810
        %v857 = vpack.c.b16 %v813, %v812
        %v858 = vpack.c.b16 %v815, %v814
        %v859 = vpack.c.b16 %v817, %v816
        %v860 = vpack.c.b16 %v819, %v818
        %v861 = vpack.c.b16 %v821, %v820
        %v862 = vpack.c.b16 %v823, %v822
        %v863 = vpack.c.b16 %v825, %v824
        %v864 = vpack.c.b16 %v827, %v826
        %v865 = vpack.c.b16 %v829, %v828
        %v866 = vpack.c.b16 %v831, %v830
        %v867 = vpack.c.b16 %v833, %v832
        %v868 = vpack.c.b16 %v835, %v834
        %v869 = vpack.c.b16 %v837, %v836
        %902 = vmatprep.subr.bf16.mxu0 0
        %903 = vmatpush1.bf16.msra.mxu0 %v838
        %904 = vmatprep.subr.bf16.mxu0 0
        %905 = vmatpush1.bf16.msra.mxu0 %v839
        %906 = vmatprep.subr.bf16.mxu0 0
        %907 = vmatpush1.bf16.msra.mxu0 %v840
        %908 = vmatprep.subr.bf16.mxu0 0
        %909 = vmatpush1.bf16.msra.mxu0 %v841
        %910 = vmatprep.subr.bf16.mxu0 0
        %911 = vmatpush1.bf16.msra.mxu0 %v842
        %912 = vmatprep.subr.bf16.mxu0 0
        %913 = vmatpush1.bf16.msra.mxu0 %v843
        %914 = vmatprep.subr.bf16.mxu0 0
        %915 = vmatpush1.bf16.msra.mxu0 %v844
        %916 = vmatprep.subr.bf16.mxu0 0
        %917 = vmatpush1.bf16.msra.mxu0 %v845
        %918 = vmatprep.subr.bf16.mxu0 0
        %919 = vmatpush1.bf16.msra.mxu0 %v846
        %920 = vmatprep.subr.bf16.mxu0 0
        %921 = vmatpush1.bf16.msra.mxu0 %v847
        %922 = vmatprep.subr.bf16.mxu0 0
        %923 = vmatpush1.bf16.msra.mxu0 %v848
        %924 = vmatprep.subr.bf16.mxu0 0
        %925 = vmatpush1.bf16.msra.mxu0 %v849
        %926 = vmatprep.subr.bf16.mxu0 0
        %927 = vmatpush1.bf16.msra.mxu0 %v850
        %928 = vmatprep.subr.bf16.mxu0 0
        %929 = vmatpush1.bf16.msra.mxu0 %v851
        %930 = vmatprep.subr.bf16.mxu0 0
        %931 = vmatpush1.bf16.msra.mxu0 %v852
        %932 = vmatprep.subr.bf16.mxu0 0
        %933 = vmatpush1.bf16.msra.mxu0 %v853
        %934 = vmatprep.mubr.bf16.mxu0 %v679
        %935 = vmatmul.mubr.bf16.gmra.mrb[0].mxu0 %v678
        %v936 = vpop.f32.mrb[0].mxu0
        %v937 = vadd.f32 %v600, %v936
        %v938 = vpop.f32.mrb[0].mxu0
        %v939 = vpop.f32.mrb[0].mxu0
        %v940 = vadd.f32 %v603, %v939
        %v941 = vpop.f32.mrb[0].mxu0
        %942 = vmatprep.mubr.bf16.mxu0 %v683
        %943 = vmatmul.mubr.bf16.gmra.mrb[0].mxu0 %v682
        %v944 = vpop.f32.mrb[0].mxu0
        %v945 = vadd.f32 %v608, %v944
        %v946 = vpop.f32.mrb[0].mxu0
        %v947 = vpop.f32.mrb[0].mxu0
        %v948 = vadd.f32 %v611, %v947
        %v949 = vpop.f32.mrb[0].mxu0
        %950 = vmatprep.mubr.bf16.mxu0 %v687
        %951 = vmatmul.mubr.bf16.gmra.mrb[0].mxu0 %v686
        %v952 = vpop.f32.mrb[0].mxu0
        %v953 = vadd.f32 %v616, %v952
        %v954 = vpop.f32.mrb[0].mxu0
        %v955 = vpop.f32.mrb[0].mxu0
        %v956 = vadd.f32 %v619, %v955
        %v957 = vpop.f32.mrb[0].mxu0
        %958 = vmatprep.mubr.bf16.mxu0 %v691
        %959 = vmatmul.mubr.bf16.gmra.mrb[0].mxu0 %v690
        %v960 = vpop.f32.mrb[0].mxu0
        %v961 = vadd.f32 %v624, %v960
        %v962 = vpop.f32.mrb[0].mxu0
        %v963 = vpop.f32.mrb[0].mxu0
        %v964 = vadd.f32 %v627, %v963
        %v965 = vpop.f32.mrb[0].mxu0
        %966 = vdwg.mxu0
        %967 = vmatprep.subr.bf16.mxu0 0
        %968 = vmatpush1.bf16.msra.mxu0 %v854
        %969 = vmatprep.subr.bf16.mxu0 0
        %970 = vmatpush1.bf16.msra.mxu0 %v855
        %971 = vmatprep.subr.bf16.mxu0 0
        %972 = vmatpush1.bf16.msra.mxu0 %v856
        %973 = vmatprep.subr.bf16.mxu0 0
        %974 = vmatpush1.bf16.msra.mxu0 %v857
        %975 = vmatprep.subr.bf16.mxu0 0
        %976 = vmatpush1.bf16.msra.mxu0 %v858
        %977 = vmatprep.subr.bf16.mxu0 0
        %978 = vmatpush1.bf16.msra.mxu0 %v859
        %979 = vmatprep.subr.bf16.mxu0 0
        %980 = vmatpush1.bf16.msra.mxu0 %v860
        %981 = vmatprep.subr.bf16.mxu0 0
        %982 = vmatpush1.bf16.msra.mxu0 %v861
        %983 = vmatprep.subr.bf16.mxu0 0
        %984 = vmatpush1.bf16.msra.mxu0 %v862
        %985 = vmatprep.subr.bf16.mxu0 0
        %986 = vmatpush1.bf16.msra.mxu0 %v863
        %987 = vmatprep.subr.bf16.mxu0 0
        %988 = vmatpush1.bf16.msra.mxu0 %v864
        %989 = vmatprep.subr.bf16.mxu0 0
        %990 = vmatpush1.bf16.msra.mxu0 %v865
        %991 = vmatprep.subr.bf16.mxu0 0
        %992 = vmatpush1.bf16.msra.mxu0 %v866
        %993 = vmatprep.subr.bf16.mxu0 0
        %994 = vmatpush1.bf16.msra.mxu0 %v867
        %995 = vmatprep.subr.bf16.mxu0 0
        %996 = vmatpush1.bf16.msra.mxu0 %v868
        %997 = vmatprep.subr.bf16.mxu0 0
        %998 = vmatpush1.bf16.msra.mxu0 %v869
        %999 = vmatprep.mubr.bf16.mxu0 %v681
        %1000 = vmatmul.mubr.bf16.gmra.mrb[0].mxu0 %v680
        %v1001 = vpop.f32.mrb[0].mxu0
        %v1002 = vadd.f32 %v937, %v1001
        %v1003 = vpop.f32.mrb[0].mxu0
        %v1004 = vpop.f32.mrb[0].mxu0
        %v1005 = vadd.f32 %v940, %v1004
        %v1006 = vpop.f32.mrb[0].mxu0
        %1007 = vmatprep.mubr.bf16.mxu0 %v685
        %1008 = vmatmul.mubr.bf16.gmra.mrb[0].mxu0 %v684
        %v1009 = vpop.f32.mrb[0].mxu0
        %v1010 = vadd.f32 %v945, %v1009
        %v1011 = vpop.f32.mrb[0].mxu0
        %v1012 = vpop.f32.mrb[0].mxu0
        %v1013 = vadd.f32 %v948, %v1012
        %v1014 = vpop.f32.mrb[0].mxu0
        %1015 = vmatprep.mubr.bf16.mxu0 %v689
        %1016 = vmatmul.mubr.bf16.gmra.mrb[0].mxu0 %v688
        %v1017 = vpop.f32.mrb[0].mxu0
        %v1018 = vadd.f32 %v953, %v1017
        %v1019 = vpop.f32.mrb[0].mxu0
        %v1020 = vpop.f32.mrb[0].mxu0
        %v1021 = vadd.f32 %v956, %v1020
        %v1022 = vpop.f32.mrb[0].mxu0
        %1023 = vmatprep.mubr.bf16.mxu0 %v693
        %1024 = vmatmul.mubr.bf16.gmra.mrb[0].mxu0 %v692
        %v1025 = vpop.f32.mrb[0].mxu0
        %v1026 = vadd.f32 %v961, %v1025
        %v1027 = vpop.f32.mrb[0].mxu0
        %v1028 = vpop.f32.mrb[0].mxu0
        %v1029 = vadd.f32 %v964, %v1028
        %v1030 = vpop.f32.mrb[0].mxu0
        %1031 = vdwg.mxu0
        %v1032 = vld [vmem:[%s306] sm:$0xf]
        %v1033 = vld [vmem:[%s306 + $0x10] sm:$0x1]
        %v1034 = vld [vmem:[%s306 + $0x20] sm:$0xf]
        %v1035 = vld [vmem:[%s306 + $0x30] sm:$0x1]
        %v1036 = vld [vmem:[%s306 + $0x40] sm:$0xf]
        %v1037 = vld [vmem:[%s306 + $0x50] sm:$0x1]
        %v1038 = vld [vmem:[%s306 + $0x60] sm:$0xf]
        %v1039 = vld [vmem:[%s306 + $0x70] sm:$0x1]
        %v1040 = vld [vmem:[%s306 + $0x80] sm:$0xf]
        %v1041 = vld [vmem:[%s306 + $0x90] sm:$0x1]
        %v1042 = vld [vmem:[%s306 + $0xa0] sm:$0xf]
        %v1043 = vld [vmem:[%s306 + $0xb0] sm:$0x1]
        %v1044 = vld [vmem:[%s306 + $0xc0] sm:$0xf]
        %v1045 = vld [vmem:[%s306 + $0xd0] sm:$0x1]
        %v1046 = vld [vmem:[%s306 + $0xe0] sm:$0xf]
        %v1047 = vld [vmem:[%s306 + $0xf0] sm:$0x1]
        %vm1048 = vsmask.f32 3328
        %vm1049 = vsmask.f32 7440
        %vm1050 = vmor %vm1048, %vm1049
        %v1052 = vshrl.u32 %v1032, 16
        %v1054 = vrot.slane %v1052, 4
        %v1055 = vshll.u32 %v1032, 16
        %v1057 = vrot.slane %v1055, 5
        %v1058 = vor.u32 %v1054, %v1057
        %v1059 = vrot.slane %v1058, 4
        %v1061 = vshll.u32 %v1033, 16
        %v1063 = vrot.slane %v1061, 5
        %v1064 = vsel %vm1050, %v1059, %v1063
        %v1066 = vshrl.u32 %v1034, 16
        %v1068 = vrot.slane %v1066, 4
        %v1069 = vshll.u32 %v1034, 16
        %v1071 = vrot.slane %v1069, 5
        %v1072 = vor.u32 %v1068, %v1071
        %v1073 = vrot.slane %v1072, 4
        %v1075 = vshll.u32 %v1035, 16
        %v1077 = vrot.slane %v1075, 5
        %v1078 = vsel %vm1050, %v1073, %v1077
        %v1080 = vshrl.u32 %v1036, 16
        %v1082 = vrot.slane %v1080, 4
        %v1083 = vshll.u32 %v1036, 16
        %v1085 = vrot.slane %v1083, 5
        %v1086 = vor.u32 %v1082, %v1085
        %v1087 = vrot.slane %v1086, 4
        %v1089 = vshll.u32 %v1037, 16
        %v1091 = vrot.slane %v1089, 5
        %v1092 = vsel %vm1050, %v1087, %v1091
        %v1094 = vshrl.u32 %v1038, 16
        %v1096 = vrot.slane %v1094, 4
        %v1097 = vshll.u32 %v1038, 16
        %v1099 = vrot.slane %v1097, 5
        %v1100 = vor.u32 %v1096, %v1099
        %v1101 = vrot.slane %v1100, 4
        %v1103 = vshll.u32 %v1039, 16
        %v1105 = vrot.slane %v1103, 5
        %v1106 = vsel %vm1050, %v1101, %v1105
        %v1108 = vshrl.u32 %v1040, 16
        %v1110 = vrot.slane %v1108, 4
        %v1111 = vshll.u32 %v1040, 16
        %v1113 = vrot.slane %v1111, 5
        %v1114 = vor.u32 %v1110, %v1113
        %v1115 = vrot.slane %v1114, 4
        %v1117 = vshll.u32 %v1041, 16
        %v1119 = vrot.slane %v1117, 5
        %v1120 = vsel %vm1050, %v1115, %v1119
        %v1122 = vshrl.u32 %v1042, 16
        %v1124 = vrot.slane %v1122, 4
        %v1125 = vshll.u32 %v1042, 16
        %v1127 = vrot.slane %v1125, 5
        %v1128 = vor.u32 %v1124, %v1127
        %v1129 = vrot.slane %v1128, 4
        %v1131 = vshll.u32 %v1043, 16
        %v1133 = vrot.slane %v1131, 5
        %v1134 = vsel %vm1050, %v1129, %v1133
        %v1136 = vshrl.u32 %v1044, 16
        %v1138 = vrot.slane %v1136, 4
        %v1139 = vshll.u32 %v1044, 16
        %v1141 = vrot.slane %v1139, 5
        %v1142 = vor.u32 %v1138, %v1141
        %v1143 = vrot.slane %v1142, 4
        %v1145 = vshll.u32 %v1045, 16
        %v1147 = vrot.slane %v1145, 5
        %v1148 = vsel %vm1050, %v1143, %v1147
        %v1150 = vshrl.u32 %v1046, 16
        %v1152 = vrot.slane %v1150, 4
        %v1153 = vshll.u32 %v1046, 16
        %v1155 = vrot.slane %v1153, 5
        %v1156 = vor.u32 %v1152, %v1155
        %v1157 = vrot.slane %v1156, 4
        %v1159 = vshll.u32 %v1047, 16
        %v1161 = vrot.slane %v1159, 5
        %v1162 = vsel %vm1050, %v1157, %v1161
        %v1163 = vld [vmem:[%s1 + $0x180] sm:$0xf]
        %v1164 = vld [vmem:[%s1 + $0x184] sm:$0xf]
        %v1165 = vld [vmem:[%s1 + $0x188] sm:$0xf]
        %v1166 = vld [vmem:[%s1 + $0x18c] sm:$0xf]
        %v1167 = vld [vmem:[%s1 + $0x190] sm:$0xf]
        %v1168 = vld [vmem:[%s1 + $0x194] sm:$0xf]
        %v1169 = vld [vmem:[%s1 + $0x198] sm:$0xf]
        %v1170 = vld [vmem:[%s1 + $0x19c] sm:$0xf]
        %v1171 = vld [vmem:[%s1 + $0x1a0] sm:$0xf]
        %v1172 = vld [vmem:[%s1 + $0x1a4] sm:$0xf]
        %v1173 = vld [vmem:[%s1 + $0x1a8] sm:$0xf]
        %v1174 = vld [vmem:[%s1 + $0x1ac] sm:$0xf]
        %v1175 = vld [vmem:[%s1 + $0x1b0] sm:$0xf]
        %v1176 = vld [vmem:[%s1 + $0x1b4] sm:$0xf]
        %v1177 = vld [vmem:[%s1 + $0x1b8] sm:$0xf]
        %v1178 = vld [vmem:[%s1 + $0x1bc] sm:$0xf]
        %v1179 = vld [vmem:[%s306 + $0x8] sm:$0xf]
        %v1180 = vld [vmem:[%s306 + $0x18] sm:$0x1]
        %v1181 = vld [vmem:[%s306 + $0x28] sm:$0xf]
        %v1182 = vld [vmem:[%s306 + $0x38] sm:$0x1]
        %v1183 = vld [vmem:[%s306 + $0x48] sm:$0xf]
        %v1184 = vld [vmem:[%s306 + $0x58] sm:$0x1]
        %v1185 = vld [vmem:[%s306 + $0x68] sm:$0xf]
        %v1186 = vld [vmem:[%s306 + $0x78] sm:$0x1]
        %v1187 = vld [vmem:[%s306 + $0x88] sm:$0xf]
        %v1188 = vld [vmem:[%s306 + $0x98] sm:$0x1]
        %v1189 = vld [vmem:[%s306 + $0xa8] sm:$0xf]
        %v1190 = vld [vmem:[%s306 + $0xb8] sm:$0x1]
        %v1191 = vld [vmem:[%s306 + $0xc8] sm:$0xf]
        %v1192 = vld [vmem:[%s306 + $0xd8] sm:$0x1]
        %v1193 = vld [vmem:[%s306 + $0xe8] sm:$0xf]
        %v1194 = vld [vmem:[%s306 + $0xf8] sm:$0x1]
        %v1196 = vshrl.u32 %v1179, 16
        %v1198 = vrot.slane %v1196, 4
        %v1199 = vshll.u32 %v1179, 16
        %v1201 = vrot.slane %v1199, 5
        %v1202 = vor.u32 %v1198, %v1201
        %v1203 = vrot.slane %v1202, 4
        %v1205 = vshll.u32 %v1180, 16
        %v1207 = vrot.slane %v1205, 5
        %v1208 = vsel %vm1050, %v1203, %v1207
        %v1210 = vshrl.u32 %v1181, 16
        %v1212 = vrot.slane %v1210, 4
        %v1213 = vshll.u32 %v1181, 16
        %v1215 = vrot.slane %v1213, 5
        %v1216 = vor.u32 %v1212, %v1215
        %v1217 = vrot.slane %v1216, 4
        %v1219 = vshll.u32 %v1182, 16
        %v1221 = vrot.slane %v1219, 5
        %v1222 = vsel %vm1050, %v1217, %v1221
        %v1224 = vshrl.u32 %v1183, 16
        %v1226 = vrot.slane %v1224, 4
        %v1227 = vshll.u32 %v1183, 16
        %v1229 = vrot.slane %v1227, 5
        %v1230 = vor.u32 %v1226, %v1229
        %v1231 = vrot.slane %v1230, 4
        %v1233 = vshll.u32 %v1184, 16
        %v1235 = vrot.slane %v1233, 5
        %v1236 = vsel %vm1050, %v1231, %v1235
        %v1238 = vshrl.u32 %v1185, 16
        %v1240 = vrot.slane %v1238, 4
        %v1241 = vshll.u32 %v1185, 16
        %v1243 = vrot.slane %v1241, 5
        %v1244 = vor.u32 %v1240, %v1243
        %v1245 = vrot.slane %v1244, 4
        %v1247 = vshll.u32 %v1186, 16
        %v1249 = vrot.slane %v1247, 5
        %v1250 = vsel %vm1050, %v1245, %v1249
        %v1252 = vshrl.u32 %v1187, 16
        %v1254 = vrot.slane %v1252, 4
        %v1255 = vshll.u32 %v1187, 16
        %v1257 = vrot.slane %v1255, 5
        %v1258 = vor.u32 %v1254, %v1257
        %v1259 = vrot.slane %v1258, 4
        %v1261 = vshll.u32 %v1188, 16
        %v1263 = vrot.slane %v1261, 5
        %v1264 = vsel %vm1050, %v1259, %v1263
        %v1266 = vshrl.u32 %v1189, 16
        %v1268 = vrot.slane %v1266, 4
        %v1269 = vshll.u32 %v1189, 16
        %v1271 = vrot.slane %v1269, 5
        %v1272 = vor.u32 %v1268, %v1271
        %v1273 = vrot.slane %v1272, 4
        %v1275 = vshll.u32 %v1190, 16
        %v1277 = vrot.slane %v1275, 5
        %v1278 = vsel %vm1050, %v1273, %v1277
        %v1280 = vshrl.u32 %v1191, 16
        %v1282 = vrot.slane %v1280, 4
        %v1283 = vshll.u32 %v1191, 16
        %v1285 = vrot.slane %v1283, 5
        %v1286 = vor.u32 %v1282, %v1285
        %v1287 = vrot.slane %v1286, 4
        %v1289 = vshll.u32 %v1192, 16
        %v1291 = vrot.slane %v1289, 5
        %v1292 = vsel %vm1050, %v1287, %v1291
        %v1294 = vshrl.u32 %v1193, 16
        %v1296 = vrot.slane %v1294, 4
        %v1297 = vshll.u32 %v1193, 16
        %v1299 = vrot.slane %v1297, 5
        %v1300 = vor.u32 %v1296, %v1299
        %v1301 = vrot.slane %v1300, 4
        %v1303 = vshll.u32 %v1194, 16
        %v1305 = vrot.slane %v1303, 5
        %v1306 = vsel %vm1050, %v1301, %v1305
        %v1307 = vld [vmem:[%s1 + $0x1c0] sm:$0xf]
        %v1308 = vld [vmem:[%s1 + $0x1c4] sm:$0xf]
        %v1309 = vld [vmem:[%s1 + $0x1c8] sm:$0xf]
        %v1310 = vld [vmem:[%s1 + $0x1cc] sm:$0xf]
        %v1311 = vld [vmem:[%s1 + $0x1d0] sm:$0xf]
        %v1312 = vld [vmem:[%s1 + $0x1d4] sm:$0xf]
        %v1313 = vld [vmem:[%s1 + $0x1d8] sm:$0xf]
        %v1314 = vld [vmem:[%s1 + $0x1dc] sm:$0xf]
        %v1315 = vld [vmem:[%s1 + $0x1e0] sm:$0xf]
        %v1316 = vld [vmem:[%s1 + $0x1e4] sm:$0xf]
        %v1317 = vld [vmem:[%s1 + $0x1e8] sm:$0xf]
        %v1318 = vld [vmem:[%s1 + $0x1ec] sm:$0xf]
        %v1319 = vld [vmem:[%s1 + $0x1f0] sm:$0xf]
        %v1320 = vld [vmem:[%s1 + $0x1f4] sm:$0xf]
        %v1321 = vld [vmem:[%s1 + $0x1f8] sm:$0xf]
        %v1322 = vld [vmem:[%s1 + $0x1fc] sm:$0xf]
        %v1323 = vunpack.c.l.b16 %v1208
        %v1324 = vunpack.c.l.b16 %v1222
        %v1325 = vunpack.c.l.b16 %v1236
        %v1326 = vunpack.c.l.b16 %v1250
        %v1327 = vunpack.c.l.b16 %v1264
        %v1328 = vunpack.c.l.b16 %v1278
        %v1329 = vunpack.c.l.b16 %v1292
        %v1330 = vunpack.c.l.b16 %v1306
        %v1331 = vpack.c.b16 %v1324, %v1323
        %v1332 = vpack.c.b16 %v1326, %v1325
        %v1333 = vpack.c.b16 %v1328, %v1327
        %v1334 = vpack.c.b16 %v1330, %v1329
        %v1355 = vunpack.c.l.b16 %v1307
        %v1356 = vunpack.c.l.b16 %v1308
        %v1357 = vunpack.c.l.b16 %v1309
        %v1358 = vunpack.c.l.b16 %v1310
        %v1359 = vunpack.c.l.b16 %v1311
        %v1360 = vunpack.c.l.b16 %v1312
        %v1361 = vunpack.c.l.b16 %v1313
        %v1362 = vunpack.c.l.b16 %v1314
        %v1363 = vunpack.c.l.b16 %v1315
        %v1364 = vunpack.c.l.b16 %v1316
        %v1365 = vunpack.c.l.b16 %v1317
        %v1366 = vunpack.c.l.b16 %v1318
        %v1367 = vunpack.c.l.b16 %v1319
        %v1368 = vunpack.c.l.b16 %v1320
        %v1369 = vunpack.c.l.b16 %v1321
        %v1370 = vunpack.c.l.b16 %v1322
        %v1371 = vpack.c.b16 %v1356, %v1355
        %v1372 = vpack.c.b16 %v1358, %v1357
        %v1373 = vpack.c.b16 %v1360, %v1359
        %v1374 = vpack.c.b16 %v1362, %v1361
        %v1375 = vpack.c.b16 %v1364, %v1363
        %v1376 = vpack.c.b16 %v1366, %v1365
        %v1377 = vpack.c.b16 %v1368, %v1367
        %v1378 = vpack.c.b16 %v1370, %v1369
        %1387 = vmatprep.subr.bf16.mxu0 0
        %1388 = vmatpush1.bf16.msra.mxu0 %v1371
        %1389 = vmatprep.subr.bf16.mxu0 0
        %1390 = vmatpush1.bf16.msra.mxu0 %v1372
        %1391 = vmatprep.subr.bf16.mxu0 0
        %1392 = vmatpush1.bf16.msra.mxu0 %v1373
        %1393 = vmatprep.subr.bf16.mxu0 0
        %1394 = vmatpush1.bf16.msra.mxu0 %v1374
        %1395 = vmatprep.subr.bf16.mxu0 0
        %1396 = vmatpush1.bf16.msra.mxu0 %v1375
        %1397 = vmatprep.subr.bf16.mxu0 0
        %1398 = vmatpush1.bf16.msra.mxu0 %v1376
        %1399 = vmatprep.subr.bf16.mxu0 0
        %1400 = vmatpush1.bf16.msra.mxu0 %v1377
        %1401 = vmatprep.subr.bf16.mxu0 0
        %1402 = vmatpush1.bf16.msra.mxu0 %v1378
        %1403 = vmatprep.subr.bf16.mxu0 0
        %1404 = vmatpush1.bf16.msra.mxu0 0
        %1405 = vmatprep.subr.bf16.mxu0 0
        %1406 = vmatpush1.bf16.msra.mxu0 0
        %1407 = vmatprep.subr.bf16.mxu0 0
        %1408 = vmatpush1.bf16.msra.mxu0 0
        %1409 = vmatprep.subr.bf16.mxu0 0
        %1410 = vmatpush1.bf16.msra.mxu0 0
        %1411 = vmatprep.subr.bf16.mxu0 0
        %1412 = vmatpush1.bf16.msra.mxu0 0
        %1413 = vmatprep.subr.bf16.mxu0 0
        %1414 = vmatpush1.bf16.msra.mxu0 0
        %1415 = vmatprep.subr.bf16.mxu0 0
        %1416 = vmatpush1.bf16.msra.mxu0 0
        %1417 = vmatprep.subr.bf16.mxu0 0
        %1418 = vmatpush1.bf16.msra.mxu0 0
        %1419 = vmatprep.mubr.bf16.mxu0 0
        %1420 = vmatmul.mubr.bf16.gmra.mrb[0].mxu0 %v1331
        %v1421 = vpop.f32.mrb[0].mxu0
        %v1422 = vadd.f32 0.0, %v1421
        %v1423 = vpop.f32.mrb[0].mxu0
        %v1424 = vpop.f32.mrb[0].mxu0
        %v1425 = vadd.f32 0.0, %v1424
        %v1426 = vpop.f32.mrb[0].mxu0
        %1427 = vmatprep.mubr.bf16.mxu0 0
        %1428 = vmatmul.mubr.bf16.gmra.mrb[0].mxu0 %v1332
        %v1429 = vpop.f32.mrb[0].mxu0
        %v1430 = vadd.f32 0.0, %v1429
        %v1431 = vpop.f32.mrb[0].mxu0
        %v1432 = vpop.f32.mrb[0].mxu0
        %v1433 = vadd.f32 0.0, %v1432
        %v1434 = vpop.f32.mrb[0].mxu0
        %1435 = vmatprep.mubr.bf16.mxu0 0
        %1436 = vmatmul.mubr.bf16.gmra.mrb[0].mxu0 %v1333
        %v1437 = vpop.f32.mrb[0].mxu0
        %v1438 = vadd.f32 0.0, %v1437
        %v1439 = vpop.f32.mrb[0].mxu0
        %v1440 = vpop.f32.mrb[0].mxu0
        %v1441 = vadd.f32 0.0, %v1440
        %v1442 = vpop.f32.mrb[0].mxu0
        %1443 = vmatprep.mubr.bf16.mxu0 0
        %1444 = vmatmul.mubr.bf16.gmra.mrb[0].mxu0 %v1334
        %v1445 = vpop.f32.mrb[0].mxu0
        %v1446 = vadd.f32 0.0, %v1445
        %v1447 = vpop.f32.mrb[0].mxu0
        %v1448 = vpop.f32.mrb[0].mxu0
        %v1449 = vadd.f32 0.0, %v1448
        %v1450 = vpop.f32.mrb[0].mxu0
        %1451 = vdwg.mxu0
        %v1452 = vunpack.c.l.b16 %v1064
        %v1453 = vunpack.c.l.b16 %v1078
        %v1454 = vunpack.c.l.b16 %v1092
        %v1455 = vunpack.c.l.b16 %v1106
        %v1456 = vunpack.c.l.b16 %v1120
        %v1457 = vunpack.c.l.b16 %v1134
        %v1458 = vunpack.c.l.b16 %v1148
        %v1459 = vunpack.c.l.b16 %v1162
        %v1460 = vpack.c.b16 %v1453, %v1452
        %v1461 = vpack.c.b16 %v1455, %v1454
        %v1462 = vpack.c.b16 %v1457, %v1456
        %v1463 = vpack.c.b16 %v1459, %v1458
        %v1484 = vunpack.c.l.b16 %v1163
        %v1485 = vunpack.c.l.b16 %v1164
        %v1486 = vunpack.c.l.b16 %v1165
        %v1487 = vunpack.c.l.b16 %v1166
        %v1488 = vunpack.c.l.b16 %v1167
        %v1489 = vunpack.c.l.b16 %v1168
        %v1490 = vunpack.c.l.b16 %v1169
        %v1491 = vunpack.c.l.b16 %v1170
        %v1492 = vunpack.c.l.b16 %v1171
        %v1493 = vunpack.c.l.b16 %v1172
        %v1494 = vunpack.c.l.b16 %v1173
        %v1495 = vunpack.c.l.b16 %v1174
        %v1496 = vunpack.c.l.b16 %v1175
        %v1497 = vunpack.c.l.b16 %v1176
        %v1498 = vunpack.c.l.b16 %v1177
        %v1499 = vunpack.c.l.b16 %v1178
        %v1500 = vpack.c.b16 %v1485, %v1484
        %v1501 = vpack.c.b16 %v1487, %v1486
        %v1502 = vpack.c.b16 %v1489, %v1488
        %v1503 = vpack.c.b16 %v1491, %v1490
        %v1504 = vpack.c.b16 %v1493, %v1492
        %v1505 = vpack.c.b16 %v1495, %v1494
        %v1506 = vpack.c.b16 %v1497, %v1496
        %v1507 = vpack.c.b16 %v1499, %v1498
        %1516 = vmatprep.subr.bf16.mxu0 0
        %1517 = vmatpush1.bf16.msra.mxu0 %v1500
        %1518 = vmatprep.subr.bf16.mxu0 0
        %1519 = vmatpush1.bf16.msra.mxu0 %v1501
        %1520 = vmatprep.subr.bf16.mxu0 0
        %1521 = vmatpush1.bf16.msra.mxu0 %v1502
        %1522 = vmatprep.subr.bf16.mxu0 0
        %1523 = vmatpush1.bf16.msra.mxu0 %v1503
        %1524 = vmatprep.subr.bf16.mxu0 0
        %1525 = vmatpush1.bf16.msra.mxu0 %v1504
        %1526 = vmatprep.subr.bf16.mxu0 0
        %1527 = vmatpush1.bf16.msra.mxu0 %v1505
        %1528 = vmatprep.subr.bf16.mxu0 0
        %1529 = vmatpush1.bf16.msra.mxu0 %v1506
        %1530 = vmatprep.subr.bf16.mxu0 0
        %1531 = vmatpush1.bf16.msra.mxu0 %v1507
        %1532 = vmatprep.subr.bf16.mxu0 0
        %1533 = vmatpush1.bf16.msra.mxu0 0
        %1534 = vmatprep.subr.bf16.mxu0 0
        %1535 = vmatpush1.bf16.msra.mxu0 0
        %1536 = vmatprep.subr.bf16.mxu0 0
        %1537 = vmatpush1.bf16.msra.mxu0 0
        %1538 = vmatprep.subr.bf16.mxu0 0
        %1539 = vmatpush1.bf16.msra.mxu0 0
        %1540 = vmatprep.subr.bf16.mxu0 0
        %1541 = vmatpush1.bf16.msra.mxu0 0
        %1542 = vmatprep.subr.bf16.mxu0 0
        %1543 = vmatpush1.bf16.msra.mxu0 0
        %1544 = vmatprep.subr.bf16.mxu0 0
        %1545 = vmatpush1.bf16.msra.mxu0 0
        %1546 = vmatprep.subr.bf16.mxu0 0
        %1547 = vmatpush1.bf16.msra.mxu0 0
        %1548 = vmatprep.mubr.bf16.mxu0 0
        %1549 = vmatmul.mubr.bf16.gmra.mrb[0].mxu0 %v1460
        %v1550 = vpop.f32.mrb[0].mxu0
        %v1551 = vadd.f32 %v1422, %v1550
        %v1552 = vpop.f32.mrb[0].mxu0
        %v1553 = vpop.f32.mrb[0].mxu0
        %v1554 = vadd.f32 %v1425, %v1553
        %v1555 = vpop.f32.mrb[0].mxu0
        %1556 = vmatprep.mubr.bf16.mxu0 0
        %1557 = vmatmul.mubr.bf16.gmra.mrb[0].mxu0 %v1461
        %v1558 = vpop.f32.mrb[0].mxu0
        %v1559 = vadd.f32 %v1430, %v1558
        %v1560 = vpop.f32.mrb[0].mxu0
        %v1561 = vpop.f32.mrb[0].mxu0
        %v1562 = vadd.f32 %v1433, %v1561
        %v1563 = vpop.f32.mrb[0].mxu0
        %1564 = vmatprep.mubr.bf16.mxu0 0
        %1565 = vmatmul.mubr.bf16.gmra.mrb[0].mxu0 %v1462
        %v1566 = vpop.f32.mrb[0].mxu0
        %v1567 = vadd.f32 %v1438, %v1566
        %v1568 = vpop.f32.mrb[0].mxu0
        %v1569 = vpop.f32.mrb[0].mxu0
        %v1570 = vadd.f32 %v1441, %v1569
        %v1571 = vpop.f32.mrb[0].mxu0
        %1572 = vmatprep.mubr.bf16.mxu0 0
        %1573 = vmatmul.mubr.bf16.gmra.mrb[0].mxu0 %v1463
        %v1574 = vpop.f32.mrb[0].mxu0
        %v1575 = vadd.f32 %v1446, %v1574
        %v1576 = vpop.f32.mrb[0].mxu0
        %v1577 = vpop.f32.mrb[0].mxu0
        %v1578 = vadd.f32 %v1449, %v1577
        %v1579 = vpop.f32.mrb[0].mxu0
        %1580 = vdwg.mxu0
        %v1581 = vld [vmem:[%s388] sm:$0xf]
        %v1582 = vld [vmem:[%s388 + $0x10] sm:$0x1]
        %v1583 = vld [vmem:[%s388 + $0x20] sm:$0xf]
        %v1584 = vld [vmem:[%s388 + $0x30] sm:$0x1]
        %v1585 = vld [vmem:[%s388 + $0x40] sm:$0xf]
        %v1586 = vld [vmem:[%s388 + $0x50] sm:$0x1]
        %v1587 = vld [vmem:[%s388 + $0x60] sm:$0xf]
        %v1588 = vld [vmem:[%s388 + $0x70] sm:$0x1]
        %v1589 = vld [vmem:[%s388 + $0x80] sm:$0xf]
        %v1590 = vld [vmem:[%s388 + $0x90] sm:$0x1]
        %v1591 = vld [vmem:[%s388 + $0xa0] sm:$0xf]
        %v1592 = vld [vmem:[%s388 + $0xb0] sm:$0x1]
        %v1593 = vld [vmem:[%s388 + $0xc0] sm:$0xf]
        %v1594 = vld [vmem:[%s388 + $0xd0] sm:$0x1]
        %v1595 = vld [vmem:[%s388 + $0xe0] sm:$0xf]
        %v1596 = vld [vmem:[%s388 + $0xf0] sm:$0x1]
        %v1598 = vshrl.u32 %v1581, 16
        %v1600 = vrot.slane %v1598, 4
        %v1601 = vshll.u32 %v1581, 16
        %v1603 = vrot.slane %v1601, 5
        %v1604 = vor.u32 %v1600, %v1603
        %v1605 = vrot.slane %v1604, 4
        %v1607 = vshll.u32 %v1582, 16
        %v1609 = vrot.slane %v1607, 5
        %v1610 = vsel %vm1050, %v1605, %v1609
        %v1612 = vshrl.u32 %v1583, 16
        %v1614 = vrot.slane %v1612, 4
        %v1615 = vshll.u32 %v1583, 16
        %v1617 = vrot.slane %v1615, 5
        %v1618 = vor.u32 %v1614, %v1617
        %v1619 = vrot.slane %v1618, 4
        %v1621 = vshll.u32 %v1584, 16
        %v1623 = vrot.slane %v1621, 5
        %v1624 = vsel %vm1050, %v1619, %v1623
        %v1626 = vshrl.u32 %v1585, 16
        %v1628 = vrot.slane %v1626, 4
        %v1629 = vshll.u32 %v1585, 16
        %v1631 = vrot.slane %v1629, 5
        %v1632 = vor.u32 %v1628, %v1631
        %v1633 = vrot.slane %v1632, 4
        %v1635 = vshll.u32 %v1586, 16
        %v1637 = vrot.slane %v1635, 5
        %v1638 = vsel %vm1050, %v1633, %v1637
        %v1640 = vshrl.u32 %v1587, 16
        %v1642 = vrot.slane %v1640, 4
        %v1643 = vshll.u32 %v1587, 16
        %v1645 = vrot.slane %v1643, 5
        %v1646 = vor.u32 %v1642, %v1645
        %v1647 = vrot.slane %v1646, 4
        %v1649 = vshll.u32 %v1588, 16
        %v1651 = vrot.slane %v1649, 5
        %v1652 = vsel %vm1050, %v1647, %v1651
        %v1654 = vshrl.u32 %v1589, 16
        %v1656 = vrot.slane %v1654, 4
        %v1657 = vshll.u32 %v1589, 16
        %v1659 = vrot.slane %v1657, 5
        %v1660 = vor.u32 %v1656, %v1659
        %v1661 = vrot.slane %v1660, 4
        %v1663 = vshll.u32 %v1590, 16
        %v1665 = vrot.slane %v1663, 5
        %v1666 = vsel %vm1050, %v1661, %v1665
        %v1668 = vshrl.u32 %v1591, 16
        %v1670 = vrot.slane %v1668, 4
        %v1671 = vshll.u32 %v1591, 16
        %v1673 = vrot.slane %v1671, 5
        %v1674 = vor.u32 %v1670, %v1673
        %v1675 = vrot.slane %v1674, 4
        %v1677 = vshll.u32 %v1592, 16
        %v1679 = vrot.slane %v1677, 5
        %v1680 = vsel %vm1050, %v1675, %v1679
        %v1682 = vshrl.u32 %v1593, 16
        %v1684 = vrot.slane %v1682, 4
        %v1685 = vshll.u32 %v1593, 16
        %v1687 = vrot.slane %v1685, 5
        %v1688 = vor.u32 %v1684, %v1687
        %v1689 = vrot.slane %v1688, 4
        %v1691 = vshll.u32 %v1594, 16
        %v1693 = vrot.slane %v1691, 5
        %v1694 = vsel %vm1050, %v1689, %v1693
        %v1696 = vshrl.u32 %v1595, 16
        %v1698 = vrot.slane %v1696, 4
        %v1699 = vshll.u32 %v1595, 16
        %v1701 = vrot.slane %v1699, 5
        %v1702 = vor.u32 %v1698, %v1701
        %v1703 = vrot.slane %v1702, 4
        %v1705 = vshll.u32 %v1596, 16
        %v1707 = vrot.slane %v1705, 5
        %v1708 = vsel %vm1050, %v1703, %v1707
        %v1709 = vld [vmem:[%s1 + $0x200] sm:$0xf]
        %v1710 = vld [vmem:[%s1 + $0x204] sm:$0xf]
        %v1711 = vld [vmem:[%s1 + $0x208] sm:$0xf]
        %v1712 = vld [vmem:[%s1 + $0x20c] sm:$0xf]
        %v1713 = vld [vmem:[%s1 + $0x210] sm:$0xf]
        %v1714 = vld [vmem:[%s1 + $0x214] sm:$0xf]
        %v1715 = vld [vmem:[%s1 + $0x218] sm:$0xf]
        %v1716 = vld [vmem:[%s1 + $0x21c] sm:$0xf]
        %v1717 = vld [vmem:[%s1 + $0x220] sm:$0xf]
        %v1718 = vld [vmem:[%s1 + $0x224] sm:$0xf]
        %v1719 = vld [vmem:[%s1 + $0x228] sm:$0xf]
        %v1720 = vld [vmem:[%s1 + $0x22c] sm:$0xf]
        %v1721 = vld [vmem:[%s1 + $0x230] sm:$0xf]
        %v1722 = vld [vmem:[%s1 + $0x234] sm:$0xf]
        %v1723 = vld [vmem:[%s1 + $0x238] sm:$0xf]
        %v1724 = vld [vmem:[%s1 + $0x23c] sm:$0xf]
        %v1725 = vunpack.c.l.b16 %v1610
        %v1726 = vunpack.c.l.b16 %v1624
        %v1727 = vunpack.c.l.b16 %v1638
        %v1728 = vunpack.c.l.b16 %v1652
        %v1729 = vunpack.c.l.b16 %v1666
        %v1730 = vunpack.c.l.b16 %v1680
        %v1731 = vunpack.c.l.b16 %v1694
        %v1732 = vunpack.c.l.b16 %v1708
        %v1733 = vpack.c.b16 %v1726, %v1725
        %v1734 = vpack.c.b16 %v1728, %v1727
        %v1735 = vpack.c.b16 %v1730, %v1729
        %v1736 = vpack.c.b16 %v1732, %v1731
        %v1757 = vunpack.c.l.b16 %v1709
        %v1758 = vunpack.c.l.b16 %v1710
        %v1759 = vunpack.c.l.b16 %v1711
        %v1760 = vunpack.c.l.b16 %v1712
        %v1761 = vunpack.c.l.b16 %v1713
        %v1762 = vunpack.c.l.b16 %v1714
        %v1763 = vunpack.c.l.b16 %v1715
        %v1764 = vunpack.c.l.b16 %v1716
        %v1765 = vunpack.c.l.b16 %v1717
        %v1766 = vunpack.c.l.b16 %v1718
        %v1767 = vunpack.c.l.b16 %v1719
        %v1768 = vunpack.c.l.b16 %v1720
        %v1769 = vunpack.c.l.b16 %v1721
        %v1770 = vunpack.c.l.b16 %v1722
        %v1771 = vunpack.c.l.b16 %v1723
        %v1772 = vunpack.c.l.b16 %v1724
        %v1773 = vpack.c.b16 %v1758, %v1757
        %v1774 = vpack.c.b16 %v1760, %v1759
        %v1775 = vpack.c.b16 %v1762, %v1761
        %v1776 = vpack.c.b16 %v1764, %v1763
        %v1777 = vpack.c.b16 %v1766, %v1765
        %v1778 = vpack.c.b16 %v1768, %v1767
        %v1779 = vpack.c.b16 %v1770, %v1769
        %v1780 = vpack.c.b16 %v1772, %v1771
        %1789 = vmatprep.subr.bf16.mxu0 0
        %1790 = vmatpush1.bf16.msra.mxu0 %v1773
        %1791 = vmatprep.subr.bf16.mxu0 0
        %1792 = vmatpush1.bf16.msra.mxu0 %v1774
        %1793 = vmatprep.subr.bf16.mxu0 0
        %1794 = vmatpush1.bf16.msra.mxu0 %v1775
        %1795 = vmatprep.subr.bf16.mxu0 0
        %1796 = vmatpush1.bf16.msra.mxu0 %v1776
        %1797 = vmatprep.subr.bf16.mxu0 0
        %1798 = vmatpush1.bf16.msra.mxu0 %v1777
        %1799 = vmatprep.subr.bf16.mxu0 0
        %1800 = vmatpush1.bf16.msra.mxu0 %v1778
        %1801 = vmatprep.subr.bf16.mxu0 0
        %1802 = vmatpush1.bf16.msra.mxu0 %v1779
        %1803 = vmatprep.subr.bf16.mxu0 0
        %1804 = vmatpush1.bf16.msra.mxu0 %v1780
        %1805 = vmatprep.subr.bf16.mxu0 0
        %1806 = vmatpush1.bf16.msra.mxu0 0
        %1807 = vmatprep.subr.bf16.mxu0 0
        %1808 = vmatpush1.bf16.msra.mxu0 0
        %1809 = vmatprep.subr.bf16.mxu0 0
        %1810 = vmatpush1.bf16.msra.mxu0 0
        %1811 = vmatprep.subr.bf16.mxu0 0
        %1812 = vmatpush1.bf16.msra.mxu0 0
        %1813 = vmatprep.subr.bf16.mxu0 0
        %1814 = vmatpush1.bf16.msra.mxu0 0
        %1815 = vmatprep.subr.bf16.mxu0 0
        %1816 = vmatpush1.bf16.msra.mxu0 0
        %1817 = vmatprep.subr.bf16.mxu0 0
        %1818 = vmatpush1.bf16.msra.mxu0 0
        %1819 = vmatprep.subr.bf16.mxu0 0
        %1820 = vmatpush1.bf16.msra.mxu0 0
        %1821 = vmatprep.mubr.bf16.mxu0 0
        %1822 = vmatmul.mubr.bf16.gmra.mrb[0].mxu0 %v1733
        %v1823 = vpop.f32.mrb[0].mxu0
        %v1824 = vadd.f32 0.0, %v1823
        %v1825 = vpop.f32.mrb[0].mxu0
        %v1826 = vpop.f32.mrb[0].mxu0
        %v1827 = vadd.f32 0.0, %v1826
        %v1828 = vpop.f32.mrb[0].mxu0
        %1829 = vmatprep.mubr.bf16.mxu0 0
        %1830 = vmatmul.mubr.bf16.gmra.mrb[0].mxu0 %v1734
        %v1831 = vpop.f32.mrb[0].mxu0
        %v1832 = vadd.f32 0.0, %v1831
        %v1833 = vpop.f32.mrb[0].mxu0
        %v1834 = vpop.f32.mrb[0].mxu0
        %v1835 = vadd.f32 0.0, %v1834
        %v1836 = vpop.f32.mrb[0].mxu0
        %1837 = vmatprep.mubr.bf16.mxu0 0
        %1838 = vmatmul.mubr.bf16.gmra.mrb[0].mxu0 %v1735
        %v1839 = vpop.f32.mrb[0].mxu0
        %v1840 = vadd.f32 0.0, %v1839
        %v1841 = vpop.f32.mrb[0].mxu0
        %v1842 = vpop.f32.mrb[0].mxu0
        %v1843 = vadd.f32 0.0, %v1842
        %v1844 = vpop.f32.mrb[0].mxu0
        %1845 = vmatprep.mubr.bf16.mxu0 0
        %1846 = vmatmul.mubr.bf16.gmra.mrb[0].mxu0 %v1736
        %v1847 = vpop.f32.mrb[0].mxu0
        %v1848 = vadd.f32 0.0, %v1847
        %v1849 = vpop.f32.mrb[0].mxu0
        %v1850 = vpop.f32.mrb[0].mxu0
        %v1851 = vadd.f32 0.0, %v1850
        %v1852 = vpop.f32.mrb[0].mxu0
        %1853 = vdwg.mxu0
        %v1854 = vadd.f32 %v1551, %v1824
        %v1855 = vadd.f32 %v1554, %v1827
        %v1856 = vadd.f32 %v1559, %v1832
        %v1857 = vadd.f32 %v1562, %v1835
        %v1858 = vadd.f32 %v1567, %v1840
        %v1859 = vadd.f32 %v1570, %v1843
        %v1860 = vadd.f32 %v1575, %v1848
        %v1861 = vadd.f32 %v1578, %v1851
        %v1862 = vadd.f32 %v1002, %v1854
        %v1863 = vadd.f32 %v1005, %v1855
        %v1864 = vadd.f32 %v1010, %v1856
        %v1865 = vadd.f32 %v1013, %v1857
        %v1866 = vadd.f32 %v1018, %v1858
        %v1867 = vadd.f32 %v1021, %v1859
        %v1868 = vadd.f32 %v1026, %v1860
        %v1869 = vadd.f32 %v1029, %v1861
        %v1870 = vld [vmem:[%s2] sm:$0x1]
        %v1872 = vlaneseq
        %v1873 = vshrl.u32 %v1872, 7
        %v1874 = vsub.s32 0, %v1873
        %v1875 = vrot.slane %v1870, %v1874
        %v1877 = vadd.f32 %v1862, %v1875
        %v1878 = vadd.f32 %v1863, %v1875
        %v1879 = vadd.f32 %v1864, %v1875
        %v1880 = vadd.f32 %v1865, %v1875
        %v1881 = vadd.f32 %v1866, %v1875
        %v1882 = vadd.f32 %v1867, %v1875
        %v1883 = vadd.f32 %v1868, %v1875
        %v1884 = vadd.f32 %v1869, %v1875
        %v1885 = vmax.f32 %v1877, 0.0
        %v1886 = vmax.f32 %v1878, 0.0
        %v1887 = vmax.f32 %v1879, 0.0
        %v1888 = vmax.f32 %v1880, 0.0
        %v1889 = vmax.f32 %v1881, 0.0
        %v1890 = vmax.f32 %v1882, 0.0
        %v1891 = vmax.f32 %v1883, 0.0
        %v1892 = vmax.f32 %v1884, 0.0
        %1893 = vst [vmem:[#allocation2] sm:$0xf] 0
        %1894 = vst [vmem:[#allocation2 + $0x4] sm:$0x1] 0
        %s1895 = scalar_lea.vmem [#allocation2], 72
        %1896 = vst [vmem:[%s1895] sm:$0xf] 0
        %1897 = vst [vmem:[%s1895 + $0x4] sm:$0x1] 0
        %vm1898 = vcmask 1040384
        %vm1899 = vsmask.f32 256
        %vm1900 = vmand %vm1898, %vm1899
        %v1901 = vld [vmem:[#allocation2] sm:$0x1]
        %v1902 = vsel %vm1900, 0, %v1901
        %1903 = vst [vmem:[#allocation2] sm:$0x1] %v1902
        %v1904 = vld [vmem:[#allocation2 + $0x8] sm:$0x1]
        %v1905 = vsel %vm1900, 0, %v1904
        %1906 = vst [vmem:[#allocation2 + $0x8] sm:$0x1] %v1905
        %v1907 = vld [vmem:[#allocation2 + $0x10] sm:$0x1]
        %v1908 = vsel %vm1900, 0, %v1907
        %1909 = vst [vmem:[#allocation2 + $0x10] sm:$0x1] %v1908
        %v1910 = vld [vmem:[#allocation2 + $0x18] sm:$0x1]
        %v1911 = vsel %vm1900, 0, %v1910
        %1912 = vst [vmem:[#allocation2 + $0x18] sm:$0x1] %v1911
        %v1913 = vld [vmem:[#allocation2 + $0x20] sm:$0x1]
        %v1914 = vsel %vm1900, 0, %v1913
        %1915 = vst [vmem:[#allocation2 + $0x20] sm:$0x1] %v1914
        %v1916 = vld [vmem:[#allocation2 + $0x28] sm:$0x1]
        %v1917 = vsel %vm1900, 0, %v1916
        %1918 = vst [vmem:[#allocation2 + $0x28] sm:$0x1] %v1917
        %v1919 = vld [vmem:[#allocation2 + $0x30] sm:$0x1]
        %v1920 = vsel %vm1900, 0, %v1919
        %1921 = vst [vmem:[#allocation2 + $0x30] sm:$0x1] %v1920
        %v1922 = vld [vmem:[#allocation2 + $0x38] sm:$0x1]
        %v1923 = vsel %vm1900, 0, %v1922
        %1924 = vst [vmem:[#allocation2 + $0x38] sm:$0x1] %v1923
        %v1925 = vld [vmem:[#allocation2 + $0x40] sm:$0x1]
        %v1926 = vsel %vm1900, 0, %v1925
        %1927 = vst [vmem:[#allocation2 + $0x40] sm:$0x1] %v1926
        %v1928 = vld [vmem:[#allocation2 + $0x48] sm:$0x1]
        %v1929 = vsel %vm1900, 0, %v1928
        %1930 = vst [vmem:[#allocation2 + $0x48] sm:$0x1] %v1929
        %vm1931 = vsmask.f32 7938
        %vm1932 = vmand %vm1898, %vm1931
        %v1933 = vld [vmem:[#allocation2 + $0x4] sm:$0x1]
        %v1934 = vsel %vm1932, 0, %v1933
        %1935 = vst [vmem:[#allocation2 + $0x4] sm:$0x1] %v1934
        %v1936 = vld [vmem:[#allocation2 + $0xc] sm:$0x1]
        %v1937 = vsel %vm1932, 0, %v1936
        %1938 = vst [vmem:[#allocation2 + $0xc] sm:$0x1] %v1937
        %v1939 = vld [vmem:[#allocation2 + $0x14] sm:$0x1]
        %v1940 = vsel %vm1932, 0, %v1939
        %1941 = vst [vmem:[#allocation2 + $0x14] sm:$0x1] %v1940
        %v1942 = vld [vmem:[#allocation2 + $0x1c] sm:$0x1]
        %v1943 = vsel %vm1932, 0, %v1942
        %1944 = vst [vmem:[#allocation2 + $0x1c] sm:$0x1] %v1943
        %v1945 = vld [vmem:[#allocation2 + $0x24] sm:$0x1]
        %v1946 = vsel %vm1932, 0, %v1945
        %1947 = vst [vmem:[#allocation2 + $0x24] sm:$0x1] %v1946
        %v1948 = vld [vmem:[#allocation2 + $0x2c] sm:$0x1]
        %v1949 = vsel %vm1932, 0, %v1948
        %1950 = vst [vmem:[#allocation2 + $0x2c] sm:$0x1] %v1949
        %v1951 = vld [vmem:[#allocation2 + $0x34] sm:$0x1]
        %v1952 = vsel %vm1932, 0, %v1951
        %1953 = vst [vmem:[#allocation2 + $0x34] sm:$0x1] %v1952
        %v1954 = vld [vmem:[#allocation2 + $0x3c] sm:$0x1]
        %v1955 = vsel %vm1932, 0, %v1954
        %1956 = vst [vmem:[#allocation2 + $0x3c] sm:$0x1] %v1955
        %v1957 = vld [vmem:[#allocation2 + $0x44] sm:$0x1]
        %v1958 = vsel %vm1932, 0, %v1957
        %1959 = vst [vmem:[#allocation2 + $0x44] sm:$0x1] %v1958
        %v1960 = vld [vmem:[#allocation2 + $0x4c] sm:$0x1]
        %v1961 = vsel %vm1932, 0, %v1960
        %1962 = vst [vmem:[#allocation2 + $0x4c] sm:$0x1] %v1961
        %v1963 = vpack.c.bf16 %v1886, %v1885
        %v1964 = vpack.c.bf16 %v1888, %v1887
        %v1965 = vpack.c.bf16 %v1890, %v1889
        %v1966 = vpack.c.bf16 %v1892, %v1891
        %v1971 = vunpack.c.l.b16 %v1963
        %v1972 = vunpack.c.h.b16 %v1963
        %v1973 = vunpack.c.l.b16 %v1964
        %v1974 = vunpack.c.h.b16 %v1964
        %v1975 = vunpack.c.l.b16 %v1965
        %v1976 = vunpack.c.h.b16 %v1965
        %v1977 = vunpack.c.l.b16 %v1966
        %v1978 = vunpack.c.h.b16 %v1966
        %v1979 = vpack.c.b16 %v1971, %v1971
        %v1980 = vpack.c.b16 %v1972, %v1972
        %v1981 = vpack.c.b16 %v1973, %v1973
        %v1982 = vpack.c.b16 %v1974, %v1974
        %v1983 = vpack.c.b16 %v1975, %v1975
        %v1984 = vpack.c.b16 %v1976, %v1976
        %v1985 = vpack.c.b16 %v1977, %v1977
        %v1986 = vpack.c.b16 %v1978, %v1978
        %v1988 = vshrl.u32 %v1979, 16
        %v1990 = vrot.slane %v1988, 7
        %v1991 = vshll.u32 %v1979, 16
        %v1993 = vor.u32 %v1990, %v1991
        %v1994 = vrot.slane %v1990, 4
        %v1996 = vshrl.u32 %v1980, 16
        %v1998 = vrot.slane %v1996, 7
        %v1999 = vshll.u32 %v1980, 16
        %v2001 = vor.u32 %v1998, %v1999
        %v2002 = vrot.slane %v1998, 4
        %v2004 = vshrl.u32 %v1981, 16
        %v2006 = vrot.slane %v2004, 7
        %v2007 = vshll.u32 %v1981, 16
        %v2009 = vor.u32 %v2006, %v2007
        %v2010 = vrot.slane %v2006, 4
        %v2012 = vshrl.u32 %v1982, 16
        %v2014 = vrot.slane %v2012, 7
        %v2015 = vshll.u32 %v1982, 16
        %v2017 = vor.u32 %v2014, %v2015
        %v2018 = vrot.slane %v2014, 4
        %v2020 = vshrl.u32 %v1983, 16
        %v2022 = vrot.slane %v2020, 7
        %v2023 = vshll.u32 %v1983, 16
        %v2025 = vor.u32 %v2022, %v2023
        %v2026 = vrot.slane %v2022, 4
        %v2028 = vshrl.u32 %v1984, 16
        %v2030 = vrot.slane %v2028, 7
        %v2031 = vshll.u32 %v1984, 16
        %v2033 = vor.u32 %v2030, %v2031
        %v2034 = vrot.slane %v2030, 4
        %v2036 = vshrl.u32 %v1985, 16
        %v2038 = vrot.slane %v2036, 7
        %v2039 = vshll.u32 %v1985, 16
        %v2041 = vor.u32 %v2038, %v2039
        %v2042 = vrot.slane %v2038, 4
        %v2044 = vshrl.u32 %v1986, 16
        %v2046 = vrot.slane %v2044, 7
        %v2047 = vshll.u32 %v1986, 16
        %v2049 = vor.u32 %v2046, %v2047
        %v2050 = vrot.slane %v2046, 4
        %s2067 = scalar_lea.vmem [#allocation2], 8
        %vm2068 = vcmask 1043456
        %vm2069 = vmand %vm2068, %vm1931
        %v2070 = vld [vmem:[%s2067] sm:$0xf]
        %v2071 = vsel %vm2069, %v1993, %v2070
        %2072 = vst [vmem:[%s2067] sm:$0xf] %v2071
        %v2073 = vld [vmem:[%s2067 + $0x4] sm:$0x1]
        %v2074 = vsel %vm1900, %v1994, %v2073
        %2075 = vst [vmem:[%s2067 + $0x4] sm:$0x1] %v2074
        %v2076 = vld [vmem:[%s2067 + $0x8] sm:$0xf]
        %v2077 = vsel %vm2069, %v2001, %v2076
        %2078 = vst [vmem:[%s2067 + $0x8] sm:$0xf] %v2077
        %v2079 = vld [vmem:[%s2067 + $0xc] sm:$0x1]
        %v2080 = vsel %vm1900, %v2002, %v2079
        %2081 = vst [vmem:[%s2067 + $0xc] sm:$0x1] %v2080
        %v2082 = vld [vmem:[%s2067 + $0x10] sm:$0xf]
        %v2083 = vsel %vm2069, %v2009, %v2082
        %2084 = vst [vmem:[%s2067 + $0x10] sm:$0xf] %v2083
        %v2085 = vld [vmem:[%s2067 + $0x14] sm:$0x1]
        %v2086 = vsel %vm1900, %v2010, %v2085
        %2087 = vst [vmem:[%s2067 + $0x14] sm:$0x1] %v2086
        %v2088 = vld [vmem:[%s2067 + $0x18] sm:$0xf]
        %v2089 = vsel %vm2069, %v2017, %v2088
        %2090 = vst [vmem:[%s2067 + $0x18] sm:$0xf] %v2089
        %v2091 = vld [vmem:[%s2067 + $0x1c] sm:$0x1]
        %v2092 = vsel %vm1900, %v2018, %v2091
        %2093 = vst [vmem:[%s2067 + $0x1c] sm:$0x1] %v2092
        %v2094 = vld [vmem:[%s2067 + $0x20] sm:$0xf]
        %v2095 = vsel %vm2069, %v2025, %v2094
        %2096 = vst [vmem:[%s2067 + $0x20] sm:$0xf] %v2095
        %v2097 = vld [vmem:[%s2067 + $0x24] sm:$0x1]
        %v2098 = vsel %vm1900, %v2026, %v2097
        %2099 = vst [vmem:[%s2067 + $0x24] sm:$0x1] %v2098
        %v2100 = vld [vmem:[%s2067 + $0x28] sm:$0xf]
        %v2101 = vsel %vm2069, %v2033, %v2100
        %2102 = vst [vmem:[%s2067 + $0x28] sm:$0xf] %v2101
        %v2103 = vld [vmem:[%s2067 + $0x2c] sm:$0x1]
        %v2104 = vsel %vm1900, %v2034, %v2103
        %2105 = vst [vmem:[%s2067 + $0x2c] sm:$0x1] %v2104
        %v2106 = vld [vmem:[%s2067 + $0x30] sm:$0xf]
        %v2107 = vsel %vm2069, %v2041, %v2106
        %2108 = vst [vmem:[%s2067 + $0x30] sm:$0xf] %v2107
        %v2109 = vld [vmem:[%s2067 + $0x34] sm:$0x1]
        %v2110 = vsel %vm1900, %v2042, %v2109
        %2111 = vst [vmem:[%s2067 + $0x34] sm:$0x1] %v2110
        %v2112 = vld [vmem:[%s2067 + $0x38] sm:$0xf]
        %v2113 = vsel %vm2069, %v2049, %v2112
        %2114 = vst [vmem:[%s2067 + $0x38] sm:$0xf] %v2113
        %v2115 = vld [vmem:[%s2067 + $0x3c] sm:$0x1]
        %v2116 = vsel %vm1900, %v2050, %v2115
        %2117 = vst [vmem:[%s2067 + $0x3c] sm:$0x1] %v2116
        %v2118 = vld [vmem:[#allocation2] sm:$0xf]
        %v2119 = vld [vmem:[#allocation2 + $0x8] sm:$0xf]
        %v2120 = vld [vmem:[#allocation2 + $0x10] sm:$0xf]
        %v2121 = vld [vmem:[#allocation2 + $0x18] sm:$0xf]
        %v2122 = vld [vmem:[#allocation2 + $0x20] sm:$0xf]
        %v2123 = vld [vmem:[#allocation2 + $0x28] sm:$0xf]
        %v2124 = vld [vmem:[#allocation2 + $0x30] sm:$0xf]
        %v2125 = vld [vmem:[#allocation2 + $0x38] sm:$0xf]
        %v2126 = vld [vmem:[#allocation4] sm:$0xf]
        %v2127 = vld [vmem:[#allocation4 + $0x4] sm:$0xf]
        %v2128 = vld [vmem:[#allocation4 + $0x8] sm:$0xf]
        %v2129 = vld [vmem:[#allocation4 + $0xc] sm:$0xf]
        %v2130 = vld [vmem:[#allocation4 + $0x10] sm:$0xf]
        %v2131 = vld [vmem:[#allocation4 + $0x14] sm:$0xf]
        %v2132 = vld [vmem:[#allocation4 + $0x18] sm:$0xf]
        %v2133 = vld [vmem:[#allocation4 + $0x1c] sm:$0xf]
        %v2134 = vld [vmem:[#allocation4 + $0x20] sm:$0xf]
        %v2135 = vld [vmem:[#allocation4 + $0x24] sm:$0xf]
        %v2136 = vld [vmem:[#allocation4 + $0x28] sm:$0xf]
        %v2137 = vld [vmem:[#allocation4 + $0x2c] sm:$0xf]
        %v2138 = vld [vmem:[#allocation4 + $0x30] sm:$0xf]
        %v2139 = vld [vmem:[#allocation4 + $0x34] sm:$0xf]
        %v2140 = vld [vmem:[#allocation4 + $0x38] sm:$0xf]
        %v2141 = vld [vmem:[#allocation4 + $0x3c] sm:$0xf]
        %v2142 = vld [vmem:[#allocation2 + $0x4] sm:$0x1]
        %v2143 = vld [vmem:[#allocation2 + $0xc] sm:$0x1]
        %v2144 = vld [vmem:[#allocation2 + $0x14] sm:$0x1]
        %v2145 = vld [vmem:[#allocation2 + $0x1c] sm:$0x1]
        %v2146 = vld [vmem:[#allocation2 + $0x24] sm:$0x1]
        %v2147 = vld [vmem:[#allocation2 + $0x2c] sm:$0x1]
        %v2148 = vld [vmem:[#allocation2 + $0x34] sm:$0x1]
        %v2149 = vld [vmem:[#allocation2 + $0x3c] sm:$0x1]
        %v2151 = vshrl.u32 %v2118, 16
        %v2153 = vrot.slane %v2151, 4
        %v2154 = vshll.u32 %v2118, 16
        %v2156 = vrot.slane %v2154, 5
        %v2157 = vor.u32 %v2153, %v2156
        %v2158 = vrot.slane %v2157, 4
        %v2160 = vshll.u32 %v2142, 16
        %v2162 = vrot.slane %v2160, 5
        %v2163 = vsel %vm1050, %v2158, %v2162
        %v2165 = vshrl.u32 %v2119, 16
        %v2167 = vrot.slane %v2165, 4
        %v2168 = vshll.u32 %v2119, 16
        %v2170 = vrot.slane %v2168, 5
        %v2171 = vor.u32 %v2167, %v2170
        %v2172 = vrot.slane %v2171, 4
        %v2174 = vshll.u32 %v2143, 16
        %v2176 = vrot.slane %v2174, 5
        %v2177 = vsel %vm1050, %v2172, %v2176
        %v2179 = vshrl.u32 %v2120, 16
        %v2181 = vrot.slane %v2179, 4
        %v2182 = vshll.u32 %v2120, 16
        %v2184 = vrot.slane %v2182, 5
        %v2185 = vor.u32 %v2181, %v2184
        %v2186 = vrot.slane %v2185, 4
        %v2188 = vshll.u32 %v2144, 16
        %v2190 = vrot.slane %v2188, 5
        %v2191 = vsel %vm1050, %v2186, %v2190
        %v2193 = vshrl.u32 %v2121, 16
        %v2195 = vrot.slane %v2193, 4
        %v2196 = vshll.u32 %v2121, 16
        %v2198 = vrot.slane %v2196, 5
        %v2199 = vor.u32 %v2195, %v2198
        %v2200 = vrot.slane %v2199, 4
        %v2202 = vshll.u32 %v2145, 16
        %v2204 = vrot.slane %v2202, 5
        %v2205 = vsel %vm1050, %v2200, %v2204
        %v2207 = vshrl.u32 %v2122, 16
        %v2209 = vrot.slane %v2207, 4
        %v2210 = vshll.u32 %v2122, 16
        %v2212 = vrot.slane %v2210, 5
        %v2213 = vor.u32 %v2209, %v2212
        %v2214 = vrot.slane %v2213, 4
        %v2216 = vshll.u32 %v2146, 16
        %v2218 = vrot.slane %v2216, 5
        %v2219 = vsel %vm1050, %v2214, %v2218
        %v2221 = vshrl.u32 %v2123, 16
        %v2223 = vrot.slane %v2221, 4
        %v2224 = vshll.u32 %v2123, 16
        %v2226 = vrot.slane %v2224, 5
        %v2227 = vor.u32 %v2223, %v2226
        %v2228 = vrot.slane %v2227, 4
        %v2230 = vshll.u32 %v2147, 16
        %v2232 = vrot.slane %v2230, 5
        %v2233 = vsel %vm1050, %v2228, %v2232
        %v2235 = vshrl.u32 %v2124, 16
        %v2237 = vrot.slane %v2235, 4
        %v2238 = vshll.u32 %v2124, 16
        %v2240 = vrot.slane %v2238, 5
        %v2241 = vor.u32 %v2237, %v2240
        %v2242 = vrot.slane %v2241, 4
        %v2244 = vshll.u32 %v2148, 16
        %v2246 = vrot.slane %v2244, 5
        %v2247 = vsel %vm1050, %v2242, %v2246
        %v2249 = vshrl.u32 %v2125, 16
        %v2251 = vrot.slane %v2249, 4
        %v2252 = vshll.u32 %v2125, 16
        %v2254 = vrot.slane %v2252, 5
        %v2255 = vor.u32 %v2251, %v2254
        %v2256 = vrot.slane %v2255, 4
        %v2258 = vshll.u32 %v2149, 16
        %v2260 = vrot.slane %v2258, 5
        %v2261 = vsel %vm1050, %v2256, %v2260
        %s2262 = scalar_lea.vmem [#allocation4], 64
        %v2263 = vld [vmem:[%s2262] sm:$0xf]
        %v2264 = vld [vmem:[%s2262 + $0x4] sm:$0xf]
        %v2265 = vld [vmem:[%s2262 + $0x8] sm:$0xf]
        %v2266 = vld [vmem:[%s2262 + $0xc] sm:$0xf]
        %v2267 = vld [vmem:[%s2262 + $0x10] sm:$0xf]
        %v2268 = vld [vmem:[%s2262 + $0x14] sm:$0xf]
        %v2269 = vld [vmem:[%s2262 + $0x18] sm:$0xf]
        %v2270 = vld [vmem:[%s2262 + $0x1c] sm:$0xf]
        %v2271 = vld [vmem:[%s2262 + $0x20] sm:$0xf]
        %v2272 = vld [vmem:[%s2262 + $0x24] sm:$0xf]
        %v2273 = vld [vmem:[%s2262 + $0x28] sm:$0xf]
        %v2274 = vld [vmem:[%s2262 + $0x2c] sm:$0xf]
        %v2275 = vld [vmem:[%s2262 + $0x30] sm:$0xf]
        %v2276 = vld [vmem:[%s2262 + $0x34] sm:$0xf]
        %v2277 = vld [vmem:[%s2262 + $0x38] sm:$0xf]
        %v2278 = vld [vmem:[%s2262 + $0x3c] sm:$0xf]
        %v2279 = vld [vmem:[#allocation2] sm:$0xe]
        %v2280 = vld [vmem:[#allocation2 + $0x8] sm:$0xe]
        %v2281 = vld [vmem:[#allocation2 + $0x10] sm:$0xe]
        %v2282 = vld [vmem:[#allocation2 + $0x18] sm:$0xe]
        %v2283 = vld [vmem:[#allocation2 + $0x20] sm:$0xe]
        %v2284 = vld [vmem:[#allocation2 + $0x28] sm:$0xe]
        %v2285 = vld [vmem:[#allocation2 + $0x30] sm:$0xe]
        %v2286 = vld [vmem:[#allocation2 + $0x38] sm:$0xe]
        %vm2303 = vcmask 1042432
        %vm2304 = vcmask 1046532
        %vm2305 = vmor %vm2303, %vm2304
        %v2306 = vrot.slane %v2279, 5
        %v2307 = vrot.slane %v2306, 4
        %v2308 = vrot.slane %v2142, 5
        %v2309 = vsel %vm2305, %v2307, %v2308
        %v2310 = vrot.slane %v2280, 5
        %v2311 = vrot.slane %v2310, 4
        %v2312 = vrot.slane %v2143, 5
        %v2313 = vsel %vm2305, %v2311, %v2312
        %v2314 = vrot.slane %v2281, 5
        %v2315 = vrot.slane %v2314, 4
        %v2316 = vrot.slane %v2144, 5
        %v2317 = vsel %vm2305, %v2315, %v2316
        %v2318 = vrot.slane %v2282, 5
        %v2319 = vrot.slane %v2318, 4
        %v2320 = vrot.slane %v2145, 5
        %v2321 = vsel %vm2305, %v2319, %v2320
        %v2322 = vrot.slane %v2283, 5
        %v2323 = vrot.slane %v2322, 4
        %v2324 = vrot.slane %v2146, 5
        %v2325 = vsel %vm2305, %v2323, %v2324
        %v2326 = vrot.slane %v2284, 5
        %v2327 = vrot.slane %v2326, 4
        %v2328 = vrot.slane %v2147, 5
        %v2329 = vsel %vm2305, %v2327, %v2328
        %v2330 = vrot.slane %v2285, 5
        %v2331 = vrot.slane %v2330, 4
        %v2332 = vrot.slane %v2148, 5
        %v2333 = vsel %vm2305, %v2331, %v2332
        %v2334 = vrot.slane %v2286, 5
        %v2335 = vrot.slane %v2334, 4
        %v2336 = vrot.slane %v2149, 5
        %v2337 = vsel %vm2305, %v2335, %v2336
        %s2338 = scalar_lea.vmem [#allocation4], 128
        %v2339 = vld [vmem:[%s2338] sm:$0xf]
        %v2340 = vld [vmem:[%s2338 + $0x4] sm:$0xf]
        %v2341 = vld [vmem:[%s2338 + $0x8] sm:$0xf]
        %v2342 = vld [vmem:[%s2338 + $0xc] sm:$0xf]
        %v2343 = vld [vmem:[%s2338 + $0x10] sm:$0xf]
        %v2344 = vld [vmem:[%s2338 + $0x14] sm:$0xf]
        %v2345 = vld [vmem:[%s2338 + $0x18] sm:$0xf]
        %v2346 = vld [vmem:[%s2338 + $0x1c] sm:$0xf]
        %v2347 = vld [vmem:[%s2338 + $0x20] sm:$0xf]
        %v2348 = vld [vmem:[%s2338 + $0x24] sm:$0xf]
        %v2349 = vld [vmem:[%s2338 + $0x28] sm:$0xf]
        %v2350 = vld [vmem:[%s2338 + $0x2c] sm:$0xf]
        %v2351 = vld [vmem:[%s2338 + $0x30] sm:$0xf]
        %v2352 = vld [vmem:[%s2338 + $0x34] sm:$0xf]
        %v2353 = vld [vmem:[%s2338 + $0x38] sm:$0xf]
        %v2354 = vld [vmem:[%s2338 + $0x3c] sm:$0xf]
        %v2355 = vunpack.c.l.b16 %v2309
        %v2356 = vunpack.c.l.b16 %v2313
        %v2357 = vunpack.c.l.b16 %v2317
        %v2358 = vunpack.c.l.b16 %v2321
        %v2359 = vunpack.c.l.b16 %v2325
        %v2360 = vunpack.c.l.b16 %v2329
        %v2361 = vunpack.c.l.b16 %v2333
        %v2362 = vunpack.c.l.b16 %v2337
        %v2363 = vpack.c.b16 %v2356, %v2355
        %v2364 = vpack.c.b16 %v2358, %v2357
        %v2365 = vpack.c.b16 %v2360, %v2359
        %v2366 = vpack.c.b16 %v2362, %v2361
        %v2387 = vunpack.c.l.b16 %v2339
        %v2388 = vunpack.c.l.b16 %v2340
        %v2389 = vunpack.c.l.b16 %v2341
        %v2390 = vunpack.c.l.b16 %v2342
        %v2391 = vunpack.c.l.b16 %v2343
        %v2392 = vunpack.c.l.b16 %v2344
        %v2393 = vunpack.c.l.b16 %v2345
        %v2394 = vunpack.c.l.b16 %v2346
        %v2395 = vunpack.c.l.b16 %v2347
        %v2396 = vunpack.c.l.b16 %v2348
        %v2397 = vunpack.c.l.b16 %v2349
        %v2398 = vunpack.c.l.b16 %v2350
        %v2399 = vunpack.c.l.b16 %v2351
        %v2400 = vunpack.c.l.b16 %v2352
        %v2401 = vunpack.c.l.b16 %v2353
        %v2402 = vunpack.c.l.b16 %v2354
        %v2403 = vpack.c.b16 %v2388, %v2387
        %v2404 = vpack.c.b16 %v2390, %v2389
        %v2405 = vpack.c.b16 %v2392, %v2391
        %v2406 = vpack.c.b16 %v2394, %v2393
        %v2407 = vpack.c.b16 %v2396, %v2395
        %v2408 = vpack.c.b16 %v2398, %v2397
        %v2409 = vpack.c.b16 %v2400, %v2399
        %v2410 = vpack.c.b16 %v2402, %v2401
        %2419 = vmatprep.subr.bf16.mxu0 0
        %2420 = vmatpush1.bf16.msra.mxu0 %v2403
        %2421 = vmatprep.subr.bf16.mxu0 0
        %2422 = vmatpush1.bf16.msra.mxu0 %v2404
        %2423 = vmatprep.subr.bf16.mxu0 0
        %2424 = vmatpush1.bf16.msra.mxu0 %v2405
        %2425 = vmatprep.subr.bf16.mxu0 0
        %2426 = vmatpush1.bf16.msra.mxu0 %v2406
        %2427 = vmatprep.subr.bf16.mxu0 0
        %2428 = vmatpush1.bf16.msra.mxu0 %v2407
        %2429 = vmatprep.subr.bf16.mxu0 0
        %2430 = vmatpush1.bf16.msra.mxu0 %v2408
        %2431 = vmatprep.subr.bf16.mxu0 0
        %2432 = vmatpush1.bf16.msra.mxu0 %v2409
        %2433 = vmatprep.subr.bf16.mxu0 0
        %2434 = vmatpush1.bf16.msra.mxu0 %v2410
        %2435 = vmatprep.subr.bf16.mxu0 0
        %2436 = vmatpush1.bf16.msra.mxu0 0
        %2437 = vmatprep.subr.bf16.mxu0 0
        %2438 = vmatpush1.bf16.msra.mxu0 0
        %2439 = vmatprep.subr.bf16.mxu0 0
        %2440 = vmatpush1.bf16.msra.mxu0 0
        %2441 = vmatprep.subr.bf16.mxu0 0
        %2442 = vmatpush1.bf16.msra.mxu0 0
        %2443 = vmatprep.subr.bf16.mxu0 0
        %2444 = vmatpush1.bf16.msra.mxu0 0
        %2445 = vmatprep.subr.bf16.mxu0 0
        %2446 = vmatpush1.bf16.msra.mxu0 0
        %2447 = vmatprep.subr.bf16.mxu0 0
        %2448 = vmatpush1.bf16.msra.mxu0 0
        %2449 = vmatprep.subr.bf16.mxu0 0
        %2450 = vmatpush1.bf16.msra.mxu0 0
        %2451 = vmatprep.mubr.bf16.mxu0 0
        %2452 = vmatmul.mubr.bf16.gmra.mrb[0].mxu0 %v2363
        %v2453 = vpop.f32.mrb[0].mxu0
        %v2454 = vadd.f32 0.0, %v2453
        %v2455 = vpop.f32.mrb[0].mxu0
        %v2456 = vpop.f32.mrb[0].mxu0
        %v2457 = vadd.f32 0.0, %v2456
        %v2458 = vpop.f32.mrb[0].mxu0
        %2459 = vmatprep.mubr.bf16.mxu0 0
        %2460 = vmatmul.mubr.bf16.gmra.mrb[0].mxu0 %v2364
        %v2461 = vpop.f32.mrb[0].mxu0
        %v2462 = vadd.f32 0.0, %v2461
        %v2463 = vpop.f32.mrb[0].mxu0
        %v2464 = vpop.f32.mrb[0].mxu0
        %v2465 = vadd.f32 0.0, %v2464
        %v2466 = vpop.f32.mrb[0].mxu0
        %2467 = vmatprep.mubr.bf16.mxu0 0
        %2468 = vmatmul.mubr.bf16.gmra.mrb[0].mxu0 %v2365
        %v2469 = vpop.f32.mrb[0].mxu0
        %v2470 = vadd.f32 0.0, %v2469
        %v2471 = vpop.f32.mrb[0].mxu0
        %v2472 = vpop.f32.mrb[0].mxu0
        %v2473 = vadd.f32 0.0, %v2472
        %v2474 = vpop.f32.mrb[0].mxu0
        %2475 = vmatprep.mubr.bf16.mxu0 0
        %2476 = vmatmul.mubr.bf16.gmra.mrb[0].mxu0 %v2366
        %v2477 = vpop.f32.mrb[0].mxu0
        %v2478 = vadd.f32 0.0, %v2477
        %v2479 = vpop.f32.mrb[0].mxu0
        %v2480 = vpop.f32.mrb[0].mxu0
        %v2481 = vadd.f32 0.0, %v2480
        %v2482 = vpop.f32.mrb[0].mxu0
        %2483 = vdwg.mxu0
        %v2492 = vunpack.c.l.b16 %v2118
        %v2493 = vunpack.c.l.b16 %v2119
        %v2494 = vunpack.c.l.b16 %v2120
        %v2495 = vunpack.c.l.b16 %v2121
        %v2496 = vunpack.c.l.b16 %v2122
        %v2497 = vunpack.c.l.b16 %v2123
        %v2498 = vunpack.c.l.b16 %v2124
        %v2499 = vunpack.c.l.b16 %v2125
        %v2500 = vpack.c.b16 %v2493, %v2492
        %v2501 = vpack.c.b16 %v2495, %v2494
        %v2502 = vpack.c.b16 %v2497, %v2496
        %v2503 = vpack.c.b16 %v2499, %v2498
        %v2524 = vunpack.c.l.b16 %v2126
        %v2525 = vunpack.c.l.b16 %v2127
        %v2526 = vunpack.c.l.b16 %v2128
        %v2527 = vunpack.c.l.b16 %v2129
        %v2528 = vunpack.c.l.b16 %v2130
        %v2529 = vunpack.c.l.b16 %v2131
        %v2530 = vunpack.c.l.b16 %v2132
        %v2531 = vunpack.c.l.b16 %v2133
        %v2532 = vunpack.c.l.b16 %v2134
        %v2533 = vunpack.c.l.b16 %v2135
        %v2534 = vunpack.c.l.b16 %v2136
        %v2535 = vunpack.c.l.b16 %v2137
        %v2536 = vunpack.c.l.b16 %v2138
        %v2537 = vunpack.c.l.b16 %v2139
        %v2538 = vunpack.c.l.b16 %v2140
        %v2539 = vunpack.c.l.b16 %v2141
        %v2540 = vpack.c.b16 %v2525, %v2524
        %v2541 = vpack.c.b16 %v2527, %v2526
        %v2542 = vpack.c.b16 %v2529, %v2528
        %v2543 = vpack.c.b16 %v2531, %v2530
        %v2544 = vpack.c.b16 %v2533, %v2532
        %v2545 = vpack.c.b16 %v2535, %v2534
        %v2546 = vpack.c.b16 %v2537, %v2536
        %v2547 = vpack.c.b16 %v2539, %v2538
        %2556 = vmatprep.subr.bf16.mxu0 0
        %2557 = vmatpush1.bf16.msra.mxu0 %v2540
        %2558 = vmatprep.subr.bf16.mxu0 0
        %2559 = vmatpush1.bf16.msra.mxu0 %v2541
        %2560 = vmatprep.subr.bf16.mxu0 0
        %2561 = vmatpush1.bf16.msra.mxu0 %v2542
        %2562 = vmatprep.subr.bf16.mxu0 0
        %2563 = vmatpush1.bf16.msra.mxu0 %v2543
        %2564 = vmatprep.subr.bf16.mxu0 0
        %2565 = vmatpush1.bf16.msra.mxu0 %v2544
        %2566 = vmatprep.subr.bf16.mxu0 0
        %2567 = vmatpush1.bf16.msra.mxu0 %v2545
        %2568 = vmatprep.subr.bf16.mxu0 0
        %2569 = vmatpush1.bf16.msra.mxu0 %v2546
        %2570 = vmatprep.subr.bf16.mxu0 0
        %2571 = vmatpush1.bf16.msra.mxu0 %v2547
        %2572 = vmatprep.subr.bf16.mxu0 0
        %2573 = vmatpush1.bf16.msra.mxu0 0
        %2574 = vmatprep.subr.bf16.mxu0 0
        %2575 = vmatpush1.bf16.msra.mxu0 0
        %2576 = vmatprep.subr.bf16.mxu0 0
        %2577 = vmatpush1.bf16.msra.mxu0 0
        %2578 = vmatprep.subr.bf16.mxu0 0
        %2579 = vmatpush1.bf16.msra.mxu0 0
        %2580 = vmatprep.subr.bf16.mxu0 0
        %2581 = vmatpush1.bf16.msra.mxu0 0
        %2582 = vmatprep.subr.bf16.mxu0 0
        %2583 = vmatpush1.bf16.msra.mxu0 0
        %2584 = vmatprep.subr.bf16.mxu0 0
        %2585 = vmatpush1.bf16.msra.mxu0 0
        %2586 = vmatprep.subr.bf16.mxu0 0
        %2587 = vmatpush1.bf16.msra.mxu0 0
        %2588 = vmatprep.mubr.bf16.mxu0 0
        %2589 = vmatmul.mubr.bf16.gmra.mrb[0].mxu0 %v2500
        %v2590 = vpop.f32.mrb[0].mxu0
        %v2591 = vadd.f32 %v2454, %v2590
        %v2592 = vpop.f32.mrb[0].mxu0
        %v2593 = vpop.f32.mrb[0].mxu0
        %v2594 = vadd.f32 %v2457, %v2593
        %v2595 = vpop.f32.mrb[0].mxu0
        %2596 = vmatprep.mubr.bf16.mxu0 0
        %2597 = vmatmul.mubr.bf16.gmra.mrb[0].mxu0 %v2501
        %v2598 = vpop.f32.mrb[0].mxu0
        %v2599 = vadd.f32 %v2462, %v2598
        %v2600 = vpop.f32.mrb[0].mxu0
        %v2601 = vpop.f32.mrb[0].mxu0
        %v2602 = vadd.f32 %v2465, %v2601
        %v2603 = vpop.f32.mrb[0].mxu0
        %2604 = vmatprep.mubr.bf16.mxu0 0
        %2605 = vmatmul.mubr.bf16.gmra.mrb[0].mxu0 %v2502
        %v2606 = vpop.f32.mrb[0].mxu0
        %v2607 = vadd.f32 %v2470, %v2606
        %v2608 = vpop.f32.mrb[0].mxu0
        %v2609 = vpop.f32.mrb[0].mxu0
        %v2610 = vadd.f32 %v2473, %v2609
        %v2611 = vpop.f32.mrb[0].mxu0
        %2612 = vmatprep.mubr.bf16.mxu0 0
        %2613 = vmatmul.mubr.bf16.gmra.mrb[0].mxu0 %v2503
        %v2614 = vpop.f32.mrb[0].mxu0
        %v2615 = vadd.f32 %v2478, %v2614
        %v2616 = vpop.f32.mrb[0].mxu0
        %v2617 = vpop.f32.mrb[0].mxu0
        %v2618 = vadd.f32 %v2481, %v2617
        %v2619 = vpop.f32.mrb[0].mxu0
        %2620 = vdwg.mxu0
        %v2621 = vld [vmem:[%s2067] sm:$0xf]
        %v2622 = vld [vmem:[%s2067 + $0x8] sm:$0xf]
        %v2623 = vld [vmem:[%s2067 + $0x10] sm:$0xf]
        %v2624 = vld [vmem:[%s2067 + $0x18] sm:$0xf]
        %v2625 = vld [vmem:[%s2067 + $0x20] sm:$0xf]
        %v2626 = vld [vmem:[%s2067 + $0x28] sm:$0xf]
        %v2627 = vld [vmem:[%s2067 + $0x30] sm:$0xf]
        %v2628 = vld [vmem:[%s2067 + $0x38] sm:$0xf]
        %s2629 = scalar_lea.vmem [#allocation4], 192
        %v2630 = vld [vmem:[%s2629] sm:$0xf]
        %v2631 = vld [vmem:[%s2629 + $0x4] sm:$0xf]
        %v2632 = vld [vmem:[%s2629 + $0x8] sm:$0xf]
        %v2633 = vld [vmem:[%s2629 + $0xc] sm:$0xf]
        %v2634 = vld [vmem:[%s2629 + $0x10] sm:$0xf]
        %v2635 = vld [vmem:[%s2629 + $0x14] sm:$0xf]
        %v2636 = vld [vmem:[%s2629 + $0x18] sm:$0xf]
        %v2637 = vld [vmem:[%s2629 + $0x1c] sm:$0xf]
        %v2638 = vld [vmem:[%s2629 + $0x20] sm:$0xf]
        %v2639 = vld [vmem:[%s2629 + $0x24] sm:$0xf]
        %v2640 = vld [vmem:[%s2629 + $0x28] sm:$0xf]
        %v2641 = vld [vmem:[%s2629 + $0x2c] sm:$0xf]
        %v2642 = vld [vmem:[%s2629 + $0x30] sm:$0xf]
        %v2643 = vld [vmem:[%s2629 + $0x34] sm:$0xf]
        %v2644 = vld [vmem:[%s2629 + $0x38] sm:$0xf]
        %v2645 = vld [vmem:[%s2629 + $0x3c] sm:$0xf]
        %v2654 = vunpack.c.l.b16 %v2621
        %v2655 = vunpack.c.l.b16 %v2622
        %v2656 = vunpack.c.l.b16 %v2623
        %v2657 = vunpack.c.l.b16 %v2624
        %v2658 = vunpack.c.l.b16 %v2625
        %v2659 = vunpack.c.l.b16 %v2626
        %v2660 = vunpack.c.l.b16 %v2627
        %v2661 = vunpack.c.l.b16 %v2628
        %v2662 = vpack.c.b16 %v2655, %v2654
        %v2663 = vpack.c.b16 %v2657, %v2656
        %v2664 = vpack.c.b16 %v2659, %v2658
        %v2665 = vpack.c.b16 %v2661, %v2660
        %v2686 = vunpack.c.l.b16 %v2630
        %v2687 = vunpack.c.l.b16 %v2631
        %v2688 = vunpack.c.l.b16 %v2632
        %v2689 = vunpack.c.l.b16 %v2633
        %v2690 = vunpack.c.l.b16 %v2634
        %v2691 = vunpack.c.l.b16 %v2635
        %v2692 = vunpack.c.l.b16 %v2636
        %v2693 = vunpack.c.l.b16 %v2637
        %v2694 = vunpack.c.l.b16 %v2638
        %v2695 = vunpack.c.l.b16 %v2639
        %v2696 = vunpack.c.l.b16 %v2640
        %v2697 = vunpack.c.l.b16 %v2641
        %v2698 = vunpack.c.l.b16 %v2642
        %v2699 = vunpack.c.l.b16 %v2643
        %v2700 = vunpack.c.l.b16 %v2644
        %v2701 = vunpack.c.l.b16 %v2645
        %v2702 = vpack.c.b16 %v2687, %v2686
        %v2703 = vpack.c.b16 %v2689, %v2688
        %v2704 = vpack.c.b16 %v2691, %v2690
        %v2705 = vpack.c.b16 %v2693, %v2692
        %v2706 = vpack.c.b16 %v2695, %v2694
        %v2707 = vpack.c.b16 %v2697, %v2696
        %v2708 = vpack.c.b16 %v2699, %v2698
        %v2709 = vpack.c.b16 %v2701, %v2700
        %2718 = vmatprep.subr.bf16.mxu0 0
        %2719 = vmatpush1.bf16.msra.mxu0 %v2702
        %2720 = vmatprep.subr.bf16.mxu0 0
        %2721 = vmatpush1.bf16.msra.mxu0 %v2703
        %2722 = vmatprep.subr.bf16.mxu0 0
        %2723 = vmatpush1.bf16.msra.mxu0 %v2704
        %2724 = vmatprep.subr.bf16.mxu0 0
        %2725 = vmatpush1.bf16.msra.mxu0 %v2705
        %2726 = vmatprep.subr.bf16.mxu0 0
        %2727 = vmatpush1.bf16.msra.mxu0 %v2706
        %2728 = vmatprep.subr.bf16.mxu0 0
        %2729 = vmatpush1.bf16.msra.mxu0 %v2707
        %2730 = vmatprep.subr.bf16.mxu0 0
        %2731 = vmatpush1.bf16.msra.mxu0 %v2708
        %2732 = vmatprep.subr.bf16.mxu0 0
        %2733 = vmatpush1.bf16.msra.mxu0 %v2709
        %2734 = vmatprep.subr.bf16.mxu0 0
        %2735 = vmatpush1.bf16.msra.mxu0 0
        %2736 = vmatprep.subr.bf16.mxu0 0
        %2737 = vmatpush1.bf16.msra.mxu0 0
        %2738 = vmatprep.subr.bf16.mxu0 0
        %2739 = vmatpush1.bf16.msra.mxu0 0
        %2740 = vmatprep.subr.bf16.mxu0 0
        %2741 = vmatpush1.bf16.msra.mxu0 0
        %2742 = vmatprep.subr.bf16.mxu0 0
        %2743 = vmatpush1.bf16.msra.mxu0 0
        %2744 = vmatprep.subr.bf16.mxu0 0
        %2745 = vmatpush1.bf16.msra.mxu0 0
        %2746 = vmatprep.subr.bf16.mxu0 0
        %2747 = vmatpush1.bf16.msra.mxu0 0
        %2748 = vmatprep.subr.bf16.mxu0 0
        %2749 = vmatpush1.bf16.msra.mxu0 0
        %2750 = vmatprep.mubr.bf16.mxu0 0
        %2751 = vmatmul.mubr.bf16.gmra.mrb[0].mxu0 %v2662
        %v2752 = vpop.f32.mrb[0].mxu0
        %v2753 = vadd.f32 0.0, %v2752
        %v2754 = vpop.f32.mrb[0].mxu0
        %v2755 = vpop.f32.mrb[0].mxu0
        %v2756 = vadd.f32 0.0, %v2755
        %v2757 = vpop.f32.mrb[0].mxu0
        %2758 = vmatprep.mubr.bf16.mxu0 0
        %2759 = vmatmul.mubr.bf16.gmra.mrb[0].mxu0 %v2663
        %v2760 = vpop.f32.mrb[0].mxu0
        %v2761 = vadd.f32 0.0, %v2760
        %v2762 = vpop.f32.mrb[0].mxu0
        %v2763 = vpop.f32.mrb[0].mxu0
        %v2764 = vadd.f32 0.0, %v2763
        %v2765 = vpop.f32.mrb[0].mxu0
        %2766 = vmatprep.mubr.bf16.mxu0 0
        %2767 = vmatmul.mubr.bf16.gmra.mrb[0].mxu0 %v2664
        %v2768 = vpop.f32.mrb[0].mxu0
        %v2769 = vadd.f32 0.0, %v2768
        %v2770 = vpop.f32.mrb[0].mxu0
        %v2771 = vpop.f32.mrb[0].mxu0
        %v2772 = vadd.f32 0.0, %v2771
        %v2773 = vpop.f32.mrb[0].mxu0
        %2774 = vmatprep.mubr.bf16.mxu0 0
        %2775 = vmatmul.mubr.bf16.gmra.mrb[0].mxu0 %v2665
        %v2776 = vpop.f32.mrb[0].mxu0
        %v2777 = vadd.f32 0.0, %v2776
        %v2778 = vpop.f32.mrb[0].mxu0
        %v2779 = vpop.f32.mrb[0].mxu0
        %v2780 = vadd.f32 0.0, %v2779
        %v2781 = vpop.f32.mrb[0].mxu0
        %2782 = vdwg.mxu0
        %v2783 = vunpack.c.l.b16 %v2163
        %v2784 = vunpack.c.l.b16 %v2177
        %v2785 = vunpack.c.l.b16 %v2191
        %v2786 = vunpack.c.l.b16 %v2205
        %v2787 = vunpack.c.l.b16 %v2219
        %v2788 = vunpack.c.l.b16 %v2233
        %v2789 = vunpack.c.l.b16 %v2247
        %v2790 = vunpack.c.l.b16 %v2261
        %v2791 = vpack.c.b16 %v2784, %v2783
        %v2792 = vpack.c.b16 %v2786, %v2785
        %v2793 = vpack.c.b16 %v2788, %v2787
        %v2794 = vpack.c.b16 %v2790, %v2789
        %v2815 = vunpack.c.l.b16 %v2263
        %v2816 = vunpack.c.l.b16 %v2264
        %v2817 = vunpack.c.l.b16 %v2265
        %v2818 = vunpack.c.l.b16 %v2266
        %v2819 = vunpack.c.l.b16 %v2267
        %v2820 = vunpack.c.l.b16 %v2268
        %v2821 = vunpack.c.l.b16 %v2269
        %v2822 = vunpack.c.l.b16 %v2270
        %v2823 = vunpack.c.l.b16 %v2271
        %v2824 = vunpack.c.l.b16 %v2272
        %v2825 = vunpack.c.l.b16 %v2273
        %v2826 = vunpack.c.l.b16 %v2274
        %v2827 = vunpack.c.l.b16 %v2275
        %v2828 = vunpack.c.l.b16 %v2276
        %v2829 = vunpack.c.l.b16 %v2277
        %v2830 = vunpack.c.l.b16 %v2278
        %v2831 = vpack.c.b16 %v2816, %v2815
        %v2832 = vpack.c.b16 %v2818, %v2817
        %v2833 = vpack.c.b16 %v2820, %v2819
        %v2834 = vpack.c.b16 %v2822, %v2821
        %v2835 = vpack.c.b16 %v2824, %v2823
        %v2836 = vpack.c.b16 %v2826, %v2825
        %v2837 = vpack.c.b16 %v2828, %v2827
        %v2838 = vpack.c.b16 %v2830, %v2829
        %2847 = vmatprep.subr.bf16.mxu0 0
        %2848 = vmatpush1.bf16.msra.mxu0 %v2831
        %2849 = vmatprep.subr.bf16.mxu0 0
        %2850 = vmatpush1.bf16.msra.mxu0 %v2832
        %2851 = vmatprep.subr.bf16.mxu0 0
        %2852 = vmatpush1.bf16.msra.mxu0 %v2833
        %2853 = vmatprep.subr.bf16.mxu0 0
        %2854 = vmatpush1.bf16.msra.mxu0 %v2834
        %2855 = vmatprep.subr.bf16.mxu0 0
        %2856 = vmatpush1.bf16.msra.mxu0 %v2835
        %2857 = vmatprep.subr.bf16.mxu0 0
        %2858 = vmatpush1.bf16.msra.mxu0 %v2836
        %2859 = vmatprep.subr.bf16.mxu0 0
        %2860 = vmatpush1.bf16.msra.mxu0 %v2837
        %2861 = vmatprep.subr.bf16.mxu0 0
        %2862 = vmatpush1.bf16.msra.mxu0 %v2838
        %2863 = vmatprep.subr.bf16.mxu0 0
        %2864 = vmatpush1.bf16.msra.mxu0 0
        %2865 = vmatprep.subr.bf16.mxu0 0
        %2866 = vmatpush1.bf16.msra.mxu0 0
        %2867 = vmatprep.subr.bf16.mxu0 0
        %2868 = vmatpush1.bf16.msra.mxu0 0
        %2869 = vmatprep.subr.bf16.mxu0 0
        %2870 = vmatpush1.bf16.msra.mxu0 0
        %2871 = vmatprep.subr.bf16.mxu0 0
        %2872 = vmatpush1.bf16.msra.mxu0 0
        %2873 = vmatprep.subr.bf16.mxu0 0
        %2874 = vmatpush1.bf16.msra.mxu0 0
        %2875 = vmatprep.subr.bf16.mxu0 0
        %2876 = vmatpush1.bf16.msra.mxu0 0
        %2877 = vmatprep.subr.bf16.mxu0 0
        %2878 = vmatpush1.bf16.msra.mxu0 0
        %2879 = vmatprep.mubr.bf16.mxu0 0
        %2880 = vmatmul.mubr.bf16.gmra.mrb[0].mxu0 %v2791
        %v2881 = vpop.f32.mrb[0].mxu0
        %v2882 = vadd.f32 %v2753, %v2881
        %v2883 = vpop.f32.mrb[0].mxu0
        %v2884 = vpop.f32.mrb[0].mxu0
        %v2885 = vadd.f32 %v2756, %v2884
        %v2886 = vpop.f32.mrb[0].mxu0
        %2887 = vmatprep.mubr.bf16.mxu0 0
        %2888 = vmatmul.mubr.bf16.gmra.mrb[0].mxu0 %v2792
        %v2889 = vpop.f32.mrb[0].mxu0
        %v2890 = vadd.f32 %v2761, %v2889
        %v2891 = vpop.f32.mrb[0].mxu0
        %v2892 = vpop.f32.mrb[0].mxu0
        %v2893 = vadd.f32 %v2764, %v2892
        %v2894 = vpop.f32.mrb[0].mxu0
        %2895 = vmatprep.mubr.bf16.mxu0 0
        %2896 = vmatmul.mubr.bf16.gmra.mrb[0].mxu0 %v2793
        %v2897 = vpop.f32.mrb[0].mxu0
        %v2898 = vadd.f32 %v2769, %v2897
        %v2899 = vpop.f32.mrb[0].mxu0
        %v2900 = vpop.f32.mrb[0].mxu0
        %v2901 = vadd.f32 %v2772, %v2900
        %v2902 = vpop.f32.mrb[0].mxu0
        %2903 = vmatprep.mubr.bf16.mxu0 0
        %2904 = vmatmul.mubr.bf16.gmra.mrb[0].mxu0 %v2794
        %v2905 = vpop.f32.mrb[0].mxu0
        %v2906 = vadd.f32 %v2777, %v2905
        %v2907 = vpop.f32.mrb[0].mxu0
        %v2908 = vpop.f32.mrb[0].mxu0
        %v2909 = vadd.f32 %v2780, %v2908
        %v2910 = vpop.f32.mrb[0].mxu0
        %2911 = vdwg.mxu0
        %v2912 = vld [vmem:[%s2067] sm:$0xf]
        %v2913 = vld [vmem:[%s2067 + $0x4] sm:$0x1]
        %v2914 = vld [vmem:[%s2067 + $0x8] sm:$0xf]
        %v2915 = vld [vmem:[%s2067 + $0xc] sm:$0x1]
        %v2916 = vld [vmem:[%s2067 + $0x10] sm:$0xf]
        %v2917 = vld [vmem:[%s2067 + $0x14] sm:$0x1]
        %v2918 = vld [vmem:[%s2067 + $0x18] sm:$0xf]
        %v2919 = vld [vmem:[%s2067 + $0x1c] sm:$0x1]
        %v2920 = vld [vmem:[%s2067 + $0x20] sm:$0xf]
        %v2921 = vld [vmem:[%s2067 + $0x24] sm:$0x1]
        %v2922 = vld [vmem:[%s2067 + $0x28] sm:$0xf]
        %v2923 = vld [vmem:[%s2067 + $0x2c] sm:$0x1]
        %v2924 = vld [vmem:[%s2067 + $0x30] sm:$0xf]
        %v2925 = vld [vmem:[%s2067 + $0x34] sm:$0x1]
        %v2926 = vld [vmem:[%s2067 + $0x38] sm:$0xf]
        %v2927 = vld [vmem:[%s2067 + $0x3c] sm:$0x1]
        %v2929 = vshrl.u32 %v2912, 16
        %v2931 = vrot.slane %v2929, 4
        %v2932 = vshll.u32 %v2912, 16
        %v2934 = vrot.slane %v2932, 5
        %v2935 = vor.u32 %v2931, %v2934
        %v2936 = vrot.slane %v2935, 4
        %v2938 = vshll.u32 %v2913, 16
        %v2940 = vrot.slane %v2938, 5
        %v2941 = vsel %vm1050, %v2936, %v2940
        %v2943 = vshrl.u32 %v2914, 16
        %v2945 = vrot.slane %v2943, 4
        %v2946 = vshll.u32 %v2914, 16
        %v2948 = vrot.slane %v2946, 5
        %v2949 = vor.u32 %v2945, %v2948
        %v2950 = vrot.slane %v2949, 4
        %v2952 = vshll.u32 %v2915, 16
        %v2954 = vrot.slane %v2952, 5
        %v2955 = vsel %vm1050, %v2950, %v2954
        %v2957 = vshrl.u32 %v2916, 16
        %v2959 = vrot.slane %v2957, 4
        %v2960 = vshll.u32 %v2916, 16
        %v2962 = vrot.slane %v2960, 5
        %v2963 = vor.u32 %v2959, %v2962
        %v2964 = vrot.slane %v2963, 4
        %v2966 = vshll.u32 %v2917, 16
        %v2968 = vrot.slane %v2966, 5
        %v2969 = vsel %vm1050, %v2964, %v2968
        %v2971 = vshrl.u32 %v2918, 16
        %v2973 = vrot.slane %v2971, 4
        %v2974 = vshll.u32 %v2918, 16
        %v2976 = vrot.slane %v2974, 5
        %v2977 = vor.u32 %v2973, %v2976
        %v2978 = vrot.slane %v2977, 4
        %v2980 = vshll.u32 %v2919, 16
        %v2982 = vrot.slane %v2980, 5
        %v2983 = vsel %vm1050, %v2978, %v2982
        %v2985 = vshrl.u32 %v2920, 16
        %v2987 = vrot.slane %v2985, 4
        %v2988 = vshll.u32 %v2920, 16
        %v2990 = vrot.slane %v2988, 5
        %v2991 = vor.u32 %v2987, %v2990
        %v2992 = vrot.slane %v2991, 4
        %v2994 = vshll.u32 %v2921, 16
        %v2996 = vrot.slane %v2994, 5
        %v2997 = vsel %vm1050, %v2992, %v2996
        %v2999 = vshrl.u32 %v2922, 16
        %v3001 = vrot.slane %v2999, 4
        %v3002 = vshll.u32 %v2922, 16
        %v3004 = vrot.slane %v3002, 5
        %v3005 = vor.u32 %v3001, %v3004
        %v3006 = vrot.slane %v3005, 4
        %v3008 = vshll.u32 %v2923, 16
        %v3010 = vrot.slane %v3008, 5
        %v3011 = vsel %vm1050, %v3006, %v3010
        %v3013 = vshrl.u32 %v2924, 16
        %v3015 = vrot.slane %v3013, 4
        %v3016 = vshll.u32 %v2924, 16
        %v3018 = vrot.slane %v3016, 5
        %v3019 = vor.u32 %v3015, %v3018
        %v3020 = vrot.slane %v3019, 4
        %v3022 = vshll.u32 %v2925, 16
        %v3024 = vrot.slane %v3022, 5
        %v3025 = vsel %vm1050, %v3020, %v3024
        %v3027 = vshrl.u32 %v2926, 16
        %v3029 = vrot.slane %v3027, 4
        %v3030 = vshll.u32 %v2926, 16
        %v3032 = vrot.slane %v3030, 5
        %v3033 = vor.u32 %v3029, %v3032
        %v3034 = vrot.slane %v3033, 4
        %v3036 = vshll.u32 %v2927, 16
        %v3038 = vrot.slane %v3036, 5
        %v3039 = vsel %vm1050, %v3034, %v3038
        %s3040 = scalar_lea.vmem [#allocation4], 256
        %v3041 = vld [vmem:[%s3040] sm:$0xf]
        %v3042 = vld [vmem:[%s3040 + $0x4] sm:$0xf]
        %v3043 = vld [vmem:[%s3040 + $0x8] sm:$0xf]
        %v3044 = vld [vmem:[%s3040 + $0xc] sm:$0xf]
        %v3045 = vld [vmem:[%s3040 + $0x10] sm:$0xf]
        %v3046 = vld [vmem:[%s3040 + $0x14] sm:$0xf]
        %v3047 = vld [vmem:[%s3040 + $0x18] sm:$0xf]
        %v3048 = vld [vmem:[%s3040 + $0x1c] sm:$0xf]
        %v3049 = vld [vmem:[%s3040 + $0x20] sm:$0xf]
        %v3050 = vld [vmem:[%s3040 + $0x24] sm:$0xf]
        %v3051 = vld [vmem:[%s3040 + $0x28] sm:$0xf]
        %v3052 = vld [vmem:[%s3040 + $0x2c] sm:$0xf]
        %v3053 = vld [vmem:[%s3040 + $0x30] sm:$0xf]
        %v3054 = vld [vmem:[%s3040 + $0x34] sm:$0xf]
        %v3055 = vld [vmem:[%s3040 + $0x38] sm:$0xf]
        %v3056 = vld [vmem:[%s3040 + $0x3c] sm:$0xf]
        %v3057 = vunpack.c.l.b16 %v2941
        %v3058 = vunpack.c.l.b16 %v2955
        %v3059 = vunpack.c.l.b16 %v2969
        %v3060 = vunpack.c.l.b16 %v2983
        %v3061 = vunpack.c.l.b16 %v2997
        %v3062 = vunpack.c.l.b16 %v3011
        %v3063 = vunpack.c.l.b16 %v3025
        %v3064 = vunpack.c.l.b16 %v3039
        %v3065 = vpack.c.b16 %v3058, %v3057
        %v3066 = vpack.c.b16 %v3060, %v3059
        %v3067 = vpack.c.b16 %v3062, %v3061
        %v3068 = vpack.c.b16 %v3064, %v3063
        %v3089 = vunpack.c.l.b16 %v3041
        %v3090 = vunpack.c.l.b16 %v3042
        %v3091 = vunpack.c.l.b16 %v3043
        %v3092 = vunpack.c.l.b16 %v3044
        %v3093 = vunpack.c.l.b16 %v3045
        %v3094 = vunpack.c.l.b16 %v3046
        %v3095 = vunpack.c.l.b16 %v3047
        %v3096 = vunpack.c.l.b16 %v3048
        %v3097 = vunpack.c.l.b16 %v3049
        %v3098 = vunpack.c.l.b16 %v3050
        %v3099 = vunpack.c.l.b16 %v3051
        %v3100 = vunpack.c.l.b16 %v3052
        %v3101 = vunpack.c.l.b16 %v3053
        %v3102 = vunpack.c.l.b16 %v3054
        %v3103 = vunpack.c.l.b16 %v3055
        %v3104 = vunpack.c.l.b16 %v3056
        %v3105 = vpack.c.b16 %v3090, %v3089
        %v3106 = vpack.c.b16 %v3092, %v3091
        %v3107 = vpack.c.b16 %v3094, %v3093
        %v3108 = vpack.c.b16 %v3096, %v3095
        %v3109 = vpack.c.b16 %v3098, %v3097
        %v3110 = vpack.c.b16 %v3100, %v3099
        %v3111 = vpack.c.b16 %v3102, %v3101
        %v3112 = vpack.c.b16 %v3104, %v3103
        %3121 = vmatprep.subr.bf16.mxu0 0
        %3122 = vmatpush1.bf16.msra.mxu0 %v3105
        %3123 = vmatprep.subr.bf16.mxu0 0
        %3124 = vmatpush1.bf16.msra.mxu0 %v3106
        %3125 = vmatprep.subr.bf16.mxu0 0
        %3126 = vmatpush1.bf16.msra.mxu0 %v3107
        %3127 = vmatprep.subr.bf16.mxu0 0
        %3128 = vmatpush1.bf16.msra.mxu0 %v3108
        %3129 = vmatprep.subr.bf16.mxu0 0
        %3130 = vmatpush1.bf16.msra.mxu0 %v3109
        %3131 = vmatprep.subr.bf16.mxu0 0
        %3132 = vmatpush1.bf16.msra.mxu0 %v3110
        %3133 = vmatprep.subr.bf16.mxu0 0
        %3134 = vmatpush1.bf16.msra.mxu0 %v3111
        %3135 = vmatprep.subr.bf16.mxu0 0
        %3136 = vmatpush1.bf16.msra.mxu0 %v3112
        %3137 = vmatprep.subr.bf16.mxu0 0
        %3138 = vmatpush1.bf16.msra.mxu0 0
        %3139 = vmatprep.subr.bf16.mxu0 0
        %3140 = vmatpush1.bf16.msra.mxu0 0
        %3141 = vmatprep.subr.bf16.mxu0 0
        %3142 = vmatpush1.bf16.msra.mxu0 0
        %3143 = vmatprep.subr.bf16.mxu0 0
        %3144 = vmatpush1.bf16.msra.mxu0 0
        %3145 = vmatprep.subr.bf16.mxu0 0
        %3146 = vmatpush1.bf16.msra.mxu0 0
        %3147 = vmatprep.subr.bf16.mxu0 0
        %3148 = vmatpush1.bf16.msra.mxu0 0
        %3149 = vmatprep.subr.bf16.mxu0 0
        %3150 = vmatpush1.bf16.msra.mxu0 0
        %3151 = vmatprep.subr.bf16.mxu0 0
        %3152 = vmatpush1.bf16.msra.mxu0 0
        %3153 = vmatprep.mubr.bf16.mxu0 0
        %3154 = vmatmul.mubr.bf16.gmra.mrb[0].mxu0 %v3065
        %v3155 = vpop.f32.mrb[0].mxu0
        %v3156 = vadd.f32 0.0, %v3155
        %v3157 = vpop.f32.mrb[0].mxu0
        %v3158 = vpop.f32.mrb[0].mxu0
        %v3159 = vadd.f32 0.0, %v3158
        %v3160 = vpop.f32.mrb[0].mxu0
        %3161 = vmatprep.mubr.bf16.mxu0 0
        %3162 = vmatmul.mubr.bf16.gmra.mrb[0].mxu0 %v3066
        %v3163 = vpop.f32.mrb[0].mxu0
        %v3164 = vadd.f32 0.0, %v3163
        %v3165 = vpop.f32.mrb[0].mxu0
        %v3166 = vpop.f32.mrb[0].mxu0
        %v3167 = vadd.f32 0.0, %v3166
        %v3168 = vpop.f32.mrb[0].mxu0
        %3169 = vmatprep.mubr.bf16.mxu0 0
        %3170 = vmatmul.mubr.bf16.gmra.mrb[0].mxu0 %v3067
        %v3171 = vpop.f32.mrb[0].mxu0
        %v3172 = vadd.f32 0.0, %v3171
        %v3173 = vpop.f32.mrb[0].mxu0
        %v3174 = vpop.f32.mrb[0].mxu0
        %v3175 = vadd.f32 0.0, %v3174
        %v3176 = vpop.f32.mrb[0].mxu0
        %3177 = vmatprep.mubr.bf16.mxu0 0
        %3178 = vmatmul.mubr.bf16.gmra.mrb[0].mxu0 %v3068
        %v3179 = vpop.f32.mrb[0].mxu0
        %v3180 = vadd.f32 0.0, %v3179
        %v3181 = vpop.f32.mrb[0].mxu0
        %v3182 = vpop.f32.mrb[0].mxu0
        %v3183 = vadd.f32 0.0, %v3182
        %v3184 = vpop.f32.mrb[0].mxu0
        %3185 = vdwg.mxu0
        %v3186 = vadd.f32 %v2591, %v3156
        %v3187 = vadd.f32 %v2594, %v3159
        %v3188 = vadd.f32 %v2599, %v3164
        %v3189 = vadd.f32 %v2602, %v3167
        %v3190 = vadd.f32 %v2607, %v3172
        %v3191 = vadd.f32 %v2610, %v3175
        %v3192 = vadd.f32 %v2615, %v3180
        %v3193 = vadd.f32 %v2618, %v3183
        %v3194 = vld [vmem:[%s2067] sm:$0xe]
        %v3195 = vld [vmem:[%s2067 + $0x8] sm:$0xe]
        %v3196 = vld [vmem:[%s2067 + $0x10] sm:$0xe]
        %v3197 = vld [vmem:[%s2067 + $0x18] sm:$0xe]
        %v3198 = vld [vmem:[%s2067 + $0x20] sm:$0xe]
        %v3199 = vld [vmem:[%s2067 + $0x28] sm:$0xe]
        %v3200 = vld [vmem:[%s2067 + $0x30] sm:$0xe]
        %v3201 = vld [vmem:[%s2067 + $0x38] sm:$0xe]
        %v3218 = vrot.slane %v3194, 5
        %v3219 = vrot.slane %v3218, 4
        %v3220 = vrot.slane %v2913, 5
        %v3221 = vsel %vm2305, %v3219, %v3220
        %v3222 = vrot.slane %v3195, 5
        %v3223 = vrot.slane %v3222, 4
        %v3224 = vrot.slane %v2915, 5
        %v3225 = vsel %vm2305, %v3223, %v3224
        %v3226 = vrot.slane %v3196, 5
        %v3227 = vrot.slane %v3226, 4
        %v3228 = vrot.slane %v2917, 5
        %v3229 = vsel %vm2305, %v3227, %v3228
        %v3230 = vrot.slane %v3197, 5
        %v3231 = vrot.slane %v3230, 4
        %v3232 = vrot.slane %v2919, 5
        %v3233 = vsel %vm2305, %v3231, %v3232
        %v3234 = vrot.slane %v3198, 5
        %v3235 = vrot.slane %v3234, 4
        %v3236 = vrot.slane %v2921, 5
        %v3237 = vsel %vm2305, %v3235, %v3236
        %v3238 = vrot.slane %v3199, 5
        %v3239 = vrot.slane %v3238, 4
        %v3240 = vrot.slane %v2923, 5
        %v3241 = vsel %vm2305, %v3239, %v3240
        %v3242 = vrot.slane %v3200, 5
        %v3243 = vrot.slane %v3242, 4
        %v3244 = vrot.slane %v2925, 5
        %v3245 = vsel %vm2305, %v3243, %v3244
        %v3246 = vrot.slane %v3201, 5
        %v3247 = vrot.slane %v3246, 4
        %v3248 = vrot.slane %v2927, 5
        %v3249 = vsel %vm2305, %v3247, %v3248
        %s3250 = scalar_lea.vmem [#allocation4], 320
        %v3251 = vld [vmem:[%s3250] sm:$0xf]
        %v3252 = vld [vmem:[%s3250 + $0x4] sm:$0xf]
        %v3253 = vld [vmem:[%s3250 + $0x8] sm:$0xf]
        %v3254 = vld [vmem:[%s3250 + $0xc] sm:$0xf]
        %v3255 = vld [vmem:[%s3250 + $0x10] sm:$0xf]
        %v3256 = vld [vmem:[%s3250 + $0x14] sm:$0xf]
        %v3257 = vld [vmem:[%s3250 + $0x18] sm:$0xf]
        %v3258 = vld [vmem:[%s3250 + $0x1c] sm:$0xf]
        %v3259 = vld [vmem:[%s3250 + $0x20] sm:$0xf]
        %v3260 = vld [vmem:[%s3250 + $0x24] sm:$0xf]
        %v3261 = vld [vmem:[%s3250 + $0x28] sm:$0xf]
        %v3262 = vld [vmem:[%s3250 + $0x2c] sm:$0xf]
        %v3263 = vld [vmem:[%s3250 + $0x30] sm:$0xf]
        %v3264 = vld [vmem:[%s3250 + $0x34] sm:$0xf]
        %v3265 = vld [vmem:[%s3250 + $0x38] sm:$0xf]
        %v3266 = vld [vmem:[%s3250 + $0x3c] sm:$0xf]
        %v3267 = vunpack.c.l.b16 %v3221
        %v3268 = vunpack.c.l.b16 %v3225
        %v3269 = vunpack.c.l.b16 %v3229
        %v3270 = vunpack.c.l.b16 %v3233
        %v3271 = vunpack.c.l.b16 %v3237
        %v3272 = vunpack.c.l.b16 %v3241
        %v3273 = vunpack.c.l.b16 %v3245
        %v3274 = vunpack.c.l.b16 %v3249
        %v3275 = vpack.c.b16 %v3268, %v3267
        %v3276 = vpack.c.b16 %v3270, %v3269
        %v3277 = vpack.c.b16 %v3272, %v3271
        %v3278 = vpack.c.b16 %v3274, %v3273
        %v3299 = vunpack.c.l.b16 %v3251
        %v3300 = vunpack.c.l.b16 %v3252
        %v3301 = vunpack.c.l.b16 %v3253
        %v3302 = vunpack.c.l.b16 %v3254
        %v3303 = vunpack.c.l.b16 %v3255
        %v3304 = vunpack.c.l.b16 %v3256
        %v3305 = vunpack.c.l.b16 %v3257
        %v3306 = vunpack.c.l.b16 %v3258
        %v3307 = vunpack.c.l.b16 %v3259
        %v3308 = vunpack.c.l.b16 %v3260
        %v3309 = vunpack.c.l.b16 %v3261
        %v3310 = vunpack.c.l.b16 %v3262
        %v3311 = vunpack.c.l.b16 %v3263
        %v3312 = vunpack.c.l.b16 %v3264
        %v3313 = vunpack.c.l.b16 %v3265
        %v3314 = vunpack.c.l.b16 %v3266
        %v3315 = vpack.c.b16 %v3300, %v3299
        %v3316 = vpack.c.b16 %v3302, %v3301
        %v3317 = vpack.c.b16 %v3304, %v3303
        %v3318 = vpack.c.b16 %v3306, %v3305
        %v3319 = vpack.c.b16 %v3308, %v3307
        %v3320 = vpack.c.b16 %v3310, %v3309
        %v3321 = vpack.c.b16 %v3312, %v3311
        %v3322 = vpack.c.b16 %v3314, %v3313
        %3331 = vmatprep.subr.bf16.mxu0 0
        %3332 = vmatpush1.bf16.msra.mxu0 %v3315
        %3333 = vmatprep.subr.bf16.mxu0 0
        %3334 = vmatpush1.bf16.msra.mxu0 %v3316
        %3335 = vmatprep.subr.bf16.mxu0 0
        %3336 = vmatpush1.bf16.msra.mxu0 %v3317
        %3337 = vmatprep.subr.bf16.mxu0 0
        %3338 = vmatpush1.bf16.msra.mxu0 %v3318
        %3339 = vmatprep.subr.bf16.mxu0 0
        %3340 = vmatpush1.bf16.msra.mxu0 %v3319
        %3341 = vmatprep.subr.bf16.mxu0 0
        %3342 = vmatpush1.bf16.msra.mxu0 %v3320
        %3343 = vmatprep.subr.bf16.mxu0 0
        %3344 = vmatpush1.bf16.msra.mxu0 %v3321
        %3345 = vmatprep.subr.bf16.mxu0 0
        %3346 = vmatpush1.bf16.msra.mxu0 %v3322
        %3347 = vmatprep.subr.bf16.mxu0 0
        %3348 = vmatpush1.bf16.msra.mxu0 0
        %3349 = vmatprep.subr.bf16.mxu0 0
        %3350 = vmatpush1.bf16.msra.mxu0 0
        %3351 = vmatprep.subr.bf16.mxu0 0
        %3352 = vmatpush1.bf16.msra.mxu0 0
        %3353 = vmatprep.subr.bf16.mxu0 0
        %3354 = vmatpush1.bf16.msra.mxu0 0
        %3355 = vmatprep.subr.bf16.mxu0 0
        %3356 = vmatpush1.bf16.msra.mxu0 0
        %3357 = vmatprep.subr.bf16.mxu0 0
        %3358 = vmatpush1.bf16.msra.mxu0 0
        %3359 = vmatprep.subr.bf16.mxu0 0
        %3360 = vmatpush1.bf16.msra.mxu0 0
        %3361 = vmatprep.subr.bf16.mxu0 0
        %3362 = vmatpush1.bf16.msra.mxu0 0
        %3363 = vmatprep.mubr.bf16.mxu0 0
        %3364 = vmatmul.mubr.bf16.gmra.mrb[0].mxu0 %v3275
        %v3365 = vpop.f32.mrb[0].mxu0
        %v3366 = vadd.f32 0.0, %v3365
        %v3367 = vpop.f32.mrb[0].mxu0
        %v3368 = vpop.f32.mrb[0].mxu0
        %v3369 = vadd.f32 0.0, %v3368
        %v3370 = vpop.f32.mrb[0].mxu0
        %3371 = vmatprep.mubr.bf16.mxu0 0
        %3372 = vmatmul.mubr.bf16.gmra.mrb[0].mxu0 %v3276
        %v3373 = vpop.f32.mrb[0].mxu0
        %v3374 = vadd.f32 0.0, %v3373
        %v3375 = vpop.f32.mrb[0].mxu0
        %v3376 = vpop.f32.mrb[0].mxu0
        %v3377 = vadd.f32 0.0, %v3376
        %v3378 = vpop.f32.mrb[0].mxu0
        %3379 = vmatprep.mubr.bf16.mxu0 0
        %3380 = vmatmul.mubr.bf16.gmra.mrb[0].mxu0 %v3277
        %v3381 = vpop.f32.mrb[0].mxu0
        %v3382 = vadd.f32 0.0, %v3381
        %v3383 = vpop.f32.mrb[0].mxu0
        %v3384 = vpop.f32.mrb[0].mxu0
        %v3385 = vadd.f32 0.0, %v3384
        %v3386 = vpop.f32.mrb[0].mxu0
        %3387 = vmatprep.mubr.bf16.mxu0 0
        %3388 = vmatmul.mubr.bf16.gmra.mrb[0].mxu0 %v3278
        %v3389 = vpop.f32.mrb[0].mxu0
        %v3390 = vadd.f32 0.0, %v3389
        %v3391 = vpop.f32.mrb[0].mxu0
        %v3392 = vpop.f32.mrb[0].mxu0
        %v3393 = vadd.f32 0.0, %v3392
        %v3394 = vpop.f32.mrb[0].mxu0
        %3395 = vdwg.mxu0
        %v3396 = vadd.f32 %v2882, %v3366
        %v3397 = vadd.f32 %v2885, %v3369
        %v3398 = vadd.f32 %v2890, %v3374
        %v3399 = vadd.f32 %v2893, %v3377
        %v3400 = vadd.f32 %v2898, %v3382
        %v3401 = vadd.f32 %v2901, %v3385
        %v3402 = vadd.f32 %v2906, %v3390
        %v3403 = vadd.f32 %v2909, %v3393
        %s3404 = scalar_lea.vmem [#allocation2], 16
        %v3405 = vld [vmem:[%s3404] sm:$0xf]
        %v3406 = vld [vmem:[%s3404 + $0x8] sm:$0xf]
        %v3407 = vld [vmem:[%s3404 + $0x10] sm:$0xf]
        %v3408 = vld [vmem:[%s3404 + $0x18] sm:$0xf]
        %v3409 = vld [vmem:[%s3404 + $0x20] sm:$0xf]
        %v3410 = vld [vmem:[%s3404 + $0x28] sm:$0xf]
        %v3411 = vld [vmem:[%s3404 + $0x30] sm:$0xf]
        %v3412 = vld [vmem:[%s3404 + $0x38] sm:$0xf]
        %s3413 = scalar_lea.vmem [#allocation4], 384
        %v3414 = vld [vmem:[%s3413] sm:$0xf]
        %v3415 = vld [vmem:[%s3413 + $0x4] sm:$0xf]
        %v3416 = vld [vmem:[%s3413 + $0x8] sm:$0xf]
        %v3417 = vld [vmem:[%s3413 + $0xc] sm:$0xf]
        %v3418 = vld [vmem:[%s3413 + $0x10] sm:$0xf]
        %v3419 = vld [vmem:[%s3413 + $0x14] sm:$0xf]
        %v3420 = vld [vmem:[%s3413 + $0x18] sm:$0xf]
        %v3421 = vld [vmem:[%s3413 + $0x1c] sm:$0xf]
        %v3422 = vld [vmem:[%s3413 + $0x20] sm:$0xf]
        %v3423 = vld [vmem:[%s3413 + $0x24] sm:$0xf]
        %v3424 = vld [vmem:[%s3413 + $0x28] sm:$0xf]
        %v3425 = vld [vmem:[%s3413 + $0x2c] sm:$0xf]
        %v3426 = vld [vmem:[%s3413 + $0x30] sm:$0xf]
        %v3427 = vld [vmem:[%s3413 + $0x34] sm:$0xf]
        %v3428 = vld [vmem:[%s3413 + $0x38] sm:$0xf]
        %v3429 = vld [vmem:[%s3413 + $0x3c] sm:$0xf]
        %v3438 = vunpack.c.l.b16 %v3405
        %v3439 = vunpack.c.l.b16 %v3406
        %v3440 = vunpack.c.l.b16 %v3407
        %v3441 = vunpack.c.l.b16 %v3408
        %v3442 = vunpack.c.l.b16 %v3409
        %v3443 = vunpack.c.l.b16 %v3410
        %v3444 = vunpack.c.l.b16 %v3411
        %v3445 = vunpack.c.l.b16 %v3412
        %v3446 = vpack.c.b16 %v3439, %v3438
        %v3447 = vpack.c.b16 %v3441, %v3440
        %v3448 = vpack.c.b16 %v3443, %v3442
        %v3449 = vpack.c.b16 %v3445, %v3444
        %v3470 = vunpack.c.l.b16 %v3414
        %v3471 = vunpack.c.l.b16 %v3415
        %v3472 = vunpack.c.l.b16 %v3416
        %v3473 = vunpack.c.l.b16 %v3417
        %v3474 = vunpack.c.l.b16 %v3418
        %v3475 = vunpack.c.l.b16 %v3419
        %v3476 = vunpack.c.l.b16 %v3420
        %v3477 = vunpack.c.l.b16 %v3421
        %v3478 = vunpack.c.l.b16 %v3422
        %v3479 = vunpack.c.l.b16 %v3423
        %v3480 = vunpack.c.l.b16 %v3424
        %v3481 = vunpack.c.l.b16 %v3425
        %v3482 = vunpack.c.l.b16 %v3426
        %v3483 = vunpack.c.l.b16 %v3427
        %v3484 = vunpack.c.l.b16 %v3428
        %v3485 = vunpack.c.l.b16 %v3429
        %v3486 = vpack.c.b16 %v3471, %v3470
        %v3487 = vpack.c.b16 %v3473, %v3472
        %v3488 = vpack.c.b16 %v3475, %v3474
        %v3489 = vpack.c.b16 %v3477, %v3476
        %v3490 = vpack.c.b16 %v3479, %v3478
        %v3491 = vpack.c.b16 %v3481, %v3480
        %v3492 = vpack.c.b16 %v3483, %v3482
        %v3493 = vpack.c.b16 %v3485, %v3484
        %3502 = vmatprep.subr.bf16.mxu0 0
        %3503 = vmatpush1.bf16.msra.mxu0 %v3486
        %3504 = vmatprep.subr.bf16.mxu0 0
        %3505 = vmatpush1.bf16.msra.mxu0 %v3487
        %3506 = vmatprep.subr.bf16.mxu0 0
        %3507 = vmatpush1.bf16.msra.mxu0 %v3488
        %3508 = vmatprep.subr.bf16.mxu0 0
        %3509 = vmatpush1.bf16.msra.mxu0 %v3489
        %3510 = vmatprep.subr.bf16.mxu0 0
        %3511 = vmatpush1.bf16.msra.mxu0 %v3490
        %3512 = vmatprep.subr.bf16.mxu0 0
        %3513 = vmatpush1.bf16.msra.mxu0 %v3491
        %3514 = vmatprep.subr.bf16.mxu0 0
        %3515 = vmatpush1.bf16.msra.mxu0 %v3492
        %3516 = vmatprep.subr.bf16.mxu0 0
        %3517 = vmatpush1.bf16.msra.mxu0 %v3493
        %3518 = vmatprep.subr.bf16.mxu0 0
        %3519 = vmatpush1.bf16.msra.mxu0 0
        %3520 = vmatprep.subr.bf16.mxu0 0
        %3521 = vmatpush1.bf16.msra.mxu0 0
        %3522 = vmatprep.subr.bf16.mxu0 0
        %3523 = vmatpush1.bf16.msra.mxu0 0
        %3524 = vmatprep.subr.bf16.mxu0 0
        %3525 = vmatpush1.bf16.msra.mxu0 0
        %3526 = vmatprep.subr.bf16.mxu0 0
        %3527 = vmatpush1.bf16.msra.mxu0 0
        %3528 = vmatprep.subr.bf16.mxu0 0
        %3529 = vmatpush1.bf16.msra.mxu0 0
        %3530 = vmatprep.subr.bf16.mxu0 0
        %3531 = vmatpush1.bf16.msra.mxu0 0
        %3532 = vmatprep.subr.bf16.mxu0 0
        %3533 = vmatpush1.bf16.msra.mxu0 0
        %3534 = vmatprep.mubr.bf16.mxu0 0
        %3535 = vmatmul.mubr.bf16.gmra.mrb[0].mxu0 %v3446
        %v3536 = vpop.f32.mrb[0].mxu0
        %v3537 = vadd.f32 0.0, %v3536
        %v3538 = vpop.f32.mrb[0].mxu0
        %v3539 = vpop.f32.mrb[0].mxu0
        %v3540 = vadd.f32 0.0, %v3539
        %v3541 = vpop.f32.mrb[0].mxu0
        %3542 = vmatprep.mubr.bf16.mxu0 0
        %3543 = vmatmul.mubr.bf16.gmra.mrb[0].mxu0 %v3447
        %v3544 = vpop.f32.mrb[0].mxu0
        %v3545 = vadd.f32 0.0, %v3544
        %v3546 = vpop.f32.mrb[0].mxu0
        %v3547 = vpop.f32.mrb[0].mxu0
        %v3548 = vadd.f32 0.0, %v3547
        %v3549 = vpop.f32.mrb[0].mxu0
        %3550 = vmatprep.mubr.bf16.mxu0 0
        %3551 = vmatmul.mubr.bf16.gmra.mrb[0].mxu0 %v3448
        %v3552 = vpop.f32.mrb[0].mxu0
        %v3553 = vadd.f32 0.0, %v3552
        %v3554 = vpop.f32.mrb[0].mxu0
        %v3555 = vpop.f32.mrb[0].mxu0
        %v3556 = vadd.f32 0.0, %v3555
        %v3557 = vpop.f32.mrb[0].mxu0
        %3558 = vmatprep.mubr.bf16.mxu0 0
        %3559 = vmatmul.mubr.bf16.gmra.mrb[0].mxu0 %v3449
        %v3560 = vpop.f32.mrb[0].mxu0
        %v3561 = vadd.f32 0.0, %v3560
        %v3562 = vpop.f32.mrb[0].mxu0
        %v3563 = vpop.f32.mrb[0].mxu0
        %v3564 = vadd.f32 0.0, %v3563
        %v3565 = vpop.f32.mrb[0].mxu0
        %3566 = vdwg.mxu0
        %v3567 = vadd.f32 %v3186, %v3537
        %v3568 = vadd.f32 %v3187, %v3540
        %v3569 = vadd.f32 %v3188, %v3545
        %v3570 = vadd.f32 %v3189, %v3548
        %v3571 = vadd.f32 %v3190, %v3553
        %v3572 = vadd.f32 %v3191, %v3556
        %v3573 = vadd.f32 %v3192, %v3561
        %v3574 = vadd.f32 %v3193, %v3564
        %v3575 = vld [vmem:[%s3404] sm:$0xf]
        %v3576 = vld [vmem:[%s3404 + $0x4] sm:$0x1]
        %v3577 = vld [vmem:[%s3404 + $0x8] sm:$0xf]
        %v3578 = vld [vmem:[%s3404 + $0xc] sm:$0x1]
        %v3579 = vld [vmem:[%s3404 + $0x10] sm:$0xf]
        %v3580 = vld [vmem:[%s3404 + $0x14] sm:$0x1]
        %v3581 = vld [vmem:[%s3404 + $0x18] sm:$0xf]
        %v3582 = vld [vmem:[%s3404 + $0x1c] sm:$0x1]
        %v3583 = vld [vmem:[%s3404 + $0x20] sm:$0xf]
        %v3584 = vld [vmem:[%s3404 + $0x24] sm:$0x1]
        %v3585 = vld [vmem:[%s3404 + $0x28] sm:$0xf]
        %v3586 = vld [vmem:[%s3404 + $0x2c] sm:$0x1]
        %v3587 = vld [vmem:[%s3404 + $0x30] sm:$0xf]
        %v3588 = vld [vmem:[%s3404 + $0x34] sm:$0x1]
        %v3589 = vld [vmem:[%s3404 + $0x38] sm:$0xf]
        %v3590 = vld [vmem:[%s3404 + $0x3c] sm:$0x1]
        %v3592 = vshrl.u32 %v3575, 16
        %v3594 = vrot.slane %v3592, 4
        %v3595 = vshll.u32 %v3575, 16
        %v3597 = vrot.slane %v3595, 5
        %v3598 = vor.u32 %v3594, %v3597
        %v3599 = vrot.slane %v3598, 4
        %v3601 = vshll.u32 %v3576, 16
        %v3603 = vrot.slane %v3601, 5
        %v3604 = vsel %vm1050, %v3599, %v3603
        %v3606 = vshrl.u32 %v3577, 16
        %v3608 = vrot.slane %v3606, 4
        %v3609 = vshll.u32 %v3577, 16
        %v3611 = vrot.slane %v3609, 5
        %v3612 = vor.u32 %v3608, %v3611
        %v3613 = vrot.slane %v3612, 4
        %v3615 = vshll.u32 %v3578, 16
        %v3617 = vrot.slane %v3615, 5
        %v3618 = vsel %vm1050, %v3613, %v3617
        %v3620 = vshrl.u32 %v3579, 16
        %v3622 = vrot.slane %v3620, 4
        %v3623 = vshll.u32 %v3579, 16
        %v3625 = vrot.slane %v3623, 5
        %v3626 = vor.u32 %v3622, %v3625
        %v3627 = vrot.slane %v3626, 4
        %v3629 = vshll.u32 %v3580, 16
        %v3631 = vrot.slane %v3629, 5
        %v3632 = vsel %vm1050, %v3627, %v3631
        %v3634 = vshrl.u32 %v3581, 16
        %v3636 = vrot.slane %v3634, 4
        %v3637 = vshll.u32 %v3581, 16
        %v3639 = vrot.slane %v3637, 5
        %v3640 = vor.u32 %v3636, %v3639
        %v3641 = vrot.slane %v3640, 4
        %v3643 = vshll.u32 %v3582, 16
        %v3645 = vrot.slane %v3643, 5
        %v3646 = vsel %vm1050, %v3641, %v3645
        %v3648 = vshrl.u32 %v3583, 16
        %v3650 = vrot.slane %v3648, 4
        %v3651 = vshll.u32 %v3583, 16
        %v3653 = vrot.slane %v3651, 5
        %v3654 = vor.u32 %v3650, %v3653
        %v3655 = vrot.slane %v3654, 4
        %v3657 = vshll.u32 %v3584, 16
        %v3659 = vrot.slane %v3657, 5
        %v3660 = vsel %vm1050, %v3655, %v3659
        %v3662 = vshrl.u32 %v3585, 16
        %v3664 = vrot.slane %v3662, 4
        %v3665 = vshll.u32 %v3585, 16
        %v3667 = vrot.slane %v3665, 5
        %v3668 = vor.u32 %v3664, %v3667
        %v3669 = vrot.slane %v3668, 4
        %v3671 = vshll.u32 %v3586, 16
        %v3673 = vrot.slane %v3671, 5
        %v3674 = vsel %vm1050, %v3669, %v3673
        %v3676 = vshrl.u32 %v3587, 16
        %v3678 = vrot.slane %v3676, 4
        %v3679 = vshll.u32 %v3587, 16
        %v3681 = vrot.slane %v3679, 5
        %v3682 = vor.u32 %v3678, %v3681
        %v3683 = vrot.slane %v3682, 4
        %v3685 = vshll.u32 %v3588, 16
        %v3687 = vrot.slane %v3685, 5
        %v3688 = vsel %vm1050, %v3683, %v3687
        %v3690 = vshrl.u32 %v3589, 16
        %v3692 = vrot.slane %v3690, 4
        %v3693 = vshll.u32 %v3589, 16
        %v3695 = vrot.slane %v3693, 5
        %v3696 = vor.u32 %v3692, %v3695
        %v3697 = vrot.slane %v3696, 4
        %v3699 = vshll.u32 %v3590, 16
        %v3701 = vrot.slane %v3699, 5
        %v3702 = vsel %vm1050, %v3697, %v3701
        %s3703 = scalar_lea.vmem [#allocation4], 448
        %v3704 = vld [vmem:[%s3703] sm:$0xf]
        %v3705 = vld [vmem:[%s3703 + $0x4] sm:$0xf]
        %v3706 = vld [vmem:[%s3703 + $0x8] sm:$0xf]
        %v3707 = vld [vmem:[%s3703 + $0xc] sm:$0xf]
        %v3708 = vld [vmem:[%s3703 + $0x10] sm:$0xf]
        %v3709 = vld [vmem:[%s3703 + $0x14] sm:$0xf]
        %v3710 = vld [vmem:[%s3703 + $0x18] sm:$0xf]
        %v3711 = vld [vmem:[%s3703 + $0x1c] sm:$0xf]
        %v3712 = vld [vmem:[%s3703 + $0x20] sm:$0xf]
        %v3713 = vld [vmem:[%s3703 + $0x24] sm:$0xf]
        %v3714 = vld [vmem:[%s3703 + $0x28] sm:$0xf]
        %v3715 = vld [vmem:[%s3703 + $0x2c] sm:$0xf]
        %v3716 = vld [vmem:[%s3703 + $0x30] sm:$0xf]
        %v3717 = vld [vmem:[%s3703 + $0x34] sm:$0xf]
        %v3718 = vld [vmem:[%s3703 + $0x38] sm:$0xf]
        %v3719 = vld [vmem:[%s3703 + $0x3c] sm:$0xf]
        %v3720 = vunpack.c.l.b16 %v3604
        %v3721 = vunpack.c.l.b16 %v3618
        %v3722 = vunpack.c.l.b16 %v3632
        %v3723 = vunpack.c.l.b16 %v3646
        %v3724 = vunpack.c.l.b16 %v3660
        %v3725 = vunpack.c.l.b16 %v3674
        %v3726 = vunpack.c.l.b16 %v3688
        %v3727 = vunpack.c.l.b16 %v3702
        %v3728 = vpack.c.b16 %v3721, %v3720
        %v3729 = vpack.c.b16 %v3723, %v3722
        %v3730 = vpack.c.b16 %v3725, %v3724
        %v3731 = vpack.c.b16 %v3727, %v3726
        %v3752 = vunpack.c.l.b16 %v3704
        %v3753 = vunpack.c.l.b16 %v3705
        %v3754 = vunpack.c.l.b16 %v3706
        %v3755 = vunpack.c.l.b16 %v3707
        %v3756 = vunpack.c.l.b16 %v3708
        %v3757 = vunpack.c.l.b16 %v3709
        %v3758 = vunpack.c.l.b16 %v3710
        %v3759 = vunpack.c.l.b16 %v3711
        %v3760 = vunpack.c.l.b16 %v3712
        %v3761 = vunpack.c.l.b16 %v3713
        %v3762 = vunpack.c.l.b16 %v3714
        %v3763 = vunpack.c.l.b16 %v3715
        %v3764 = vunpack.c.l.b16 %v3716
        %v3765 = vunpack.c.l.b16 %v3717
        %v3766 = vunpack.c.l.b16 %v3718
        %v3767 = vunpack.c.l.b16 %v3719
        %v3768 = vpack.c.b16 %v3753, %v3752
        %v3769 = vpack.c.b16 %v3755, %v3754
        %v3770 = vpack.c.b16 %v3757, %v3756
        %v3771 = vpack.c.b16 %v3759, %v3758
        %v3772 = vpack.c.b16 %v3761, %v3760
        %v3773 = vpack.c.b16 %v3763, %v3762
        %v3774 = vpack.c.b16 %v3765, %v3764
        %v3775 = vpack.c.b16 %v3767, %v3766
        %3784 = vmatprep.subr.bf16.mxu0 0
        %3785 = vmatpush1.bf16.msra.mxu0 %v3768
        %3786 = vmatprep.subr.bf16.mxu0 0
        %3787 = vmatpush1.bf16.msra.mxu0 %v3769
        %3788 = vmatprep.subr.bf16.mxu0 0
        %3789 = vmatpush1.bf16.msra.mxu0 %v3770
        %3790 = vmatprep.subr.bf16.mxu0 0
        %3791 = vmatpush1.bf16.msra.mxu0 %v3771
        %3792 = vmatprep.subr.bf16.mxu0 0
        %3793 = vmatpush1.bf16.msra.mxu0 %v3772
        %3794 = vmatprep.subr.bf16.mxu0 0
        %3795 = vmatpush1.bf16.msra.mxu0 %v3773
        %3796 = vmatprep.subr.bf16.mxu0 0
        %3797 = vmatpush1.bf16.msra.mxu0 %v3774
        %3798 = vmatprep.subr.bf16.mxu0 0
        %3799 = vmatpush1.bf16.msra.mxu0 %v3775
        %3800 = vmatprep.subr.bf16.mxu0 0
        %3801 = vmatpush1.bf16.msra.mxu0 0
        %3802 = vmatprep.subr.bf16.mxu0 0
        %3803 = vmatpush1.bf16.msra.mxu0 0
        %3804 = vmatprep.subr.bf16.mxu0 0
        %3805 = vmatpush1.bf16.msra.mxu0 0
        %3806 = vmatprep.subr.bf16.mxu0 0
        %3807 = vmatpush1.bf16.msra.mxu0 0
        %3808 = vmatprep.subr.bf16.mxu0 0
        %3809 = vmatpush1.bf16.msra.mxu0 0
        %3810 = vmatprep.subr.bf16.mxu0 0
        %3811 = vmatpush1.bf16.msra.mxu0 0
        %3812 = vmatprep.subr.bf16.mxu0 0
        %3813 = vmatpush1.bf16.msra.mxu0 0
        %3814 = vmatprep.subr.bf16.mxu0 0
        %3815 = vmatpush1.bf16.msra.mxu0 0
        %3816 = vmatprep.mubr.bf16.mxu0 0
        %3817 = vmatmul.mubr.bf16.gmra.mrb[0].mxu0 %v3728
        %v3818 = vpop.f32.mrb[0].mxu0
        %v3819 = vadd.f32 0.0, %v3818
        %v3820 = vpop.f32.mrb[0].mxu0
        %v3821 = vpop.f32.mrb[0].mxu0
        %v3822 = vadd.f32 0.0, %v3821
        %v3823 = vpop.f32.mrb[0].mxu0
        %3824 = vmatprep.mubr.bf16.mxu0 0
        %3825 = vmatmul.mubr.bf16.gmra.mrb[0].mxu0 %v3729
        %v3826 = vpop.f32.mrb[0].mxu0
        %v3827 = vadd.f32 0.0, %v3826
        %v3828 = vpop.f32.mrb[0].mxu0
        %v3829 = vpop.f32.mrb[0].mxu0
        %v3830 = vadd.f32 0.0, %v3829
        %v3831 = vpop.f32.mrb[0].mxu0
        %3832 = vmatprep.mubr.bf16.mxu0 0
        %3833 = vmatmul.mubr.bf16.gmra.mrb[0].mxu0 %v3730
        %v3834 = vpop.f32.mrb[0].mxu0
        %v3835 = vadd.f32 0.0, %v3834
        %v3836 = vpop.f32.mrb[0].mxu0
        %v3837 = vpop.f32.mrb[0].mxu0
        %v3838 = vadd.f32 0.0, %v3837
        %v3839 = vpop.f32.mrb[0].mxu0
        %3840 = vmatprep.mubr.bf16.mxu0 0
        %3841 = vmatmul.mubr.bf16.gmra.mrb[0].mxu0 %v3731
        %v3842 = vpop.f32.mrb[0].mxu0
        %v3843 = vadd.f32 0.0, %v3842
        %v3844 = vpop.f32.mrb[0].mxu0
        %v3845 = vpop.f32.mrb[0].mxu0
        %v3846 = vadd.f32 0.0, %v3845
        %v3847 = vpop.f32.mrb[0].mxu0
        %3848 = vdwg.mxu0
        %v3849 = vadd.f32 %v3396, %v3819
        %v3850 = vadd.f32 %v3397, %v3822
        %v3851 = vadd.f32 %v3398, %v3827
        %v3852 = vadd.f32 %v3399, %v3830
        %v3853 = vadd.f32 %v3400, %v3835
        %v3854 = vadd.f32 %v3401, %v3838
        %v3855 = vadd.f32 %v3402, %v3843
        %v3856 = vadd.f32 %v3403, %v3846
        %v3857 = vld [vmem:[%s3404] sm:$0xe]
        %v3858 = vld [vmem:[%s3404 + $0x8] sm:$0xe]
        %v3859 = vld [vmem:[%s3404 + $0x10] sm:$0xe]
        %v3860 = vld [vmem:[%s3404 + $0x18] sm:$0xe]
        %v3861 = vld [vmem:[%s3404 + $0x20] sm:$0xe]
        %v3862 = vld [vmem:[%s3404 + $0x28] sm:$0xe]
        %v3863 = vld [vmem:[%s3404 + $0x30] sm:$0xe]
        %v3864 = vld [vmem:[%s3404 + $0x38] sm:$0xe]
        %v3881 = vrot.slane %v3857, 5
        %v3882 = vrot.slane %v3881, 4
        %v3883 = vrot.slane %v3576, 5
        %v3884 = vsel %vm2305, %v3882, %v3883
        %v3885 = vrot.slane %v3858, 5
        %v3886 = vrot.slane %v3885, 4
        %v3887 = vrot.slane %v3578, 5
        %v3888 = vsel %vm2305, %v3886, %v3887
        %v3889 = vrot.slane %v3859, 5
        %v3890 = vrot.slane %v3889, 4
        %v3891 = vrot.slane %v3580, 5
        %v3892 = vsel %vm2305, %v3890, %v3891
        %v3893 = vrot.slane %v3860, 5
        %v3894 = vrot.slane %v3893, 4
        %v3895 = vrot.slane %v3582, 5
        %v3896 = vsel %vm2305, %v3894, %v3895
        %v3897 = vrot.slane %v3861, 5
        %v3898 = vrot.slane %v3897, 4
        %v3899 = vrot.slane %v3584, 5
        %v3900 = vsel %vm2305, %v3898, %v3899
        %v3901 = vrot.slane %v3862, 5
        %v3902 = vrot.slane %v3901, 4
        %v3903 = vrot.slane %v3586, 5
        %v3904 = vsel %vm2305, %v3902, %v3903
        %v3905 = vrot.slane %v3863, 5
        %v3906 = vrot.slane %v3905, 4
        %v3907 = vrot.slane %v3588, 5
        %v3908 = vsel %vm2305, %v3906, %v3907
        %v3909 = vrot.slane %v3864, 5
        %v3910 = vrot.slane %v3909, 4
        %v3911 = vrot.slane %v3590, 5
        %v3912 = vsel %vm2305, %v3910, %v3911
        %s3913 = scalar_lea.vmem [#allocation4], 512
        %v3914 = vld [vmem:[%s3913] sm:$0xf]
        %v3915 = vld [vmem:[%s3913 + $0x4] sm:$0xf]
        %v3916 = vld [vmem:[%s3913 + $0x8] sm:$0xf]
        %v3917 = vld [vmem:[%s3913 + $0xc] sm:$0xf]
        %v3918 = vld [vmem:[%s3913 + $0x10] sm:$0xf]
        %v3919 = vld [vmem:[%s3913 + $0x14] sm:$0xf]
        %v3920 = vld [vmem:[%s3913 + $0x18] sm:$0xf]
        %v3921 = vld [vmem:[%s3913 + $0x1c] sm:$0xf]
        %v3922 = vld [vmem:[%s3913 + $0x20] sm:$0xf]
        %v3923 = vld [vmem:[%s3913 + $0x24] sm:$0xf]
        %v3924 = vld [vmem:[%s3913 + $0x28] sm:$0xf]
        %v3925 = vld [vmem:[%s3913 + $0x2c] sm:$0xf]
        %v3926 = vld [vmem:[%s3913 + $0x30] sm:$0xf]
        %v3927 = vld [vmem:[%s3913 + $0x34] sm:$0xf]
        %v3928 = vld [vmem:[%s3913 + $0x38] sm:$0xf]
        %v3929 = vld [vmem:[%s3913 + $0x3c] sm:$0xf]
        %v3930 = vunpack.c.l.b16 %v3884
        %v3931 = vunpack.c.l.b16 %v3888
        %v3932 = vunpack.c.l.b16 %v3892
        %v3933 = vunpack.c.l.b16 %v3896
        %v3934 = vunpack.c.l.b16 %v3900
        %v3935 = vunpack.c.l.b16 %v3904
        %v3936 = vunpack.c.l.b16 %v3908
        %v3937 = vunpack.c.l.b16 %v3912
        %v3938 = vpack.c.b16 %v3931, %v3930
        %v3939 = vpack.c.b16 %v3933, %v3932
        %v3940 = vpack.c.b16 %v3935, %v3934
        %v3941 = vpack.c.b16 %v3937, %v3936
        %v3962 = vunpack.c.l.b16 %v3914
        %v3963 = vunpack.c.l.b16 %v3915
        %v3964 = vunpack.c.l.b16 %v3916
        %v3965 = vunpack.c.l.b16 %v3917
        %v3966 = vunpack.c.l.b16 %v3918
        %v3967 = vunpack.c.l.b16 %v3919
        %v3968 = vunpack.c.l.b16 %v3920
        %v3969 = vunpack.c.l.b16 %v3921
        %v3970 = vunpack.c.l.b16 %v3922
        %v3971 = vunpack.c.l.b16 %v3923
        %v3972 = vunpack.c.l.b16 %v3924
        %v3973 = vunpack.c.l.b16 %v3925
        %v3974 = vunpack.c.l.b16 %v3926
        %v3975 = vunpack.c.l.b16 %v3927
        %v3976 = vunpack.c.l.b16 %v3928
        %v3977 = vunpack.c.l.b16 %v3929
        %v3978 = vpack.c.b16 %v3963, %v3962
        %v3979 = vpack.c.b16 %v3965, %v3964
        %v3980 = vpack.c.b16 %v3967, %v3966
        %v3981 = vpack.c.b16 %v3969, %v3968
        %v3982 = vpack.c.b16 %v3971, %v3970
        %v3983 = vpack.c.b16 %v3973, %v3972
        %v3984 = vpack.c.b16 %v3975, %v3974
        %v3985 = vpack.c.b16 %v3977, %v3976
        %3994 = vmatprep.subr.bf16.mxu0 0
        %3995 = vmatpush1.bf16.msra.mxu0 %v3978
        %3996 = vmatprep.subr.bf16.mxu0 0
        %3997 = vmatpush1.bf16.msra.mxu0 %v3979
        %3998 = vmatprep.subr.bf16.mxu0 0
        %3999 = vmatpush1.bf16.msra.mxu0 %v3980
        %4000 = vmatprep.subr.bf16.mxu0 0
        %4001 = vmatpush1.bf16.msra.mxu0 %v3981
        %4002 = vmatprep.subr.bf16.mxu0 0
        %4003 = vmatpush1.bf16.msra.mxu0 %v3982
        %4004 = vmatprep.subr.bf16.mxu0 0
        %4005 = vmatpush1.bf16.msra.mxu0 %v3983
        %4006 = vmatprep.subr.bf16.mxu0 0
        %4007 = vmatpush1.bf16.msra.mxu0 %v3984
        %4008 = vmatprep.subr.bf16.mxu0 0
        %4009 = vmatpush1.bf16.msra.mxu0 %v3985
        %4010 = vmatprep.subr.bf16.mxu0 0
        %4011 = vmatpush1.bf16.msra.mxu0 0
        %4012 = vmatprep.subr.bf16.mxu0 0
        %4013 = vmatpush1.bf16.msra.mxu0 0
        %4014 = vmatprep.subr.bf16.mxu0 0
        %4015 = vmatpush1.bf16.msra.mxu0 0
        %4016 = vmatprep.subr.bf16.mxu0 0
        %4017 = vmatpush1.bf16.msra.mxu0 0
        %4018 = vmatprep.subr.bf16.mxu0 0
        %4019 = vmatpush1.bf16.msra.mxu0 0
        %4020 = vmatprep.subr.bf16.mxu0 0
        %4021 = vmatpush1.bf16.msra.mxu0 0
        %4022 = vmatprep.subr.bf16.mxu0 0
        %4023 = vmatpush1.bf16.msra.mxu0 0
        %4024 = vmatprep.subr.bf16.mxu0 0
        %4025 = vmatpush1.bf16.msra.mxu0 0
        %4026 = vmatprep.mubr.bf16.mxu0 0
        %4027 = vmatmul.mubr.bf16.gmra.mrb[0].mxu0 %v3938
        %v4028 = vpop.f32.mrb[0].mxu0
        %v4029 = vadd.f32 0.0, %v4028
        %v4030 = vpop.f32.mrb[0].mxu0
        %v4031 = vpop.f32.mrb[0].mxu0
        %v4032 = vadd.f32 0.0, %v4031
        %v4033 = vpop.f32.mrb[0].mxu0
        %4034 = vmatprep.mubr.bf16.mxu0 0
        %4035 = vmatmul.mubr.bf16.gmra.mrb[0].mxu0 %v3939
        %v4036 = vpop.f32.mrb[0].mxu0
        %v4037 = vadd.f32 0.0, %v4036
        %v4038 = vpop.f32.mrb[0].mxu0
        %v4039 = vpop.f32.mrb[0].mxu0
        %v4040 = vadd.f32 0.0, %v4039
        %v4041 = vpop.f32.mrb[0].mxu0
        %4042 = vmatprep.mubr.bf16.mxu0 0
        %4043 = vmatmul.mubr.bf16.gmra.mrb[0].mxu0 %v3940
        %v4044 = vpop.f32.mrb[0].mxu0
        %v4045 = vadd.f32 0.0, %v4044
        %v4046 = vpop.f32.mrb[0].mxu0
        %v4047 = vpop.f32.mrb[0].mxu0
        %v4048 = vadd.f32 0.0, %v4047
        %v4049 = vpop.f32.mrb[0].mxu0
        %4050 = vmatprep.mubr.bf16.mxu0 0
        %4051 = vmatmul.mubr.bf16.gmra.mrb[0].mxu0 %v3941
        %v4052 = vpop.f32.mrb[0].mxu0
        %v4053 = vadd.f32 0.0, %v4052
        %v4054 = vpop.f32.mrb[0].mxu0
        %v4055 = vpop.f32.mrb[0].mxu0
        %v4056 = vadd.f32 0.0, %v4055
        %v4057 = vpop.f32.mrb[0].mxu0
        %4058 = vdwg.mxu0
        %v4059 = vadd.f32 %v3567, %v4029
        %v4060 = vadd.f32 %v3568, %v4032
        %v4061 = vadd.f32 %v3569, %v4037
        %v4062 = vadd.f32 %v3570, %v4040
        %v4063 = vadd.f32 %v3571, %v4045
        %v4064 = vadd.f32 %v3572, %v4048
        %v4065 = vadd.f32 %v3573, %v4053
        %v4066 = vadd.f32 %v3574, %v4056
        %v4067 = vadd.f32 %v4059, %v3849
        %v4068 = vadd.f32 %v4060, %v3850
        %v4069 = vadd.f32 %v4061, %v3851
        %v4070 = vadd.f32 %v4062, %v3852
        %v4071 = vadd.f32 %v4063, %v3853
        %v4072 = vadd.f32 %v4064, %v3854
        %v4073 = vadd.f32 %v4065, %v3855
        %v4074 = vadd.f32 %v4066, %v3856
        %v4075 = vld [vmem:[%s4] sm:$0x1]
        %v4077 = vlaneseq
        %v4078 = vshrl.u32 %v4077, 7
        %v4079 = vsub.s32 0, %v4078
        %v4080 = vrot.slane %v4075, %v4079
        %v4082 = vadd.f32 %v4067, %v4080
        %v4083 = vadd.f32 %v4068, %v4080
        %v4084 = vadd.f32 %v4069, %v4080
        %v4085 = vadd.f32 %v4070, %v4080
        %v4086 = vadd.f32 %v4071, %v4080
        %v4087 = vadd.f32 %v4072, %v4080
        %v4088 = vadd.f32 %v4073, %v4080
        %v4089 = vadd.f32 %v4074, %v4080
        %v4090 = vmax.f32 %v4082, 0.0
        %v4091 = vmax.f32 %v4083, 0.0
        %v4092 = vmax.f32 %v4084, 0.0
        %v4093 = vmax.f32 %v4085, 0.0
        %v4094 = vmax.f32 %v4086, 0.0
        %v4095 = vmax.f32 %v4087, 0.0
        %v4096 = vmax.f32 %v4088, 0.0
        %v4097 = vmax.f32 %v4089, 0.0
        %4098 = vst [vmem:[#allocation3] sm:$0xf] 0
        %4099 = vst [vmem:[#allocation3 + $0x4] sm:$0x1] 0
        %s4100 = scalar_lea.vmem [#allocation3], 72
        %4101 = vst [vmem:[%s4100] sm:$0xf] 0
        %4102 = vst [vmem:[%s4100 + $0x4] sm:$0x1] 0
        %v4103 = vld [vmem:[#allocation3] sm:$0x1]
        %v4104 = vsel %vm1900, 0, %v4103
        %4105 = vst [vmem:[#allocation3] sm:$0x1] %v4104
        %v4106 = vld [vmem:[#allocation3 + $0x8] sm:$0x1]
        %v4107 = vsel %vm1900, 0, %v4106
        %4108 = vst [vmem:[#allocation3 + $0x8] sm:$0x1] %v4107
        %v4109 = vld [vmem:[#allocation3 + $0x10] sm:$0x1]
        %v4110 = vsel %vm1900, 0, %v4109
        %4111 = vst [vmem:[#allocation3 + $0x10] sm:$0x1] %v4110
        %v4112 = vld [vmem:[#allocation3 + $0x18] sm:$0x1]
        %v4113 = vsel %vm1900, 0, %v4112
        %4114 = vst [vmem:[#allocation3 + $0x18] sm:$0x1] %v4113
        %v4115 = vld [vmem:[#allocation3 + $0x20] sm:$0x1]
        %v4116 = vsel %vm1900, 0, %v4115
        %4117 = vst [vmem:[#allocation3 + $0x20] sm:$0x1] %v4116
        %v4118 = vld [vmem:[#allocation3 + $0x28] sm:$0x1]
        %v4119 = vsel %vm1900, 0, %v4118
        %4120 = vst [vmem:[#allocation3 + $0x28] sm:$0x1] %v4119
        %v4121 = vld [vmem:[#allocation3 + $0x30] sm:$0x1]
        %v4122 = vsel %vm1900, 0, %v4121
        %4123 = vst [vmem:[#allocation3 + $0x30] sm:$0x1] %v4122
        %v4124 = vld [vmem:[#allocation3 + $0x38] sm:$0x1]
        %v4125 = vsel %vm1900, 0, %v4124
        %4126 = vst [vmem:[#allocation3 + $0x38] sm:$0x1] %v4125
        %v4127 = vld [vmem:[#allocation3 + $0x40] sm:$0x1]
        %v4128 = vsel %vm1900, 0, %v4127
        %4129 = vst [vmem:[#allocation3 + $0x40] sm:$0x1] %v4128
        %v4130 = vld [vmem:[#allocation3 + $0x48] sm:$0x1]
        %v4131 = vsel %vm1900, 0, %v4130
        %4132 = vst [vmem:[#allocation3 + $0x48] sm:$0x1] %v4131
        %v4133 = vld [vmem:[#allocation3 + $0x4] sm:$0x1]
        %v4134 = vsel %vm1932, 0, %v4133
        %4135 = vst [vmem:[#allocation3 + $0x4] sm:$0x1] %v4134
        %v4136 = vld [vmem:[#allocation3 + $0xc] sm:$0x1]
        %v4137 = vsel %vm1932, 0, %v4136
        %4138 = vst [vmem:[#allocation3 + $0xc] sm:$0x1] %v4137
        %v4139 = vld [vmem:[#allocation3 + $0x14] sm:$0x1]
        %v4140 = vsel %vm1932, 0, %v4139
        %4141 = vst [vmem:[#allocation3 + $0x14] sm:$0x1] %v4140
        %v4142 = vld [vmem:[#allocation3 + $0x1c] sm:$0x1]
        %v4143 = vsel %vm1932, 0, %v4142
        %4144 = vst [vmem:[#allocation3 + $0x1c] sm:$0x1] %v4143
        %v4145 = vld [vmem:[#allocation3 + $0x24] sm:$0x1]
        %v4146 = vsel %vm1932, 0, %v4145
        %4147 = vst [vmem:[#allocation3 + $0x24] sm:$0x1] %v4146
        %v4148 = vld [vmem:[#allocation3 + $0x2c] sm:$0x1]
        %v4149 = vsel %vm1932, 0, %v4148
        %4150 = vst [vmem:[#allocation3 + $0x2c] sm:$0x1] %v4149
        %v4151 = vld [vmem:[#allocation3 + $0x34] sm:$0x1]
        %v4152 = vsel %vm1932, 0, %v4151
        %4153 = vst [vmem:[#allocation3 + $0x34] sm:$0x1] %v4152
        %v4154 = vld [vmem:[#allocation3 + $0x3c] sm:$0x1]
        %v4155 = vsel %vm1932, 0, %v4154
        %4156 = vst [vmem:[#allocation3 + $0x3c] sm:$0x1] %v4155
        %v4157 = vld [vmem:[#allocation3 + $0x44] sm:$0x1]
        %v4158 = vsel %vm1932, 0, %v4157
        %4159 = vst [vmem:[#allocation3 + $0x44] sm:$0x1] %v4158
        %v4160 = vld [vmem:[#allocation3 + $0x4c] sm:$0x1]
        %v4161 = vsel %vm1932, 0, %v4160
        %4162 = vst [vmem:[#allocation3 + $0x4c] sm:$0x1] %v4161
        %v4163 = vpack.c.bf16 %v4091, %v4090
        %v4164 = vpack.c.bf16 %v4093, %v4092
        %v4165 = vpack.c.bf16 %v4095, %v4094
        %v4166 = vpack.c.bf16 %v4097, %v4096
        %v4171 = vunpack.c.l.b16 %v4163
        %v4172 = vunpack.c.h.b16 %v4163
        %v4173 = vunpack.c.l.b16 %v4164
        %v4174 = vunpack.c.h.b16 %v4164
        %v4175 = vunpack.c.l.b16 %v4165
        %v4176 = vunpack.c.h.b16 %v4165
        %v4177 = vunpack.c.l.b16 %v4166
        %v4178 = vunpack.c.h.b16 %v4166
        %v4179 = vpack.c.b16 %v4171, %v4171
        %v4180 = vpack.c.b16 %v4172, %v4172
        %v4181 = vpack.c.b16 %v4173, %v4173
        %v4182 = vpack.c.b16 %v4174, %v4174
        %v4183 = vpack.c.b16 %v4175, %v4175
        %v4184 = vpack.c.b16 %v4176, %v4176
        %v4185 = vpack.c.b16 %v4177, %v4177
        %v4186 = vpack.c.b16 %v4178, %v4178
        %v4188 = vshrl.u32 %v4179, 16
        %v4190 = vrot.slane %v4188, 7
        %v4191 = vshll.u32 %v4179, 16
        %v4193 = vor.u32 %v4190, %v4191
        %v4194 = vrot.slane %v4190, 4
        %v4196 = vshrl.u32 %v4180, 16
        %v4198 = vrot.slane %v4196, 7
        %v4199 = vshll.u32 %v4180, 16
        %v4201 = vor.u32 %v4198, %v4199
        %v4202 = vrot.slane %v4198, 4
        %v4204 = vshrl.u32 %v4181, 16
        %v4206 = vrot.slane %v4204, 7
        %v4207 = vshll.u32 %v4181, 16
        %v4209 = vor.u32 %v4206, %v4207
        %v4210 = vrot.slane %v4206, 4
        %v4212 = vshrl.u32 %v4182, 16
        %v4214 = vrot.slane %v4212, 7
        %v4215 = vshll.u32 %v4182, 16
        %v4217 = vor.u32 %v4214, %v4215
        %v4218 = vrot.slane %v4214, 4
        %v4220 = vshrl.u32 %v4183, 16
        %v4222 = vrot.slane %v4220, 7
        %v4223 = vshll.u32 %v4183, 16
        %v4225 = vor.u32 %v4222, %v4223
        %v4226 = vrot.slane %v4222, 4
        %v4228 = vshrl.u32 %v4184, 16
        %v4230 = vrot.slane %v4228, 7
        %v4231 = vshll.u32 %v4184, 16
        %v4233 = vor.u32 %v4230, %v4231
        %v4234 = vrot.slane %v4230, 4
        %v4236 = vshrl.u32 %v4185, 16
        %v4238 = vrot.slane %v4236, 7
        %v4239 = vshll.u32 %v4185, 16
        %v4241 = vor.u32 %v4238, %v4239
        %v4242 = vrot.slane %v4238, 4
        %v4244 = vshrl.u32 %v4186, 16
        %v4246 = vrot.slane %v4244, 7
        %v4247 = vshll.u32 %v4186, 16
        %v4249 = vor.u32 %v4246, %v4247
        %v4250 = vrot.slane %v4246, 4
        %s4267 = scalar_lea.vmem [#allocation3], 8
        %v4268 = vld [vmem:[%s4267] sm:$0xf]
        %v4269 = vsel %vm2069, %v4193, %v4268
        %4270 = vst [vmem:[%s4267] sm:$0xf] %v4269
        %v4271 = vld [vmem:[%s4267 + $0x4] sm:$0x1]
        %v4272 = vsel %vm1900, %v4194, %v4271
        %4273 = vst [vmem:[%s4267 + $0x4] sm:$0x1] %v4272
        %v4274 = vld [vmem:[%s4267 + $0x8] sm:$0xf]
        %v4275 = vsel %vm2069, %v4201, %v4274
        %4276 = vst [vmem:[%s4267 + $0x8] sm:$0xf] %v4275
        %v4277 = vld [vmem:[%s4267 + $0xc] sm:$0x1]
        %v4278 = vsel %vm1900, %v4202, %v4277
        %4279 = vst [vmem:[%s4267 + $0xc] sm:$0x1] %v4278
        %v4280 = vld [vmem:[%s4267 + $0x10] sm:$0xf]
        %v4281 = vsel %vm2069, %v4209, %v4280
        %4282 = vst [vmem:[%s4267 + $0x10] sm:$0xf] %v4281
        %v4283 = vld [vmem:[%s4267 + $0x14] sm:$0x1]
        %v4284 = vsel %vm1900, %v4210, %v4283
        %4285 = vst [vmem:[%s4267 + $0x14] sm:$0x1] %v4284
        %v4286 = vld [vmem:[%s4267 + $0x18] sm:$0xf]
        %v4287 = vsel %vm2069, %v4217, %v4286
        %4288 = vst [vmem:[%s4267 + $0x18] sm:$0xf] %v4287
        %v4289 = vld [vmem:[%s4267 + $0x1c] sm:$0x1]
        %v4290 = vsel %vm1900, %v4218, %v4289
        %4291 = vst [vmem:[%s4267 + $0x1c] sm:$0x1] %v4290
        %v4292 = vld [vmem:[%s4267 + $0x20] sm:$0xf]
        %v4293 = vsel %vm2069, %v4225, %v4292
        %4294 = vst [vmem:[%s4267 + $0x20] sm:$0xf] %v4293
        %v4295 = vld [vmem:[%s4267 + $0x24] sm:$0x1]
        %v4296 = vsel %vm1900, %v4226, %v4295
        %4297 = vst [vmem:[%s4267 + $0x24] sm:$0x1] %v4296
        %v4298 = vld [vmem:[%s4267 + $0x28] sm:$0xf]
        %v4299 = vsel %vm2069, %v4233, %v4298
        %4300 = vst [vmem:[%s4267 + $0x28] sm:$0xf] %v4299
        %v4301 = vld [vmem:[%s4267 + $0x2c] sm:$0x1]
        %v4302 = vsel %vm1900, %v4234, %v4301
        %4303 = vst [vmem:[%s4267 + $0x2c] sm:$0x1] %v4302
        %v4304 = vld [vmem:[%s4267 + $0x30] sm:$0xf]
        %v4305 = vsel %vm2069, %v4241, %v4304
        %4306 = vst [vmem:[%s4267 + $0x30] sm:$0xf] %v4305
        %v4307 = vld [vmem:[%s4267 + $0x34] sm:$0x1]
        %v4308 = vsel %vm1900, %v4242, %v4307
        %4309 = vst [vmem:[%s4267 + $0x34] sm:$0x1] %v4308
        %v4310 = vld [vmem:[%s4267 + $0x38] sm:$0xf]
        %v4311 = vsel %vm2069, %v4249, %v4310
        %4312 = vst [vmem:[%s4267 + $0x38] sm:$0xf] %v4311
        %v4313 = vld [vmem:[%s4267 + $0x3c] sm:$0x1]
        %v4314 = vsel %vm1900, %v4250, %v4313
        %4315 = vst [vmem:[%s4267 + $0x3c] sm:$0x1] %v4314
        %v4316 = vld [vmem:[#allocation3] sm:$0xf]
        %v4317 = vld [vmem:[#allocation3 + $0x8] sm:$0xf]
        %v4318 = vld [vmem:[#allocation3 + $0x10] sm:$0xf]
        %v4319 = vld [vmem:[#allocation3 + $0x18] sm:$0xf]
        %v4320 = vld [vmem:[#allocation3 + $0x20] sm:$0xf]
        %v4321 = vld [vmem:[#allocation3 + $0x28] sm:$0xf]
        %v4322 = vld [vmem:[#allocation3 + $0x30] sm:$0xf]
        %v4323 = vld [vmem:[#allocation3 + $0x38] sm:$0xf]
        %v4324 = vld [vmem:[#allocation7] sm:$0xf]
        %v4325 = vld [vmem:[#allocation7 + $0x4] sm:$0xf]
        %v4326 = vld [vmem:[#allocation7 + $0x8] sm:$0xf]
        %v4327 = vld [vmem:[#allocation7 + $0xc] sm:$0xf]
        %v4328 = vld [vmem:[#allocation7 + $0x10] sm:$0xf]
        %v4329 = vld [vmem:[#allocation7 + $0x14] sm:$0xf]
        %v4330 = vld [vmem:[#allocation7 + $0x18] sm:$0xf]
        %v4331 = vld [vmem:[#allocation7 + $0x1c] sm:$0xf]
        %v4332 = vld [vmem:[#allocation7 + $0x20] sm:$0xf]
        %v4333 = vld [vmem:[#allocation7 + $0x24] sm:$0xf]
        %v4334 = vld [vmem:[#allocation7 + $0x28] sm:$0xf]
        %v4335 = vld [vmem:[#allocation7 + $0x2c] sm:$0xf]
        %v4336 = vld [vmem:[#allocation7 + $0x30] sm:$0xf]
        %v4337 = vld [vmem:[#allocation7 + $0x34] sm:$0xf]
        %v4338 = vld [vmem:[#allocation7 + $0x38] sm:$0xf]
        %v4339 = vld [vmem:[#allocation7 + $0x3c] sm:$0xf]
        %v4340 = vld [vmem:[#allocation3 + $0x4] sm:$0x1]
        %v4341 = vld [vmem:[#allocation3 + $0xc] sm:$0x1]
        %v4342 = vld [vmem:[#allocation3 + $0x14] sm:$0x1]
        %v4343 = vld [vmem:[#allocation3 + $0x1c] sm:$0x1]
        %v4344 = vld [vmem:[#allocation3 + $0x24] sm:$0x1]
        %v4345 = vld [vmem:[#allocation3 + $0x2c] sm:$0x1]
        %v4346 = vld [vmem:[#allocation3 + $0x34] sm:$0x1]
        %v4347 = vld [vmem:[#allocation3 + $0x3c] sm:$0x1]
        %v4349 = vshrl.u32 %v4316, 16
        %v4351 = vrot.slane %v4349, 4
        %v4352 = vshll.u32 %v4316, 16
        %v4354 = vrot.slane %v4352, 5
        %v4355 = vor.u32 %v4351, %v4354
        %v4356 = vrot.slane %v4355, 4
        %v4358 = vshll.u32 %v4340, 16
        %v4360 = vrot.slane %v4358, 5
        %v4361 = vsel %vm1050, %v4356, %v4360
        %v4363 = vshrl.u32 %v4317, 16
        %v4365 = vrot.slane %v4363, 4
        %v4366 = vshll.u32 %v4317, 16
        %v4368 = vrot.slane %v4366, 5
        %v4369 = vor.u32 %v4365, %v4368
        %v4370 = vrot.slane %v4369, 4
        %v4372 = vshll.u32 %v4341, 16
        %v4374 = vrot.slane %v4372, 5
        %v4375 = vsel %vm1050, %v4370, %v4374
        %v4377 = vshrl.u32 %v4318, 16
        %v4379 = vrot.slane %v4377, 4
        %v4380 = vshll.u32 %v4318, 16
        %v4382 = vrot.slane %v4380, 5
        %v4383 = vor.u32 %v4379, %v4382
        %v4384 = vrot.slane %v4383, 4
        %v4386 = vshll.u32 %v4342, 16
        %v4388 = vrot.slane %v4386, 5
        %v4389 = vsel %vm1050, %v4384, %v4388
        %v4391 = vshrl.u32 %v4319, 16
        %v4393 = vrot.slane %v4391, 4
        %v4394 = vshll.u32 %v4319, 16
        %v4396 = vrot.slane %v4394, 5
        %v4397 = vor.u32 %v4393, %v4396
        %v4398 = vrot.slane %v4397, 4
        %v4400 = vshll.u32 %v4343, 16
        %v4402 = vrot.slane %v4400, 5
        %v4403 = vsel %vm1050, %v4398, %v4402
        %v4405 = vshrl.u32 %v4320, 16
        %v4407 = vrot.slane %v4405, 4
        %v4408 = vshll.u32 %v4320, 16
        %v4410 = vrot.slane %v4408, 5
        %v4411 = vor.u32 %v4407, %v4410
        %v4412 = vrot.slane %v4411, 4
        %v4414 = vshll.u32 %v4344, 16
        %v4416 = vrot.slane %v4414, 5
        %v4417 = vsel %vm1050, %v4412, %v4416
        %v4419 = vshrl.u32 %v4321, 16
        %v4421 = vrot.slane %v4419, 4
        %v4422 = vshll.u32 %v4321, 16
        %v4424 = vrot.slane %v4422, 5
        %v4425 = vor.u32 %v4421, %v4424
        %v4426 = vrot.slane %v4425, 4
        %v4428 = vshll.u32 %v4345, 16
        %v4430 = vrot.slane %v4428, 5
        %v4431 = vsel %vm1050, %v4426, %v4430
        %v4433 = vshrl.u32 %v4322, 16
        %v4435 = vrot.slane %v4433, 4
        %v4436 = vshll.u32 %v4322, 16
        %v4438 = vrot.slane %v4436, 5
        %v4439 = vor.u32 %v4435, %v4438
        %v4440 = vrot.slane %v4439, 4
        %v4442 = vshll.u32 %v4346, 16
        %v4444 = vrot.slane %v4442, 5
        %v4445 = vsel %vm1050, %v4440, %v4444
        %v4447 = vshrl.u32 %v4323, 16
        %v4449 = vrot.slane %v4447, 4
        %v4450 = vshll.u32 %v4323, 16
        %v4452 = vrot.slane %v4450, 5
        %v4453 = vor.u32 %v4449, %v4452
        %v4454 = vrot.slane %v4453, 4
        %v4456 = vshll.u32 %v4347, 16
        %v4458 = vrot.slane %v4456, 5
        %v4459 = vsel %vm1050, %v4454, %v4458
        %s4460 = scalar_lea.vmem [#allocation7], 64
        %v4461 = vld [vmem:[%s4460] sm:$0xf]
        %v4462 = vld [vmem:[%s4460 + $0x4] sm:$0xf]
        %v4463 = vld [vmem:[%s4460 + $0x8] sm:$0xf]
        %v4464 = vld [vmem:[%s4460 + $0xc] sm:$0xf]
        %v4465 = vld [vmem:[%s4460 + $0x10] sm:$0xf]
        %v4466 = vld [vmem:[%s4460 + $0x14] sm:$0xf]
        %v4467 = vld [vmem:[%s4460 + $0x18] sm:$0xf]
        %v4468 = vld [vmem:[%s4460 + $0x1c] sm:$0xf]
        %v4469 = vld [vmem:[%s4460 + $0x20] sm:$0xf]
        %v4470 = vld [vmem:[%s4460 + $0x24] sm:$0xf]
        %v4471 = vld [vmem:[%s4460 + $0x28] sm:$0xf]
        %v4472 = vld [vmem:[%s4460 + $0x2c] sm:$0xf]
        %v4473 = vld [vmem:[%s4460 + $0x30] sm:$0xf]
        %v4474 = vld [vmem:[%s4460 + $0x34] sm:$0xf]
        %v4475 = vld [vmem:[%s4460 + $0x38] sm:$0xf]
        %v4476 = vld [vmem:[%s4460 + $0x3c] sm:$0xf]
        %v4477 = vld [vmem:[#allocation3] sm:$0xe]
        %v4478 = vld [vmem:[#allocation3 + $0x8] sm:$0xe]
        %v4479 = vld [vmem:[#allocation3 + $0x10] sm:$0xe]
        %v4480 = vld [vmem:[#allocation3 + $0x18] sm:$0xe]
        %v4481 = vld [vmem:[#allocation3 + $0x20] sm:$0xe]
        %v4482 = vld [vmem:[#allocation3 + $0x28] sm:$0xe]
        %v4483 = vld [vmem:[#allocation3 + $0x30] sm:$0xe]
        %v4484 = vld [vmem:[#allocation3 + $0x38] sm:$0xe]
        %v4501 = vrot.slane %v4477, 5
        %v4502 = vrot.slane %v4501, 4
        %v4503 = vrot.slane %v4340, 5
        %v4504 = vsel %vm2305, %v4502, %v4503
        %v4505 = vrot.slane %v4478, 5
        %v4506 = vrot.slane %v4505, 4
        %v4507 = vrot.slane %v4341, 5
        %v4508 = vsel %vm2305, %v4506, %v4507
        %v4509 = vrot.slane %v4479, 5
        %v4510 = vrot.slane %v4509, 4
        %v4511 = vrot.slane %v4342, 5
        %v4512 = vsel %vm2305, %v4510, %v4511
        %v4513 = vrot.slane %v4480, 5
        %v4514 = vrot.slane %v4513, 4
        %v4515 = vrot.slane %v4343, 5
        %v4516 = vsel %vm2305, %v4514, %v4515
        %v4517 = vrot.slane %v4481, 5
        %v4518 = vrot.slane %v4517, 4
        %v4519 = vrot.slane %v4344, 5
        %v4520 = vsel %vm2305, %v4518, %v4519
        %v4521 = vrot.slane %v4482, 5
        %v4522 = vrot.slane %v4521, 4
        %v4523 = vrot.slane %v4345, 5
        %v4524 = vsel %vm2305, %v4522, %v4523
        %v4525 = vrot.slane %v4483, 5
        %v4526 = vrot.slane %v4525, 4
        %v4527 = vrot.slane %v4346, 5
        %v4528 = vsel %vm2305, %v4526, %v4527
        %v4529 = vrot.slane %v4484, 5
        %v4530 = vrot.slane %v4529, 4
        %v4531 = vrot.slane %v4347, 5
        %v4532 = vsel %vm2305, %v4530, %v4531
        %s4533 = scalar_lea.vmem [#allocation7], 128
        %v4534 = vld [vmem:[%s4533] sm:$0xf]
        %v4535 = vld [vmem:[%s4533 + $0x4] sm:$0xf]
        %v4536 = vld [vmem:[%s4533 + $0x8] sm:$0xf]
        %v4537 = vld [vmem:[%s4533 + $0xc] sm:$0xf]
        %v4538 = vld [vmem:[%s4533 + $0x10] sm:$0xf]
        %v4539 = vld [vmem:[%s4533 + $0x14] sm:$0xf]
        %v4540 = vld [vmem:[%s4533 + $0x18] sm:$0xf]
        %v4541 = vld [vmem:[%s4533 + $0x1c] sm:$0xf]
        %v4542 = vld [vmem:[%s4533 + $0x20] sm:$0xf]
        %v4543 = vld [vmem:[%s4533 + $0x24] sm:$0xf]
        %v4544 = vld [vmem:[%s4533 + $0x28] sm:$0xf]
        %v4545 = vld [vmem:[%s4533 + $0x2c] sm:$0xf]
        %v4546 = vld [vmem:[%s4533 + $0x30] sm:$0xf]
        %v4547 = vld [vmem:[%s4533 + $0x34] sm:$0xf]
        %v4548 = vld [vmem:[%s4533 + $0x38] sm:$0xf]
        %v4549 = vld [vmem:[%s4533 + $0x3c] sm:$0xf]
        %v4550 = vunpack.c.l.b16 %v4504
        %v4551 = vunpack.c.l.b16 %v4508
        %v4552 = vunpack.c.l.b16 %v4512
        %v4553 = vunpack.c.l.b16 %v4516
        %v4554 = vunpack.c.l.b16 %v4520
        %v4555 = vunpack.c.l.b16 %v4524
        %v4556 = vunpack.c.l.b16 %v4528
        %v4557 = vunpack.c.l.b16 %v4532
        %v4558 = vpack.c.b16 %v4551, %v4550
        %v4559 = vpack.c.b16 %v4553, %v4552
        %v4560 = vpack.c.b16 %v4555, %v4554
        %v4561 = vpack.c.b16 %v4557, %v4556
        %v4582 = vunpack.c.l.b16 %v4534
        %v4583 = vunpack.c.l.b16 %v4535
        %v4584 = vunpack.c.l.b16 %v4536
        %v4585 = vunpack.c.l.b16 %v4537
        %v4586 = vunpack.c.l.b16 %v4538
        %v4587 = vunpack.c.l.b16 %v4539
        %v4588 = vunpack.c.l.b16 %v4540
        %v4589 = vunpack.c.l.b16 %v4541
        %v4590 = vunpack.c.l.b16 %v4542
        %v4591 = vunpack.c.l.b16 %v4543
        %v4592 = vunpack.c.l.b16 %v4544
        %v4593 = vunpack.c.l.b16 %v4545
        %v4594 = vunpack.c.l.b16 %v4546
        %v4595 = vunpack.c.l.b16 %v4547
        %v4596 = vunpack.c.l.b16 %v4548
        %v4597 = vunpack.c.l.b16 %v4549
        %v4598 = vpack.c.b16 %v4583, %v4582
        %v4599 = vpack.c.b16 %v4585, %v4584
        %v4600 = vpack.c.b16 %v4587, %v4586
        %v4601 = vpack.c.b16 %v4589, %v4588
        %v4602 = vpack.c.b16 %v4591, %v4590
        %v4603 = vpack.c.b16 %v4593, %v4592
        %v4604 = vpack.c.b16 %v4595, %v4594
        %v4605 = vpack.c.b16 %v4597, %v4596
        %4614 = vmatprep.subr.bf16.mxu0 0
        %4615 = vmatpush1.bf16.msra.mxu0 %v4598
        %4616 = vmatprep.subr.bf16.mxu0 0
        %4617 = vmatpush1.bf16.msra.mxu0 %v4599
        %4618 = vmatprep.subr.bf16.mxu0 0
        %4619 = vmatpush1.bf16.msra.mxu0 %v4600
        %4620 = vmatprep.subr.bf16.mxu0 0
        %4621 = vmatpush1.bf16.msra.mxu0 %v4601
        %4622 = vmatprep.subr.bf16.mxu0 0
        %4623 = vmatpush1.bf16.msra.mxu0 %v4602
        %4624 = vmatprep.subr.bf16.mxu0 0
        %4625 = vmatpush1.bf16.msra.mxu0 %v4603
        %4626 = vmatprep.subr.bf16.mxu0 0
        %4627 = vmatpush1.bf16.msra.mxu0 %v4604
        %4628 = vmatprep.subr.bf16.mxu0 0
        %4629 = vmatpush1.bf16.msra.mxu0 %v4605
        %4630 = vmatprep.subr.bf16.mxu0 0
        %4631 = vmatpush1.bf16.msra.mxu0 0
        %4632 = vmatprep.subr.bf16.mxu0 0
        %4633 = vmatpush1.bf16.msra.mxu0 0
        %4634 = vmatprep.subr.bf16.mxu0 0
        %4635 = vmatpush1.bf16.msra.mxu0 0
        %4636 = vmatprep.subr.bf16.mxu0 0
        %4637 = vmatpush1.bf16.msra.mxu0 0
        %4638 = vmatprep.subr.bf16.mxu0 0
        %4639 = vmatpush1.bf16.msra.mxu0 0
        %4640 = vmatprep.subr.bf16.mxu0 0
        %4641 = vmatpush1.bf16.msra.mxu0 0
        %4642 = vmatprep.subr.bf16.mxu0 0
        %4643 = vmatpush1.bf16.msra.mxu0 0
        %4644 = vmatprep.subr.bf16.mxu0 0
        %4645 = vmatpush1.bf16.msra.mxu0 0
        %4646 = vmatprep.mubr.bf16.mxu0 0
        %4647 = vmatmul.mubr.bf16.gmra.mrb[0].mxu0 %v4558
        %v4648 = vpop.f32.mrb[0].mxu0
        %v4649 = vadd.f32 0.0, %v4648
        %v4650 = vpop.f32.mrb[0].mxu0
        %v4651 = vpop.f32.mrb[0].mxu0
        %v4652 = vadd.f32 0.0, %v4651
        %v4653 = vpop.f32.mrb[0].mxu0
        %4654 = vmatprep.mubr.bf16.mxu0 0
        %4655 = vmatmul.mubr.bf16.gmra.mrb[0].mxu0 %v4559
        %v4656 = vpop.f32.mrb[0].mxu0
        %v4657 = vadd.f32 0.0, %v4656
        %v4658 = vpop.f32.mrb[0].mxu0
        %v4659 = vpop.f32.mrb[0].mxu0
        %v4660 = vadd.f32 0.0, %v4659
        %v4661 = vpop.f32.mrb[0].mxu0
        %4662 = vmatprep.mubr.bf16.mxu0 0
        %4663 = vmatmul.mubr.bf16.gmra.mrb[0].mxu0 %v4560
        %v4664 = vpop.f32.mrb[0].mxu0
        %v4665 = vadd.f32 0.0, %v4664
        %v4666 = vpop.f32.mrb[0].mxu0
        %v4667 = vpop.f32.mrb[0].mxu0
        %v4668 = vadd.f32 0.0, %v4667
        %v4669 = vpop.f32.mrb[0].mxu0
        %4670 = vmatprep.mubr.bf16.mxu0 0
        %4671 = vmatmul.mubr.bf16.gmra.mrb[0].mxu0 %v4561
        %v4672 = vpop.f32.mrb[0].mxu0
        %v4673 = vadd.f32 0.0, %v4672
        %v4674 = vpop.f32.mrb[0].mxu0
        %v4675 = vpop.f32.mrb[0].mxu0
        %v4676 = vadd.f32 0.0, %v4675
        %v4677 = vpop.f32.mrb[0].mxu0
        %4678 = vdwg.mxu0
        %v4687 = vunpack.c.l.b16 %v4316
        %v4688 = vunpack.c.l.b16 %v4317
        %v4689 = vunpack.c.l.b16 %v4318
        %v4690 = vunpack.c.l.b16 %v4319
        %v4691 = vunpack.c.l.b16 %v4320
        %v4692 = vunpack.c.l.b16 %v4321
        %v4693 = vunpack.c.l.b16 %v4322
        %v4694 = vunpack.c.l.b16 %v4323
        %v4695 = vpack.c.b16 %v4688, %v4687
        %v4696 = vpack.c.b16 %v4690, %v4689
        %v4697 = vpack.c.b16 %v4692, %v4691
        %v4698 = vpack.c.b16 %v4694, %v4693
        %v4719 = vunpack.c.l.b16 %v4324
        %v4720 = vunpack.c.l.b16 %v4325
        %v4721 = vunpack.c.l.b16 %v4326
        %v4722 = vunpack.c.l.b16 %v4327
        %v4723 = vunpack.c.l.b16 %v4328
        %v4724 = vunpack.c.l.b16 %v4329
        %v4725 = vunpack.c.l.b16 %v4330
        %v4726 = vunpack.c.l.b16 %v4331
        %v4727 = vunpack.c.l.b16 %v4332
        %v4728 = vunpack.c.l.b16 %v4333
        %v4729 = vunpack.c.l.b16 %v4334
        %v4730 = vunpack.c.l.b16 %v4335
        %v4731 = vunpack.c.l.b16 %v4336
        %v4732 = vunpack.c.l.b16 %v4337
        %v4733 = vunpack.c.l.b16 %v4338
        %v4734 = vunpack.c.l.b16 %v4339
        %v4735 = vpack.c.b16 %v4720, %v4719
        %v4736 = vpack.c.b16 %v4722, %v4721
        %v4737 = vpack.c.b16 %v4724, %v4723
        %v4738 = vpack.c.b16 %v4726, %v4725
        %v4739 = vpack.c.b16 %v4728, %v4727
        %v4740 = vpack.c.b16 %v4730, %v4729
        %v4741 = vpack.c.b16 %v4732, %v4731
        %v4742 = vpack.c.b16 %v4734, %v4733
        %4751 = vmatprep.subr.bf16.mxu0 0
        %4752 = vmatpush1.bf16.msra.mxu0 %v4735
        %4753 = vmatprep.subr.bf16.mxu0 0
        %4754 = vmatpush1.bf16.msra.mxu0 %v4736
        %4755 = vmatprep.subr.bf16.mxu0 0
        %4756 = vmatpush1.bf16.msra.mxu0 %v4737
        %4757 = vmatprep.subr.bf16.mxu0 0
        %4758 = vmatpush1.bf16.msra.mxu0 %v4738
        %4759 = vmatprep.subr.bf16.mxu0 0
        %4760 = vmatpush1.bf16.msra.mxu0 %v4739
        %4761 = vmatprep.subr.bf16.mxu0 0
        %4762 = vmatpush1.bf16.msra.mxu0 %v4740
        %4763 = vmatprep.subr.bf16.mxu0 0
        %4764 = vmatpush1.bf16.msra.mxu0 %v4741
        %4765 = vmatprep.subr.bf16.mxu0 0
        %4766 = vmatpush1.bf16.msra.mxu0 %v4742
        %4767 = vmatprep.subr.bf16.mxu0 0
        %4768 = vmatpush1.bf16.msra.mxu0 0
        %4769 = vmatprep.subr.bf16.mxu0 0
        %4770 = vmatpush1.bf16.msra.mxu0 0
        %4771 = vmatprep.subr.bf16.mxu0 0
        %4772 = vmatpush1.bf16.msra.mxu0 0
        %4773 = vmatprep.subr.bf16.mxu0 0
        %4774 = vmatpush1.bf16.msra.mxu0 0
        %4775 = vmatprep.subr.bf16.mxu0 0
        %4776 = vmatpush1.bf16.msra.mxu0 0
        %4777 = vmatprep.subr.bf16.mxu0 0
        %4778 = vmatpush1.bf16.msra.mxu0 0
        %4779 = vmatprep.subr.bf16.mxu0 0
        %4780 = vmatpush1.bf16.msra.mxu0 0
        %4781 = vmatprep.subr.bf16.mxu0 0
        %4782 = vmatpush1.bf16.msra.mxu0 0
        %4783 = vmatprep.mubr.bf16.mxu0 0
        %4784 = vmatmul.mubr.bf16.gmra.mrb[0].mxu0 %v4695
        %v4785 = vpop.f32.mrb[0].mxu0
        %v4786 = vadd.f32 %v4649, %v4785
        %v4787 = vpop.f32.mrb[0].mxu0
        %v4788 = vpop.f32.mrb[0].mxu0
        %v4789 = vadd.f32 %v4652, %v4788
        %v4790 = vpop.f32.mrb[0].mxu0
        %4791 = vmatprep.mubr.bf16.mxu0 0
        %4792 = vmatmul.mubr.bf16.gmra.mrb[0].mxu0 %v4696
        %v4793 = vpop.f32.mrb[0].mxu0
        %v4794 = vadd.f32 %v4657, %v4793
        %v4795 = vpop.f32.mrb[0].mxu0
        %v4796 = vpop.f32.mrb[0].mxu0
        %v4797 = vadd.f32 %v4660, %v4796
        %v4798 = vpop.f32.mrb[0].mxu0
        %4799 = vmatprep.mubr.bf16.mxu0 0
        %4800 = vmatmul.mubr.bf16.gmra.mrb[0].mxu0 %v4697
        %v4801 = vpop.f32.mrb[0].mxu0
        %v4802 = vadd.f32 %v4665, %v4801
        %v4803 = vpop.f32.mrb[0].mxu0
        %v4804 = vpop.f32.mrb[0].mxu0
        %v4805 = vadd.f32 %v4668, %v4804
        %v4806 = vpop.f32.mrb[0].mxu0
        %4807 = vmatprep.mubr.bf16.mxu0 0
        %4808 = vmatmul.mubr.bf16.gmra.mrb[0].mxu0 %v4698
        %v4809 = vpop.f32.mrb[0].mxu0
        %v4810 = vadd.f32 %v4673, %v4809
        %v4811 = vpop.f32.mrb[0].mxu0
        %v4812 = vpop.f32.mrb[0].mxu0
        %v4813 = vadd.f32 %v4676, %v4812
        %v4814 = vpop.f32.mrb[0].mxu0
        %4815 = vdwg.mxu0
        %v4816 = vld [vmem:[%s4267] sm:$0xf]
        %v4817 = vld [vmem:[%s4267 + $0x8] sm:$0xf]
        %v4818 = vld [vmem:[%s4267 + $0x10] sm:$0xf]
        %v4819 = vld [vmem:[%s4267 + $0x18] sm:$0xf]
        %v4820 = vld [vmem:[%s4267 + $0x20] sm:$0xf]
        %v4821 = vld [vmem:[%s4267 + $0x28] sm:$0xf]
        %v4822 = vld [vmem:[%s4267 + $0x30] sm:$0xf]
        %v4823 = vld [vmem:[%s4267 + $0x38] sm:$0xf]
        %s4824 = scalar_lea.vmem [#allocation7], 192
        %v4825 = vld [vmem:[%s4824] sm:$0xf]
        %v4826 = vld [vmem:[%s4824 + $0x4] sm:$0xf]
        %v4827 = vld [vmem:[%s4824 + $0x8] sm:$0xf]
        %v4828 = vld [vmem:[%s4824 + $0xc] sm:$0xf]
        %v4829 = vld [vmem:[%s4824 + $0x10] sm:$0xf]
        %v4830 = vld [vmem:[%s4824 + $0x14] sm:$0xf]
        %v4831 = vld [vmem:[%s4824 + $0x18] sm:$0xf]
        %v4832 = vld [vmem:[%s4824 + $0x1c] sm:$0xf]
        %v4833 = vld [vmem:[%s4824 + $0x20] sm:$0xf]
        %v4834 = vld [vmem:[%s4824 + $0x24] sm:$0xf]
        %v4835 = vld [vmem:[%s4824 + $0x28] sm:$0xf]
        %v4836 = vld [vmem:[%s4824 + $0x2c] sm:$0xf]
        %v4837 = vld [vmem:[%s4824 + $0x30] sm:$0xf]
        %v4838 = vld [vmem:[%s4824 + $0x34] sm:$0xf]
        %v4839 = vld [vmem:[%s4824 + $0x38] sm:$0xf]
        %v4840 = vld [vmem:[%s4824 + $0x3c] sm:$0xf]
        %v4849 = vunpack.c.l.b16 %v4816
        %v4850 = vunpack.c.l.b16 %v4817
        %v4851 = vunpack.c.l.b16 %v4818
        %v4852 = vunpack.c.l.b16 %v4819
        %v4853 = vunpack.c.l.b16 %v4820
        %v4854 = vunpack.c.l.b16 %v4821
        %v4855 = vunpack.c.l.b16 %v4822
        %v4856 = vunpack.c.l.b16 %v4823
        %v4857 = vpack.c.b16 %v4850, %v4849
        %v4858 = vpack.c.b16 %v4852, %v4851
        %v4859 = vpack.c.b16 %v4854, %v4853
        %v4860 = vpack.c.b16 %v4856, %v4855
        %v4881 = vunpack.c.l.b16 %v4825
        %v4882 = vunpack.c.l.b16 %v4826
        %v4883 = vunpack.c.l.b16 %v4827
        %v4884 = vunpack.c.l.b16 %v4828
        %v4885 = vunpack.c.l.b16 %v4829
        %v4886 = vunpack.c.l.b16 %v4830
        %v4887 = vunpack.c.l.b16 %v4831
        %v4888 = vunpack.c.l.b16 %v4832
        %v4889 = vunpack.c.l.b16 %v4833
        %v4890 = vunpack.c.l.b16 %v4834
        %v4891 = vunpack.c.l.b16 %v4835
        %v4892 = vunpack.c.l.b16 %v4836
        %v4893 = vunpack.c.l.b16 %v4837
        %v4894 = vunpack.c.l.b16 %v4838
        %v4895 = vunpack.c.l.b16 %v4839
        %v4896 = vunpack.c.l.b16 %v4840
        %v4897 = vpack.c.b16 %v4882, %v4881
        %v4898 = vpack.c.b16 %v4884, %v4883
        %v4899 = vpack.c.b16 %v4886, %v4885
        %v4900 = vpack.c.b16 %v4888, %v4887
        %v4901 = vpack.c.b16 %v4890, %v4889
        %v4902 = vpack.c.b16 %v4892, %v4891
        %v4903 = vpack.c.b16 %v4894, %v4893
        %v4904 = vpack.c.b16 %v4896, %v4895
        %4913 = vmatprep.subr.bf16.mxu0 0
        %4914 = vmatpush1.bf16.msra.mxu0 %v4897
        %4915 = vmatprep.subr.bf16.mxu0 0
        %4916 = vmatpush1.bf16.msra.mxu0 %v4898
        %4917 = vmatprep.subr.bf16.mxu0 0
        %4918 = vmatpush1.bf16.msra.mxu0 %v4899
        %4919 = vmatprep.subr.bf16.mxu0 0
        %4920 = vmatpush1.bf16.msra.mxu0 %v4900
        %4921 = vmatprep.subr.bf16.mxu0 0
        %4922 = vmatpush1.bf16.msra.mxu0 %v4901
        %4923 = vmatprep.subr.bf16.mxu0 0
        %4924 = vmatpush1.bf16.msra.mxu0 %v4902
        %4925 = vmatprep.subr.bf16.mxu0 0
        %4926 = vmatpush1.bf16.msra.mxu0 %v4903
        %4927 = vmatprep.subr.bf16.mxu0 0
        %4928 = vmatpush1.bf16.msra.mxu0 %v4904
        %4929 = vmatprep.subr.bf16.mxu0 0
        %4930 = vmatpush1.bf16.msra.mxu0 0
        %4931 = vmatprep.subr.bf16.mxu0 0
        %4932 = vmatpush1.bf16.msra.mxu0 0
        %4933 = vmatprep.subr.bf16.mxu0 0
        %4934 = vmatpush1.bf16.msra.mxu0 0
        %4935 = vmatprep.subr.bf16.mxu0 0
        %4936 = vmatpush1.bf16.msra.mxu0 0
        %4937 = vmatprep.subr.bf16.mxu0 0
        %4938 = vmatpush1.bf16.msra.mxu0 0
        %4939 = vmatprep.subr.bf16.mxu0 0
        %4940 = vmatpush1.bf16.msra.mxu0 0
        %4941 = vmatprep.subr.bf16.mxu0 0
        %4942 = vmatpush1.bf16.msra.mxu0 0
        %4943 = vmatprep.subr.bf16.mxu0 0
        %4944 = vmatpush1.bf16.msra.mxu0 0
        %4945 = vmatprep.mubr.bf16.mxu0 0
        %4946 = vmatmul.mubr.bf16.gmra.mrb[0].mxu0 %v4857
        %v4947 = vpop.f32.mrb[0].mxu0
        %v4948 = vadd.f32 0.0, %v4947
        %v4949 = vpop.f32.mrb[0].mxu0
        %v4950 = vpop.f32.mrb[0].mxu0
        %v4951 = vadd.f32 0.0, %v4950
        %v4952 = vpop.f32.mrb[0].mxu0
        %4953 = vmatprep.mubr.bf16.mxu0 0
        %4954 = vmatmul.mubr.bf16.gmra.mrb[0].mxu0 %v4858
        %v4955 = vpop.f32.mrb[0].mxu0
        %v4956 = vadd.f32 0.0, %v4955
        %v4957 = vpop.f32.mrb[0].mxu0
        %v4958 = vpop.f32.mrb[0].mxu0
        %v4959 = vadd.f32 0.0, %v4958
        %v4960 = vpop.f32.mrb[0].mxu0
        %4961 = vmatprep.mubr.bf16.mxu0 0
        %4962 = vmatmul.mubr.bf16.gmra.mrb[0].mxu0 %v4859
        %v4963 = vpop.f32.mrb[0].mxu0
        %v4964 = vadd.f32 0.0, %v4963
        %v4965 = vpop.f32.mrb[0].mxu0
        %v4966 = vpop.f32.mrb[0].mxu0
        %v4967 = vadd.f32 0.0, %v4966
        %v4968 = vpop.f32.mrb[0].mxu0
        %4969 = vmatprep.mubr.bf16.mxu0 0
        %4970 = vmatmul.mubr.bf16.gmra.mrb[0].mxu0 %v4860
        %v4971 = vpop.f32.mrb[0].mxu0
        %v4972 = vadd.f32 0.0, %v4971
        %v4973 = vpop.f32.mrb[0].mxu0
        %v4974 = vpop.f32.mrb[0].mxu0
        %v4975 = vadd.f32 0.0, %v4974
        %v4976 = vpop.f32.mrb[0].mxu0
        %4977 = vdwg.mxu0
        %v4978 = vunpack.c.l.b16 %v4361
        %v4979 = vunpack.c.l.b16 %v4375
        %v4980 = vunpack.c.l.b16 %v4389
        %v4981 = vunpack.c.l.b16 %v4403
        %v4982 = vunpack.c.l.b16 %v4417
        %v4983 = vunpack.c.l.b16 %v4431
        %v4984 = vunpack.c.l.b16 %v4445
        %v4985 = vunpack.c.l.b16 %v4459
        %v4986 = vpack.c.b16 %v4979, %v4978
        %v4987 = vpack.c.b16 %v4981, %v4980
        %v4988 = vpack.c.b16 %v4983, %v4982
        %v4989 = vpack.c.b16 %v4985, %v4984
        %v5010 = vunpack.c.l.b16 %v4461
        %v5011 = vunpack.c.l.b16 %v4462
        %v5012 = vunpack.c.l.b16 %v4463
        %v5013 = vunpack.c.l.b16 %v4464
        %v5014 = vunpack.c.l.b16 %v4465
        %v5015 = vunpack.c.l.b16 %v4466
        %v5016 = vunpack.c.l.b16 %v4467
        %v5017 = vunpack.c.l.b16 %v4468
        %v5018 = vunpack.c.l.b16 %v4469
        %v5019 = vunpack.c.l.b16 %v4470
        %v5020 = vunpack.c.l.b16 %v4471
        %v5021 = vunpack.c.l.b16 %v4472
        %v5022 = vunpack.c.l.b16 %v4473
        %v5023 = vunpack.c.l.b16 %v4474
        %v5024 = vunpack.c.l.b16 %v4475
        %v5025 = vunpack.c.l.b16 %v4476
        %v5026 = vpack.c.b16 %v5011, %v5010
        %v5027 = vpack.c.b16 %v5013, %v5012
        %v5028 = vpack.c.b16 %v5015, %v5014
        %v5029 = vpack.c.b16 %v5017, %v5016
        %v5030 = vpack.c.b16 %v5019, %v5018
        %v5031 = vpack.c.b16 %v5021, %v5020
        %v5032 = vpack.c.b16 %v5023, %v5022
        %v5033 = vpack.c.b16 %v5025, %v5024
        %5042 = vmatprep.subr.bf16.mxu0 0
        %5043 = vmatpush1.bf16.msra.mxu0 %v5026
        %5044 = vmatprep.subr.bf16.mxu0 0
        %5045 = vmatpush1.bf16.msra.mxu0 %v5027
        %5046 = vmatprep.subr.bf16.mxu0 0
        %5047 = vmatpush1.bf16.msra.mxu0 %v5028
        %5048 = vmatprep.subr.bf16.mxu0 0
        %5049 = vmatpush1.bf16.msra.mxu0 %v5029
        %5050 = vmatprep.subr.bf16.mxu0 0
        %5051 = vmatpush1.bf16.msra.mxu0 %v5030
        %5052 = vmatprep.subr.bf16.mxu0 0
        %5053 = vmatpush1.bf16.msra.mxu0 %v5031
        %5054 = vmatprep.subr.bf16.mxu0 0
        %5055 = vmatpush1.bf16.msra.mxu0 %v5032
        %5056 = vmatprep.subr.bf16.mxu0 0
        %5057 = vmatpush1.bf16.msra.mxu0 %v5033
        %5058 = vmatprep.subr.bf16.mxu0 0
        %5059 = vmatpush1.bf16.msra.mxu0 0
        %5060 = vmatprep.subr.bf16.mxu0 0
        %5061 = vmatpush1.bf16.msra.mxu0 0
        %5062 = vmatprep.subr.bf16.mxu0 0
        %5063 = vmatpush1.bf16.msra.mxu0 0
        %5064 = vmatprep.subr.bf16.mxu0 0
        %5065 = vmatpush1.bf16.msra.mxu0 0
        %5066 = vmatprep.subr.bf16.mxu0 0
        %5067 = vmatpush1.bf16.msra.mxu0 0
        %5068 = vmatprep.subr.bf16.mxu0 0
        %5069 = vmatpush1.bf16.msra.mxu0 0
        %5070 = vmatprep.subr.bf16.mxu0 0
        %5071 = vmatpush1.bf16.msra.mxu0 0
        %5072 = vmatprep.subr.bf16.mxu0 0
        %5073 = vmatpush1.bf16.msra.mxu0 0
        %5074 = vmatprep.mubr.bf16.mxu0 0
        %5075 = vmatmul.mubr.bf16.gmra.mrb[0].mxu0 %v4986
        %v5076 = vpop.f32.mrb[0].mxu0
        %v5077 = vadd.f32 %v4948, %v5076
        %v5078 = vpop.f32.mrb[0].mxu0
        %v5079 = vpop.f32.mrb[0].mxu0
        %v5080 = vadd.f32 %v4951, %v5079
        %v5081 = vpop.f32.mrb[0].mxu0
        %5082 = vmatprep.mubr.bf16.mxu0 0
        %5083 = vmatmul.mubr.bf16.gmra.mrb[0].mxu0 %v4987
        %v5084 = vpop.f32.mrb[0].mxu0
        %v5085 = vadd.f32 %v4956, %v5084
        %v5086 = vpop.f32.mrb[0].mxu0
        %v5087 = vpop.f32.mrb[0].mxu0
        %v5088 = vadd.f32 %v4959, %v5087
        %v5089 = vpop.f32.mrb[0].mxu0
        %5090 = vmatprep.mubr.bf16.mxu0 0
        %5091 = vmatmul.mubr.bf16.gmra.mrb[0].mxu0 %v4988
        %v5092 = vpop.f32.mrb[0].mxu0
        %v5093 = vadd.f32 %v4964, %v5092
        %v5094 = vpop.f32.mrb[0].mxu0
        %v5095 = vpop.f32.mrb[0].mxu0
        %v5096 = vadd.f32 %v4967, %v5095
        %v5097 = vpop.f32.mrb[0].mxu0
        %5098 = vmatprep.mubr.bf16.mxu0 0
        %5099 = vmatmul.mubr.bf16.gmra.mrb[0].mxu0 %v4989
        %v5100 = vpop.f32.mrb[0].mxu0
        %v5101 = vadd.f32 %v4972, %v5100
        %v5102 = vpop.f32.mrb[0].mxu0
        %v5103 = vpop.f32.mrb[0].mxu0
        %v5104 = vadd.f32 %v4975, %v5103
        %v5105 = vpop.f32.mrb[0].mxu0
        %5106 = vdwg.mxu0
        %v5107 = vld [vmem:[%s4267] sm:$0xf]
        %v5108 = vld [vmem:[%s4267 + $0x4] sm:$0x1]
        %v5109 = vld [vmem:[%s4267 + $0x8] sm:$0xf]
        %v5110 = vld [vmem:[%s4267 + $0xc] sm:$0x1]
        %v5111 = vld [vmem:[%s4267 + $0x10] sm:$0xf]
        %v5112 = vld [vmem:[%s4267 + $0x14] sm:$0x1]
        %v5113 = vld [vmem:[%s4267 + $0x18] sm:$0xf]
        %v5114 = vld [vmem:[%s4267 + $0x1c] sm:$0x1]
        %v5115 = vld [vmem:[%s4267 + $0x20] sm:$0xf]
        %v5116 = vld [vmem:[%s4267 + $0x24] sm:$0x1]
        %v5117 = vld [vmem:[%s4267 + $0x28] sm:$0xf]
        %v5118 = vld [vmem:[%s4267 + $0x2c] sm:$0x1]
        %v5119 = vld [vmem:[%s4267 + $0x30] sm:$0xf]
        %v5120 = vld [vmem:[%s4267 + $0x34] sm:$0x1]
        %v5121 = vld [vmem:[%s4267 + $0x38] sm:$0xf]
        %v5122 = vld [vmem:[%s4267 + $0x3c] sm:$0x1]
        %v5124 = vshrl.u32 %v5107, 16
        %v5126 = vrot.slane %v5124, 4
        %v5127 = vshll.u32 %v5107, 16
        %v5129 = vrot.slane %v5127, 5
        %v5130 = vor.u32 %v5126, %v5129
        %v5131 = vrot.slane %v5130, 4
        %v5133 = vshll.u32 %v5108, 16
        %v5135 = vrot.slane %v5133, 5
        %v5136 = vsel %vm1050, %v5131, %v5135
        %v5138 = vshrl.u32 %v5109, 16
        %v5140 = vrot.slane %v5138, 4
        %v5141 = vshll.u32 %v5109, 16
        %v5143 = vrot.slane %v5141, 5
        %v5144 = vor.u32 %v5140, %v5143
        %v5145 = vrot.slane %v5144, 4
        %v5147 = vshll.u32 %v5110, 16
        %v5149 = vrot.slane %v5147, 5
        %v5150 = vsel %vm1050, %v5145, %v5149
        %v5152 = vshrl.u32 %v5111, 16
        %v5154 = vrot.slane %v5152, 4
        %v5155 = vshll.u32 %v5111, 16
        %v5157 = vrot.slane %v5155, 5
        %v5158 = vor.u32 %v5154, %v5157
        %v5159 = vrot.slane %v5158, 4
        %v5161 = vshll.u32 %v5112, 16
        %v5163 = vrot.slane %v5161, 5
        %v5164 = vsel %vm1050, %v5159, %v5163
        %v5166 = vshrl.u32 %v5113, 16
        %v5168 = vrot.slane %v5166, 4
        %v5169 = vshll.u32 %v5113, 16
        %v5171 = vrot.slane %v5169, 5
        %v5172 = vor.u32 %v5168, %v5171
        %v5173 = vrot.slane %v5172, 4
        %v5175 = vshll.u32 %v5114, 16
        %v5177 = vrot.slane %v5175, 5
        %v5178 = vsel %vm1050, %v5173, %v5177
        %v5180 = vshrl.u32 %v5115, 16
        %v5182 = vrot.slane %v5180, 4
        %v5183 = vshll.u32 %v5115, 16
        %v5185 = vrot.slane %v5183, 5
        %v5186 = vor.u32 %v5182, %v5185
        %v5187 = vrot.slane %v5186, 4
        %v5189 = vshll.u32 %v5116, 16
        %v5191 = vrot.slane %v5189, 5
        %v5192 = vsel %vm1050, %v5187, %v5191
        %v5194 = vshrl.u32 %v5117, 16
        %v5196 = vrot.slane %v5194, 4
        %v5197 = vshll.u32 %v5117, 16
        %v5199 = vrot.slane %v5197, 5
        %v5200 = vor.u32 %v5196, %v5199
        %v5201 = vrot.slane %v5200, 4
        %v5203 = vshll.u32 %v5118, 16
        %v5205 = vrot.slane %v5203, 5
        %v5206 = vsel %vm1050, %v5201, %v5205
        %v5208 = vshrl.u32 %v5119, 16
        %v5210 = vrot.slane %v5208, 4
        %v5211 = vshll.u32 %v5119, 16
        %v5213 = vrot.slane %v5211, 5
        %v5214 = vor.u32 %v5210, %v5213
        %v5215 = vrot.slane %v5214, 4
        %v5217 = vshll.u32 %v5120, 16
        %v5219 = vrot.slane %v5217, 5
        %v5220 = vsel %vm1050, %v5215, %v5219
        %v5222 = vshrl.u32 %v5121, 16
        %v5224 = vrot.slane %v5222, 4
        %v5225 = vshll.u32 %v5121, 16
        %v5227 = vrot.slane %v5225, 5
        %v5228 = vor.u32 %v5224, %v5227
        %v5229 = vrot.slane %v5228, 4
        %v5231 = vshll.u32 %v5122, 16
        %v5233 = vrot.slane %v5231, 5
        %v5234 = vsel %vm1050, %v5229, %v5233
        %s5235 = scalar_lea.vmem [#allocation7], 256
        %v5236 = vld [vmem:[%s5235] sm:$0xf]
        %v5237 = vld [vmem:[%s5235 + $0x4] sm:$0xf]
        %v5238 = vld [vmem:[%s5235 + $0x8] sm:$0xf]
        %v5239 = vld [vmem:[%s5235 + $0xc] sm:$0xf]
        %v5240 = vld [vmem:[%s5235 + $0x10] sm:$0xf]
        %v5241 = vld [vmem:[%s5235 + $0x14] sm:$0xf]
        %v5242 = vld [vmem:[%s5235 + $0x18] sm:$0xf]
        %v5243 = vld [vmem:[%s5235 + $0x1c] sm:$0xf]
        %v5244 = vld [vmem:[%s5235 + $0x20] sm:$0xf]
        %v5245 = vld [vmem:[%s5235 + $0x24] sm:$0xf]
        %v5246 = vld [vmem:[%s5235 + $0x28] sm:$0xf]
        %v5247 = vld [vmem:[%s5235 + $0x2c] sm:$0xf]
        %v5248 = vld [vmem:[%s5235 + $0x30] sm:$0xf]
        %v5249 = vld [vmem:[%s5235 + $0x34] sm:$0xf]
        %v5250 = vld [vmem:[%s5235 + $0x38] sm:$0xf]
        %v5251 = vld [vmem:[%s5235 + $0x3c] sm:$0xf]
        %v5252 = vunpack.c.l.b16 %v5136
        %v5253 = vunpack.c.l.b16 %v5150
        %v5254 = vunpack.c.l.b16 %v5164
        %v5255 = vunpack.c.l.b16 %v5178
        %v5256 = vunpack.c.l.b16 %v5192
        %v5257 = vunpack.c.l.b16 %v5206
        %v5258 = vunpack.c.l.b16 %v5220
        %v5259 = vunpack.c.l.b16 %v5234
        %v5260 = vpack.c.b16 %v5253, %v5252
        %v5261 = vpack.c.b16 %v5255, %v5254
        %v5262 = vpack.c.b16 %v5257, %v5256
        %v5263 = vpack.c.b16 %v5259, %v5258
        %v5284 = vunpack.c.l.b16 %v5236
        %v5285 = vunpack.c.l.b16 %v5237
        %v5286 = vunpack.c.l.b16 %v5238
        %v5287 = vunpack.c.l.b16 %v5239
        %v5288 = vunpack.c.l.b16 %v5240
        %v5289 = vunpack.c.l.b16 %v5241
        %v5290 = vunpack.c.l.b16 %v5242
        %v5291 = vunpack.c.l.b16 %v5243
        %v5292 = vunpack.c.l.b16 %v5244
        %v5293 = vunpack.c.l.b16 %v5245
        %v5294 = vunpack.c.l.b16 %v5246
        %v5295 = vunpack.c.l.b16 %v5247
        %v5296 = vunpack.c.l.b16 %v5248
        %v5297 = vunpack.c.l.b16 %v5249
        %v5298 = vunpack.c.l.b16 %v5250
        %v5299 = vunpack.c.l.b16 %v5251
        %v5300 = vpack.c.b16 %v5285, %v5284
        %v5301 = vpack.c.b16 %v5287, %v5286
        %v5302 = vpack.c.b16 %v5289, %v5288
        %v5303 = vpack.c.b16 %v5291, %v5290
        %v5304 = vpack.c.b16 %v5293, %v5292
        %v5305 = vpack.c.b16 %v5295, %v5294
        %v5306 = vpack.c.b16 %v5297, %v5296
        %v5307 = vpack.c.b16 %v5299, %v5298
        %5316 = vmatprep.subr.bf16.mxu0 0
        %5317 = vmatpush1.bf16.msra.mxu0 %v5300
        %5318 = vmatprep.subr.bf16.mxu0 0
        %5319 = vmatpush1.bf16.msra.mxu0 %v5301
        %5320 = vmatprep.subr.bf16.mxu0 0
        %5321 = vmatpush1.bf16.msra.mxu0 %v5302
        %5322 = vmatprep.subr.bf16.mxu0 0
        %5323 = vmatpush1.bf16.msra.mxu0 %v5303
        %5324 = vmatprep.subr.bf16.mxu0 0
        %5325 = vmatpush1.bf16.msra.mxu0 %v5304
        %5326 = vmatprep.subr.bf16.mxu0 0
        %5327 = vmatpush1.bf16.msra.mxu0 %v5305
        %5328 = vmatprep.subr.bf16.mxu0 0
        %5329 = vmatpush1.bf16.msra.mxu0 %v5306
        %5330 = vmatprep.subr.bf16.mxu0 0
        %5331 = vmatpush1.bf16.msra.mxu0 %v5307
        %5332 = vmatprep.subr.bf16.mxu0 0
        %5333 = vmatpush1.bf16.msra.mxu0 0
        %5334 = vmatprep.subr.bf16.mxu0 0
        %5335 = vmatpush1.bf16.msra.mxu0 0
        %5336 = vmatprep.subr.bf16.mxu0 0
        %5337 = vmatpush1.bf16.msra.mxu0 0
        %5338 = vmatprep.subr.bf16.mxu0 0
        %5339 = vmatpush1.bf16.msra.mxu0 0
        %5340 = vmatprep.subr.bf16.mxu0 0
        %5341 = vmatpush1.bf16.msra.mxu0 0
        %5342 = vmatprep.subr.bf16.mxu0 0
        %5343 = vmatpush1.bf16.msra.mxu0 0
        %5344 = vmatprep.subr.bf16.mxu0 0
        %5345 = vmatpush1.bf16.msra.mxu0 0
        %5346 = vmatprep.subr.bf16.mxu0 0
        %5347 = vmatpush1.bf16.msra.mxu0 0
        %5348 = vmatprep.mubr.bf16.mxu0 0
        %5349 = vmatmul.mubr.bf16.gmra.mrb[0].mxu0 %v5260
        %v5350 = vpop.f32.mrb[0].mxu0
        %v5351 = vadd.f32 0.0, %v5350
        %v5352 = vpop.f32.mrb[0].mxu0
        %v5353 = vpop.f32.mrb[0].mxu0
        %v5354 = vadd.f32 0.0, %v5353
        %v5355 = vpop.f32.mrb[0].mxu0
        %5356 = vmatprep.mubr.bf16.mxu0 0
        %5357 = vmatmul.mubr.bf16.gmra.mrb[0].mxu0 %v5261
        %v5358 = vpop.f32.mrb[0].mxu0
        %v5359 = vadd.f32 0.0, %v5358
        %v5360 = vpop.f32.mrb[0].mxu0
        %v5361 = vpop.f32.mrb[0].mxu0
        %v5362 = vadd.f32 0.0, %v5361
        %v5363 = vpop.f32.mrb[0].mxu0
        %5364 = vmatprep.mubr.bf16.mxu0 0
        %5365 = vmatmul.mubr.bf16.gmra.mrb[0].mxu0 %v5262
        %v5366 = vpop.f32.mrb[0].mxu0
        %v5367 = vadd.f32 0.0, %v5366
        %v5368 = vpop.f32.mrb[0].mxu0
        %v5369 = vpop.f32.mrb[0].mxu0
        %v5370 = vadd.f32 0.0, %v5369
        %v5371 = vpop.f32.mrb[0].mxu0
        %5372 = vmatprep.mubr.bf16.mxu0 0
        %5373 = vmatmul.mubr.bf16.gmra.mrb[0].mxu0 %v5263
        %v5374 = vpop.f32.mrb[0].mxu0
        %v5375 = vadd.f32 0.0, %v5374
        %v5376 = vpop.f32.mrb[0].mxu0
        %v5377 = vpop.f32.mrb[0].mxu0
        %v5378 = vadd.f32 0.0, %v5377
        %v5379 = vpop.f32.mrb[0].mxu0
        %5380 = vdwg.mxu0
        %v5381 = vadd.f32 %v4786, %v5351
        %v5382 = vadd.f32 %v4789, %v5354
        %v5383 = vadd.f32 %v4794, %v5359
        %v5384 = vadd.f32 %v4797, %v5362
        %v5385 = vadd.f32 %v4802, %v5367
        %v5386 = vadd.f32 %v4805, %v5370
        %v5387 = vadd.f32 %v4810, %v5375
        %v5388 = vadd.f32 %v4813, %v5378
        %v5389 = vld [vmem:[%s4267] sm:$0xe]
        %v5390 = vld [vmem:[%s4267 + $0x8] sm:$0xe]
        %v5391 = vld [vmem:[%s4267 + $0x10] sm:$0xe]
        %v5392 = vld [vmem:[%s4267 + $0x18] sm:$0xe]
        %v5393 = vld [vmem:[%s4267 + $0x20] sm:$0xe]
        %v5394 = vld [vmem:[%s4267 + $0x28] sm:$0xe]
        %v5395 = vld [vmem:[%s4267 + $0x30] sm:$0xe]
        %v5396 = vld [vmem:[%s4267 + $0x38] sm:$0xe]
        %v5413 = vrot.slane %v5389, 5
        %v5414 = vrot.slane %v5413, 4
        %v5415 = vrot.slane %v5108, 5
        %v5416 = vsel %vm2305, %v5414, %v5415
        %v5417 = vrot.slane %v5390, 5
        %v5418 = vrot.slane %v5417, 4
        %v5419 = vrot.slane %v5110, 5
        %v5420 = vsel %vm2305, %v5418, %v5419
        %v5421 = vrot.slane %v5391, 5
        %v5422 = vrot.slane %v5421, 4
        %v5423 = vrot.slane %v5112, 5
        %v5424 = vsel %vm2305, %v5422, %v5423
        %v5425 = vrot.slane %v5392, 5
        %v5426 = vrot.slane %v5425, 4
        %v5427 = vrot.slane %v5114, 5
        %v5428 = vsel %vm2305, %v5426, %v5427
        %v5429 = vrot.slane %v5393, 5
        %v5430 = vrot.slane %v5429, 4
        %v5431 = vrot.slane %v5116, 5
        %v5432 = vsel %vm2305, %v5430, %v5431
        %v5433 = vrot.slane %v5394, 5
        %v5434 = vrot.slane %v5433, 4
        %v5435 = vrot.slane %v5118, 5
        %v5436 = vsel %vm2305, %v5434, %v5435
        %v5437 = vrot.slane %v5395, 5
        %v5438 = vrot.slane %v5437, 4
        %v5439 = vrot.slane %v5120, 5
        %v5440 = vsel %vm2305, %v5438, %v5439
        %v5441 = vrot.slane %v5396, 5
        %v5442 = vrot.slane %v5441, 4
        %v5443 = vrot.slane %v5122, 5
        %v5444 = vsel %vm2305, %v5442, %v5443
        %s5445 = scalar_lea.vmem [#allocation7], 320
        %v5446 = vld [vmem:[%s5445] sm:$0xf]
        %v5447 = vld [vmem:[%s5445 + $0x4] sm:$0xf]
        %v5448 = vld [vmem:[%s5445 + $0x8] sm:$0xf]
        %v5449 = vld [vmem:[%s5445 + $0xc] sm:$0xf]
        %v5450 = vld [vmem:[%s5445 + $0x10] sm:$0xf]
        %v5451 = vld [vmem:[%s5445 + $0x14] sm:$0xf]
        %v5452 = vld [vmem:[%s5445 + $0x18] sm:$0xf]
        %v5453 = vld [vmem:[%s5445 + $0x1c] sm:$0xf]
        %v5454 = vld [vmem:[%s5445 + $0x20] sm:$0xf]
        %v5455 = vld [vmem:[%s5445 + $0x24] sm:$0xf]
        %v5456 = vld [vmem:[%s5445 + $0x28] sm:$0xf]
        %v5457 = vld [vmem:[%s5445 + $0x2c] sm:$0xf]
        %v5458 = vld [vmem:[%s5445 + $0x30] sm:$0xf]
        %v5459 = vld [vmem:[%s5445 + $0x34] sm:$0xf]
        %v5460 = vld [vmem:[%s5445 + $0x38] sm:$0xf]
        %v5461 = vld [vmem:[%s5445 + $0x3c] sm:$0xf]
        %v5462 = vunpack.c.l.b16 %v5416
        %v5463 = vunpack.c.l.b16 %v5420
        %v5464 = vunpack.c.l.b16 %v5424
        %v5465 = vunpack.c.l.b16 %v5428
        %v5466 = vunpack.c.l.b16 %v5432
        %v5467 = vunpack.c.l.b16 %v5436
        %v5468 = vunpack.c.l.b16 %v5440
        %v5469 = vunpack.c.l.b16 %v5444
        %v5470 = vpack.c.b16 %v5463, %v5462
        %v5471 = vpack.c.b16 %v5465, %v5464
        %v5472 = vpack.c.b16 %v5467, %v5466
        %v5473 = vpack.c.b16 %v5469, %v5468
        %v5494 = vunpack.c.l.b16 %v5446
        %v5495 = vunpack.c.l.b16 %v5447
        %v5496 = vunpack.c.l.b16 %v5448
        %v5497 = vunpack.c.l.b16 %v5449
        %v5498 = vunpack.c.l.b16 %v5450
        %v5499 = vunpack.c.l.b16 %v5451
        %v5500 = vunpack.c.l.b16 %v5452
        %v5501 = vunpack.c.l.b16 %v5453
        %v5502 = vunpack.c.l.b16 %v5454
        %v5503 = vunpack.c.l.b16 %v5455
        %v5504 = vunpack.c.l.b16 %v5456
        %v5505 = vunpack.c.l.b16 %v5457
        %v5506 = vunpack.c.l.b16 %v5458
        %v5507 = vunpack.c.l.b16 %v5459
        %v5508 = vunpack.c.l.b16 %v5460
        %v5509 = vunpack.c.l.b16 %v5461
        %v5510 = vpack.c.b16 %v5495, %v5494
        %v5511 = vpack.c.b16 %v5497, %v5496
        %v5512 = vpack.c.b16 %v5499, %v5498
        %v5513 = vpack.c.b16 %v5501, %v5500
        %v5514 = vpack.c.b16 %v5503, %v5502
        %v5515 = vpack.c.b16 %v5505, %v5504
        %v5516 = vpack.c.b16 %v5507, %v5506
        %v5517 = vpack.c.b16 %v5509, %v5508
        %5526 = vmatprep.subr.bf16.mxu0 0
        %5527 = vmatpush1.bf16.msra.mxu0 %v5510
        %5528 = vmatprep.subr.bf16.mxu0 0
        %5529 = vmatpush1.bf16.msra.mxu0 %v5511
        %5530 = vmatprep.subr.bf16.mxu0 0
        %5531 = vmatpush1.bf16.msra.mxu0 %v5512
        %5532 = vmatprep.subr.bf16.mxu0 0
        %5533 = vmatpush1.bf16.msra.mxu0 %v5513
        %5534 = vmatprep.subr.bf16.mxu0 0
        %5535 = vmatpush1.bf16.msra.mxu0 %v5514
        %5536 = vmatprep.subr.bf16.mxu0 0
        %5537 = vmatpush1.bf16.msra.mxu0 %v5515
        %5538 = vmatprep.subr.bf16.mxu0 0
        %5539 = vmatpush1.bf16.msra.mxu0 %v5516
        %5540 = vmatprep.subr.bf16.mxu0 0
        %5541 = vmatpush1.bf16.msra.mxu0 %v5517
        %5542 = vmatprep.subr.bf16.mxu0 0
        %5543 = vmatpush1.bf16.msra.mxu0 0
        %5544 = vmatprep.subr.bf16.mxu0 0
        %5545 = vmatpush1.bf16.msra.mxu0 0
        %5546 = vmatprep.subr.bf16.mxu0 0
        %5547 = vmatpush1.bf16.msra.mxu0 0
        %5548 = vmatprep.subr.bf16.mxu0 0
        %5549 = vmatpush1.bf16.msra.mxu0 0
        %5550 = vmatprep.subr.bf16.mxu0 0
        %5551 = vmatpush1.bf16.msra.mxu0 0
        %5552 = vmatprep.subr.bf16.mxu0 0
        %5553 = vmatpush1.bf16.msra.mxu0 0
        %5554 = vmatprep.subr.bf16.mxu0 0
        %5555 = vmatpush1.bf16.msra.mxu0 0
        %5556 = vmatprep.subr.bf16.mxu0 0
        %5557 = vmatpush1.bf16.msra.mxu0 0
        %5558 = vmatprep.mubr.bf16.mxu0 0
        %5559 = vmatmul.mubr.bf16.gmra.mrb[0].mxu0 %v5470
        %v5560 = vpop.f32.mrb[0].mxu0
        %v5561 = vadd.f32 0.0, %v5560
        %v5562 = vpop.f32.mrb[0].mxu0
        %v5563 = vpop.f32.mrb[0].mxu0
        %v5564 = vadd.f32 0.0, %v5563
        %v5565 = vpop.f32.mrb[0].mxu0
        %5566 = vmatprep.mubr.bf16.mxu0 0
        %5567 = vmatmul.mubr.bf16.gmra.mrb[0].mxu0 %v5471
        %v5568 = vpop.f32.mrb[0].mxu0
        %v5569 = vadd.f32 0.0, %v5568
        %v5570 = vpop.f32.mrb[0].mxu0
        %v5571 = vpop.f32.mrb[0].mxu0
        %v5572 = vadd.f32 0.0, %v5571
        %v5573 = vpop.f32.mrb[0].mxu0
        %5574 = vmatprep.mubr.bf16.mxu0 0
        %5575 = vmatmul.mubr.bf16.gmra.mrb[0].mxu0 %v5472
        %v5576 = vpop.f32.mrb[0].mxu0
        %v5577 = vadd.f32 0.0, %v5576
        %v5578 = vpop.f32.mrb[0].mxu0
        %v5579 = vpop.f32.mrb[0].mxu0
        %v5580 = vadd.f32 0.0, %v5579
        %v5581 = vpop.f32.mrb[0].mxu0
        %5582 = vmatprep.mubr.bf16.mxu0 0
        %5583 = vmatmul.mubr.bf16.gmra.mrb[0].mxu0 %v5473
        %v5584 = vpop.f32.mrb[0].mxu0
        %v5585 = vadd.f32 0.0, %v5584
        %v5586 = vpop.f32.mrb[0].mxu0
        %v5587 = vpop.f32.mrb[0].mxu0
        %v5588 = vadd.f32 0.0, %v5587
        %v5589 = vpop.f32.mrb[0].mxu0
        %5590 = vdwg.mxu0
        %v5591 = vadd.f32 %v5077, %v5561
        %v5592 = vadd.f32 %v5080, %v5564
        %v5593 = vadd.f32 %v5085, %v5569
        %v5594 = vadd.f32 %v5088, %v5572
        %v5595 = vadd.f32 %v5093, %v5577
        %v5596 = vadd.f32 %v5096, %v5580
        %v5597 = vadd.f32 %v5101, %v5585
        %v5598 = vadd.f32 %v5104, %v5588
        %s5599 = scalar_lea.vmem [#allocation3], 16
        %v5600 = vld [vmem:[%s5599] sm:$0xf]
        %v5601 = vld [vmem:[%s5599 + $0x8] sm:$0xf]
        %v5602 = vld [vmem:[%s5599 + $0x10] sm:$0xf]
        %v5603 = vld [vmem:[%s5599 + $0x18] sm:$0xf]
        %v5604 = vld [vmem:[%s5599 + $0x20] sm:$0xf]
        %v5605 = vld [vmem:[%s5599 + $0x28] sm:$0xf]
        %v5606 = vld [vmem:[%s5599 + $0x30] sm:$0xf]
        %v5607 = vld [vmem:[%s5599 + $0x38] sm:$0xf]
        %s5608 = scalar_lea.vmem [#allocation7], 384
        %v5609 = vld [vmem:[%s5608] sm:$0xf]
        %v5610 = vld [vmem:[%s5608 + $0x4] sm:$0xf]
        %v5611 = vld [vmem:[%s5608 + $0x8] sm:$0xf]
        %v5612 = vld [vmem:[%s5608 + $0xc] sm:$0xf]
        %v5613 = vld [vmem:[%s5608 + $0x10] sm:$0xf]
        %v5614 = vld [vmem:[%s5608 + $0x14] sm:$0xf]
        %v5615 = vld [vmem:[%s5608 + $0x18] sm:$0xf]
        %v5616 = vld [vmem:[%s5608 + $0x1c] sm:$0xf]
        %v5617 = vld [vmem:[%s5608 + $0x20] sm:$0xf]
        %v5618 = vld [vmem:[%s5608 + $0x24] sm:$0xf]
        %v5619 = vld [vmem:[%s5608 + $0x28] sm:$0xf]
        %v5620 = vld [vmem:[%s5608 + $0x2c] sm:$0xf]
        %v5621 = vld [vmem:[%s5608 + $0x30] sm:$0xf]
        %v5622 = vld [vmem:[%s5608 + $0x34] sm:$0xf]
        %v5623 = vld [vmem:[%s5608 + $0x38] sm:$0xf]
        %v5624 = vld [vmem:[%s5608 + $0x3c] sm:$0xf]
        %v5633 = vunpack.c.l.b16 %v5600
        %v5634 = vunpack.c.l.b16 %v5601
        %v5635 = vunpack.c.l.b16 %v5602
        %v5636 = vunpack.c.l.b16 %v5603
        %v5637 = vunpack.c.l.b16 %v5604
        %v5638 = vunpack.c.l.b16 %v5605
        %v5639 = vunpack.c.l.b16 %v5606
        %v5640 = vunpack.c.l.b16 %v5607
        %v5641 = vpack.c.b16 %v5634, %v5633
        %v5642 = vpack.c.b16 %v5636, %v5635
        %v5643 = vpack.c.b16 %v5638, %v5637
        %v5644 = vpack.c.b16 %v5640, %v5639
        %v5665 = vunpack.c.l.b16 %v5609
        %v5666 = vunpack.c.l.b16 %v5610
        %v5667 = vunpack.c.l.b16 %v5611
        %v5668 = vunpack.c.l.b16 %v5612
        %v5669 = vunpack.c.l.b16 %v5613
        %v5670 = vunpack.c.l.b16 %v5614
        %v5671 = vunpack.c.l.b16 %v5615
        %v5672 = vunpack.c.l.b16 %v5616
        %v5673 = vunpack.c.l.b16 %v5617
        %v5674 = vunpack.c.l.b16 %v5618
        %v5675 = vunpack.c.l.b16 %v5619
        %v5676 = vunpack.c.l.b16 %v5620
        %v5677 = vunpack.c.l.b16 %v5621
        %v5678 = vunpack.c.l.b16 %v5622
        %v5679 = vunpack.c.l.b16 %v5623
        %v5680 = vunpack.c.l.b16 %v5624
        %v5681 = vpack.c.b16 %v5666, %v5665
        %v5682 = vpack.c.b16 %v5668, %v5667
        %v5683 = vpack.c.b16 %v5670, %v5669
        %v5684 = vpack.c.b16 %v5672, %v5671
        %v5685 = vpack.c.b16 %v5674, %v5673
        %v5686 = vpack.c.b16 %v5676, %v5675
        %v5687 = vpack.c.b16 %v5678, %v5677
        %v5688 = vpack.c.b16 %v5680, %v5679
        %5697 = vmatprep.subr.bf16.mxu0 0
        %5698 = vmatpush1.bf16.msra.mxu0 %v5681
        %5699 = vmatprep.subr.bf16.mxu0 0
        %5700 = vmatpush1.bf16.msra.mxu0 %v5682
        %5701 = vmatprep.subr.bf16.mxu0 0
        %5702 = vmatpush1.bf16.msra.mxu0 %v5683
        %5703 = vmatprep.subr.bf16.mxu0 0
        %5704 = vmatpush1.bf16.msra.mxu0 %v5684
        %5705 = vmatprep.subr.bf16.mxu0 0
        %5706 = vmatpush1.bf16.msra.mxu0 %v5685
        %5707 = vmatprep.subr.bf16.mxu0 0
        %5708 = vmatpush1.bf16.msra.mxu0 %v5686
        %5709 = vmatprep.subr.bf16.mxu0 0
        %5710 = vmatpush1.bf16.msra.mxu0 %v5687
        %5711 = vmatprep.subr.bf16.mxu0 0
        %5712 = vmatpush1.bf16.msra.mxu0 %v5688
        %5713 = vmatprep.subr.bf16.mxu0 0
        %5714 = vmatpush1.bf16.msra.mxu0 0
        %5715 = vmatprep.subr.bf16.mxu0 0
        %5716 = vmatpush1.bf16.msra.mxu0 0
        %5717 = vmatprep.subr.bf16.mxu0 0
        %5718 = vmatpush1.bf16.msra.mxu0 0
        %5719 = vmatprep.subr.bf16.mxu0 0
        %5720 = vmatpush1.bf16.msra.mxu0 0
        %5721 = vmatprep.subr.bf16.mxu0 0
        %5722 = vmatpush1.bf16.msra.mxu0 0
        %5723 = vmatprep.subr.bf16.mxu0 0
        %5724 = vmatpush1.bf16.msra.mxu0 0
        %5725 = vmatprep.subr.bf16.mxu0 0
        %5726 = vmatpush1.bf16.msra.mxu0 0
        %5727 = vmatprep.subr.bf16.mxu0 0
        %5728 = vmatpush1.bf16.msra.mxu0 0
        %5729 = vmatprep.mubr.bf16.mxu0 0
        %5730 = vmatmul.mubr.bf16.gmra.mrb[0].mxu0 %v5641
        %v5731 = vpop.f32.mrb[0].mxu0
        %v5732 = vadd.f32 0.0, %v5731
        %v5733 = vpop.f32.mrb[0].mxu0
        %v5734 = vpop.f32.mrb[0].mxu0
        %v5735 = vadd.f32 0.0, %v5734
        %v5736 = vpop.f32.mrb[0].mxu0
        %5737 = vmatprep.mubr.bf16.mxu0 0
        %5738 = vmatmul.mubr.bf16.gmra.mrb[0].mxu0 %v5642
        %v5739 = vpop.f32.mrb[0].mxu0
        %v5740 = vadd.f32 0.0, %v5739
        %v5741 = vpop.f32.mrb[0].mxu0
        %v5742 = vpop.f32.mrb[0].mxu0
        %v5743 = vadd.f32 0.0, %v5742
        %v5744 = vpop.f32.mrb[0].mxu0
        %5745 = vmatprep.mubr.bf16.mxu0 0
        %5746 = vmatmul.mubr.bf16.gmra.mrb[0].mxu0 %v5643
        %v5747 = vpop.f32.mrb[0].mxu0
        %v5748 = vadd.f32 0.0, %v5747
        %v5749 = vpop.f32.mrb[0].mxu0
        %v5750 = vpop.f32.mrb[0].mxu0
        %v5751 = vadd.f32 0.0, %v5750
        %v5752 = vpop.f32.mrb[0].mxu0
        %5753 = vmatprep.mubr.bf16.mxu0 0
        %5754 = vmatmul.mubr.bf16.gmra.mrb[0].mxu0 %v5644
        %v5755 = vpop.f32.mrb[0].mxu0
        %v5756 = vadd.f32 0.0, %v5755
        %v5757 = vpop.f32.mrb[0].mxu0
        %v5758 = vpop.f32.mrb[0].mxu0
        %v5759 = vadd.f32 0.0, %v5758
        %v5760 = vpop.f32.mrb[0].mxu0
        %5761 = vdwg.mxu0
        %v5762 = vadd.f32 %v5381, %v5732
        %v5763 = vadd.f32 %v5382, %v5735
        %v5764 = vadd.f32 %v5383, %v5740
        %v5765 = vadd.f32 %v5384, %v5743
        %v5766 = vadd.f32 %v5385, %v5748
        %v5767 = vadd.f32 %v5386, %v5751
        %v5768 = vadd.f32 %v5387, %v5756
        %v5769 = vadd.f32 %v5388, %v5759
        %v5770 = vld [vmem:[%s5599] sm:$0xf]
        %v5771 = vld [vmem:[%s5599 + $0x4] sm:$0x1]
        %v5772 = vld [vmem:[%s5599 + $0x8] sm:$0xf]
        %v5773 = vld [vmem:[%s5599 + $0xc] sm:$0x1]
        %v5774 = vld [vmem:[%s5599 + $0x10] sm:$0xf]
        %v5775 = vld [vmem:[%s5599 + $0x14] sm:$0x1]
        %v5776 = vld [vmem:[%s5599 + $0x18] sm:$0xf]
        %v5777 = vld [vmem:[%s5599 + $0x1c] sm:$0x1]
        %v5778 = vld [vmem:[%s5599 + $0x20] sm:$0xf]
        %v5779 = vld [vmem:[%s5599 + $0x24] sm:$0x1]
        %v5780 = vld [vmem:[%s5599 + $0x28] sm:$0xf]
        %v5781 = vld [vmem:[%s5599 + $0x2c] sm:$0x1]
        %v5782 = vld [vmem:[%s5599 + $0x30] sm:$0xf]
        %v5783 = vld [vmem:[%s5599 + $0x34] sm:$0x1]
        %v5784 = vld [vmem:[%s5599 + $0x38] sm:$0xf]
        %v5785 = vld [vmem:[%s5599 + $0x3c] sm:$0x1]
        %v5787 = vshrl.u32 %v5770, 16
        %v5789 = vrot.slane %v5787, 4
        %v5790 = vshll.u32 %v5770, 16
        %v5792 = vrot.slane %v5790, 5
        %v5793 = vor.u32 %v5789, %v5792
        %v5794 = vrot.slane %v5793, 4
        %v5796 = vshll.u32 %v5771, 16
        %v5798 = vrot.slane %v5796, 5
        %v5799 = vsel %vm1050, %v5794, %v5798
        %v5801 = vshrl.u32 %v5772, 16
        %v5803 = vrot.slane %v5801, 4
        %v5804 = vshll.u32 %v5772, 16
        %v5806 = vrot.slane %v5804, 5
        %v5807 = vor.u32 %v5803, %v5806
        %v5808 = vrot.slane %v5807, 4
        %v5810 = vshll.u32 %v5773, 16
        %v5812 = vrot.slane %v5810, 5
        %v5813 = vsel %vm1050, %v5808, %v5812
        %v5815 = vshrl.u32 %v5774, 16
        %v5817 = vrot.slane %v5815, 4
        %v5818 = vshll.u32 %v5774, 16
        %v5820 = vrot.slane %v5818, 5
        %v5821 = vor.u32 %v5817, %v5820
        %v5822 = vrot.slane %v5821, 4
        %v5824 = vshll.u32 %v5775, 16
        %v5826 = vrot.slane %v5824, 5
        %v5827 = vsel %vm1050, %v5822, %v5826
        %v5829 = vshrl.u32 %v5776, 16
        %v5831 = vrot.slane %v5829, 4
        %v5832 = vshll.u32 %v5776, 16
        %v5834 = vrot.slane %v5832, 5
        %v5835 = vor.u32 %v5831, %v5834
        %v5836 = vrot.slane %v5835, 4
        %v5838 = vshll.u32 %v5777, 16
        %v5840 = vrot.slane %v5838, 5
        %v5841 = vsel %vm1050, %v5836, %v5840
        %v5843 = vshrl.u32 %v5778, 16
        %v5845 = vrot.slane %v5843, 4
        %v5846 = vshll.u32 %v5778, 16
        %v5848 = vrot.slane %v5846, 5
        %v5849 = vor.u32 %v5845, %v5848
        %v5850 = vrot.slane %v5849, 4
        %v5852 = vshll.u32 %v5779, 16
        %v5854 = vrot.slane %v5852, 5
        %v5855 = vsel %vm1050, %v5850, %v5854
        %v5857 = vshrl.u32 %v5780, 16
        %v5859 = vrot.slane %v5857, 4
        %v5860 = vshll.u32 %v5780, 16
        %v5862 = vrot.slane %v5860, 5
        %v5863 = vor.u32 %v5859, %v5862
        %v5864 = vrot.slane %v5863, 4
        %v5866 = vshll.u32 %v5781, 16
        %v5868 = vrot.slane %v5866, 5
        %v5869 = vsel %vm1050, %v5864, %v5868
        %v5871 = vshrl.u32 %v5782, 16
        %v5873 = vrot.slane %v5871, 4
        %v5874 = vshll.u32 %v5782, 16
        %v5876 = vrot.slane %v5874, 5
        %v5877 = vor.u32 %v5873, %v5876
        %v5878 = vrot.slane %v5877, 4
        %v5880 = vshll.u32 %v5783, 16
        %v5882 = vrot.slane %v5880, 5
        %v5883 = vsel %vm1050, %v5878, %v5882
        %v5885 = vshrl.u32 %v5784, 16
        %v5887 = vrot.slane %v5885, 4
        %v5888 = vshll.u32 %v5784, 16
        %v5890 = vrot.slane %v5888, 5
        %v5891 = vor.u32 %v5887, %v5890
        %v5892 = vrot.slane %v5891, 4
        %v5894 = vshll.u32 %v5785, 16
        %v5896 = vrot.slane %v5894, 5
        %v5897 = vsel %vm1050, %v5892, %v5896
        %s5898 = scalar_lea.vmem [#allocation7], 448
        %v5899 = vld [vmem:[%s5898] sm:$0xf]
        %v5900 = vld [vmem:[%s5898 + $0x4] sm:$0xf]
        %v5901 = vld [vmem:[%s5898 + $0x8] sm:$0xf]
        %v5902 = vld [vmem:[%s5898 + $0xc] sm:$0xf]
        %v5903 = vld [vmem:[%s5898 + $0x10] sm:$0xf]
        %v5904 = vld [vmem:[%s5898 + $0x14] sm:$0xf]
        %v5905 = vld [vmem:[%s5898 + $0x18] sm:$0xf]
        %v5906 = vld [vmem:[%s5898 + $0x1c] sm:$0xf]
        %v5907 = vld [vmem:[%s5898 + $0x20] sm:$0xf]
        %v5908 = vld [vmem:[%s5898 + $0x24] sm:$0xf]
        %v5909 = vld [vmem:[%s5898 + $0x28] sm:$0xf]
        %v5910 = vld [vmem:[%s5898 + $0x2c] sm:$0xf]
        %v5911 = vld [vmem:[%s5898 + $0x30] sm:$0xf]
        %v5912 = vld [vmem:[%s5898 + $0x34] sm:$0xf]
        %v5913 = vld [vmem:[%s5898 + $0x38] sm:$0xf]
        %v5914 = vld [vmem:[%s5898 + $0x3c] sm:$0xf]
        %v5915 = vunpack.c.l.b16 %v5799
        %v5916 = vunpack.c.l.b16 %v5813
        %v5917 = vunpack.c.l.b16 %v5827
        %v5918 = vunpack.c.l.b16 %v5841
        %v5919 = vunpack.c.l.b16 %v5855
        %v5920 = vunpack.c.l.b16 %v5869
        %v5921 = vunpack.c.l.b16 %v5883
        %v5922 = vunpack.c.l.b16 %v5897
        %v5923 = vpack.c.b16 %v5916, %v5915
        %v5924 = vpack.c.b16 %v5918, %v5917
        %v5925 = vpack.c.b16 %v5920, %v5919
        %v5926 = vpack.c.b16 %v5922, %v5921
        %v5947 = vunpack.c.l.b16 %v5899
        %v5948 = vunpack.c.l.b16 %v5900
        %v5949 = vunpack.c.l.b16 %v5901
        %v5950 = vunpack.c.l.b16 %v5902
        %v5951 = vunpack.c.l.b16 %v5903
        %v5952 = vunpack.c.l.b16 %v5904
        %v5953 = vunpack.c.l.b16 %v5905
        %v5954 = vunpack.c.l.b16 %v5906
        %v5955 = vunpack.c.l.b16 %v5907
        %v5956 = vunpack.c.l.b16 %v5908
        %v5957 = vunpack.c.l.b16 %v5909
        %v5958 = vunpack.c.l.b16 %v5910
        %v5959 = vunpack.c.l.b16 %v5911
        %v5960 = vunpack.c.l.b16 %v5912
        %v5961 = vunpack.c.l.b16 %v5913
        %v5962 = vunpack.c.l.b16 %v5914
        %v5963 = vpack.c.b16 %v5948, %v5947
        %v5964 = vpack.c.b16 %v5950, %v5949
        %v5965 = vpack.c.b16 %v5952, %v5951
        %v5966 = vpack.c.b16 %v5954, %v5953
        %v5967 = vpack.c.b16 %v5956, %v5955
        %v5968 = vpack.c.b16 %v5958, %v5957
        %v5969 = vpack.c.b16 %v5960, %v5959
        %v5970 = vpack.c.b16 %v5962, %v5961
        %5979 = vmatprep.subr.bf16.mxu0 0
        %5980 = vmatpush1.bf16.msra.mxu0 %v5963
        %5981 = vmatprep.subr.bf16.mxu0 0
        %5982 = vmatpush1.bf16.msra.mxu0 %v5964
        %5983 = vmatprep.subr.bf16.mxu0 0
        %5984 = vmatpush1.bf16.msra.mxu0 %v5965
        %5985 = vmatprep.subr.bf16.mxu0 0
        %5986 = vmatpush1.bf16.msra.mxu0 %v5966
        %5987 = vmatprep.subr.bf16.mxu0 0
        %5988 = vmatpush1.bf16.msra.mxu0 %v5967
        %5989 = vmatprep.subr.bf16.mxu0 0
        %5990 = vmatpush1.bf16.msra.mxu0 %v5968
        %5991 = vmatprep.subr.bf16.mxu0 0
        %5992 = vmatpush1.bf16.msra.mxu0 %v5969
        %5993 = vmatprep.subr.bf16.mxu0 0
        %5994 = vmatpush1.bf16.msra.mxu0 %v5970
        %5995 = vmatprep.subr.bf16.mxu0 0
        %5996 = vmatpush1.bf16.msra.mxu0 0
        %5997 = vmatprep.subr.bf16.mxu0 0
        %5998 = vmatpush1.bf16.msra.mxu0 0
        %5999 = vmatprep.subr.bf16.mxu0 0
        %6000 = vmatpush1.bf16.msra.mxu0 0
        %6001 = vmatprep.subr.bf16.mxu0 0
        %6002 = vmatpush1.bf16.msra.mxu0 0
        %6003 = vmatprep.subr.bf16.mxu0 0
        %6004 = vmatpush1.bf16.msra.mxu0 0
        %6005 = vmatprep.subr.bf16.mxu0 0
        %6006 = vmatpush1.bf16.msra.mxu0 0
        %6007 = vmatprep.subr.bf16.mxu0 0
        %6008 = vmatpush1.bf16.msra.mxu0 0
        %6009 = vmatprep.subr.bf16.mxu0 0
        %6010 = vmatpush1.bf16.msra.mxu0 0
        %6011 = vmatprep.mubr.bf16.mxu0 0
        %6012 = vmatmul.mubr.bf16.gmra.mrb[0].mxu0 %v5923
        %v6013 = vpop.f32.mrb[0].mxu0
        %v6014 = vadd.f32 0.0, %v6013
        %v6015 = vpop.f32.mrb[0].mxu0
        %v6016 = vpop.f32.mrb[0].mxu0
        %v6017 = vadd.f32 0.0, %v6016
        %v6018 = vpop.f32.mrb[0].mxu0
        %6019 = vmatprep.mubr.bf16.mxu0 0
        %6020 = vmatmul.mubr.bf16.gmra.mrb[0].mxu0 %v5924
        %v6021 = vpop.f32.mrb[0].mxu0
        %v6022 = vadd.f32 0.0, %v6021
        %v6023 = vpop.f32.mrb[0].mxu0
        %v6024 = vpop.f32.mrb[0].mxu0
        %v6025 = vadd.f32 0.0, %v6024
        %v6026 = vpop.f32.mrb[0].mxu0
        %6027 = vmatprep.mubr.bf16.mxu0 0
        %6028 = vmatmul.mubr.bf16.gmra.mrb[0].mxu0 %v5925
        %v6029 = vpop.f32.mrb[0].mxu0
        %v6030 = vadd.f32 0.0, %v6029
        %v6031 = vpop.f32.mrb[0].mxu0
        %v6032 = vpop.f32.mrb[0].mxu0
        %v6033 = vadd.f32 0.0, %v6032
        %v6034 = vpop.f32.mrb[0].mxu0
        %6035 = vmatprep.mubr.bf16.mxu0 0
        %6036 = vmatmul.mubr.bf16.gmra.mrb[0].mxu0 %v5926
        %v6037 = vpop.f32.mrb[0].mxu0
        %v6038 = vadd.f32 0.0, %v6037
        %v6039 = vpop.f32.mrb[0].mxu0
        %v6040 = vpop.f32.mrb[0].mxu0
        %v6041 = vadd.f32 0.0, %v6040
        %v6042 = vpop.f32.mrb[0].mxu0
        %6043 = vdwg.mxu0
        %v6044 = vadd.f32 %v5591, %v6014
        %v6045 = vadd.f32 %v5592, %v6017
        %v6046 = vadd.f32 %v5593, %v6022
        %v6047 = vadd.f32 %v5594, %v6025
        %v6048 = vadd.f32 %v5595, %v6030
        %v6049 = vadd.f32 %v5596, %v6033
        %v6050 = vadd.f32 %v5597, %v6038
        %v6051 = vadd.f32 %v5598, %v6041
        %v6052 = vld [vmem:[%s5599] sm:$0xe]
        %v6053 = vld [vmem:[%s5599 + $0x8] sm:$0xe]
        %v6054 = vld [vmem:[%s5599 + $0x10] sm:$0xe]
        %v6055 = vld [vmem:[%s5599 + $0x18] sm:$0xe]
        %v6056 = vld [vmem:[%s5599 + $0x20] sm:$0xe]
        %v6057 = vld [vmem:[%s5599 + $0x28] sm:$0xe]
        %v6058 = vld [vmem:[%s5599 + $0x30] sm:$0xe]
        %v6059 = vld [vmem:[%s5599 + $0x38] sm:$0xe]
        %v6076 = vrot.slane %v6052, 5
        %v6077 = vrot.slane %v6076, 4
        %v6078 = vrot.slane %v5771, 5
        %v6079 = vsel %vm2305, %v6077, %v6078
        %v6080 = vrot.slane %v6053, 5
        %v6081 = vrot.slane %v6080, 4
        %v6082 = vrot.slane %v5773, 5
        %v6083 = vsel %vm2305, %v6081, %v6082
        %v6084 = vrot.slane %v6054, 5
        %v6085 = vrot.slane %v6084, 4
        %v6086 = vrot.slane %v5775, 5
        %v6087 = vsel %vm2305, %v6085, %v6086
        %v6088 = vrot.slane %v6055, 5
        %v6089 = vrot.slane %v6088, 4
        %v6090 = vrot.slane %v5777, 5
        %v6091 = vsel %vm2305, %v6089, %v6090
        %v6092 = vrot.slane %v6056, 5
        %v6093 = vrot.slane %v6092, 4
        %v6094 = vrot.slane %v5779, 5
        %v6095 = vsel %vm2305, %v6093, %v6094
        %v6096 = vrot.slane %v6057, 5
        %v6097 = vrot.slane %v6096, 4
        %v6098 = vrot.slane %v5781, 5
        %v6099 = vsel %vm2305, %v6097, %v6098
        %v6100 = vrot.slane %v6058, 5
        %v6101 = vrot.slane %v6100, 4
        %v6102 = vrot.slane %v5783, 5
        %v6103 = vsel %vm2305, %v6101, %v6102
        %v6104 = vrot.slane %v6059, 5
        %v6105 = vrot.slane %v6104, 4
        %v6106 = vrot.slane %v5785, 5
        %v6107 = vsel %vm2305, %v6105, %v6106
        %s6108 = scalar_lea.vmem [#allocation7], 512
        %v6109 = vld [vmem:[%s6108] sm:$0xf]
        %v6110 = vld [vmem:[%s6108 + $0x4] sm:$0xf]
        %v6111 = vld [vmem:[%s6108 + $0x8] sm:$0xf]
        %v6112 = vld [vmem:[%s6108 + $0xc] sm:$0xf]
        %v6113 = vld [vmem:[%s6108 + $0x10] sm:$0xf]
        %v6114 = vld [vmem:[%s6108 + $0x14] sm:$0xf]
        %v6115 = vld [vmem:[%s6108 + $0x18] sm:$0xf]
        %v6116 = vld [vmem:[%s6108 + $0x1c] sm:$0xf]
        %v6117 = vld [vmem:[%s6108 + $0x20] sm:$0xf]
        %v6118 = vld [vmem:[%s6108 + $0x24] sm:$0xf]
        %v6119 = vld [vmem:[%s6108 + $0x28] sm:$0xf]
        %v6120 = vld [vmem:[%s6108 + $0x2c] sm:$0xf]
        %v6121 = vld [vmem:[%s6108 + $0x30] sm:$0xf]
        %v6122 = vld [vmem:[%s6108 + $0x34] sm:$0xf]
        %v6123 = vld [vmem:[%s6108 + $0x38] sm:$0xf]
        %v6124 = vld [vmem:[%s6108 + $0x3c] sm:$0xf]
        %v6125 = vunpack.c.l.b16 %v6079
        %v6126 = vunpack.c.l.b16 %v6083
        %v6127 = vunpack.c.l.b16 %v6087
        %v6128 = vunpack.c.l.b16 %v6091
        %v6129 = vunpack.c.l.b16 %v6095
        %v6130 = vunpack.c.l.b16 %v6099
        %v6131 = vunpack.c.l.b16 %v6103
        %v6132 = vunpack.c.l.b16 %v6107
        %v6133 = vpack.c.b16 %v6126, %v6125
        %v6134 = vpack.c.b16 %v6128, %v6127
        %v6135 = vpack.c.b16 %v6130, %v6129
        %v6136 = vpack.c.b16 %v6132, %v6131
        %v6157 = vunpack.c.l.b16 %v6109
        %v6158 = vunpack.c.l.b16 %v6110
        %v6159 = vunpack.c.l.b16 %v6111
        %v6160 = vunpack.c.l.b16 %v6112
        %v6161 = vunpack.c.l.b16 %v6113
        %v6162 = vunpack.c.l.b16 %v6114
        %v6163 = vunpack.c.l.b16 %v6115
        %v6164 = vunpack.c.l.b16 %v6116
        %v6165 = vunpack.c.l.b16 %v6117
        %v6166 = vunpack.c.l.b16 %v6118
        %v6167 = vunpack.c.l.b16 %v6119
        %v6168 = vunpack.c.l.b16 %v6120
        %v6169 = vunpack.c.l.b16 %v6121
        %v6170 = vunpack.c.l.b16 %v6122
        %v6171 = vunpack.c.l.b16 %v6123
        %v6172 = vunpack.c.l.b16 %v6124
        %v6173 = vpack.c.b16 %v6158, %v6157
        %v6174 = vpack.c.b16 %v6160, %v6159
        %v6175 = vpack.c.b16 %v6162, %v6161
        %v6176 = vpack.c.b16 %v6164, %v6163
        %v6177 = vpack.c.b16 %v6166, %v6165
        %v6178 = vpack.c.b16 %v6168, %v6167
        %v6179 = vpack.c.b16 %v6170, %v6169
        %v6180 = vpack.c.b16 %v6172, %v6171
        %6189 = vmatprep.subr.bf16.mxu0 0
        %6190 = vmatpush1.bf16.msra.mxu0 %v6173
        %6191 = vmatprep.subr.bf16.mxu0 0
        %6192 = vmatpush1.bf16.msra.mxu0 %v6174
        %6193 = vmatprep.subr.bf16.mxu0 0
        %6194 = vmatpush1.bf16.msra.mxu0 %v6175
        %6195 = vmatprep.subr.bf16.mxu0 0
        %6196 = vmatpush1.bf16.msra.mxu0 %v6176
        %6197 = vmatprep.subr.bf16.mxu0 0
        %6198 = vmatpush1.bf16.msra.mxu0 %v6177
        %6199 = vmatprep.subr.bf16.mxu0 0
        %6200 = vmatpush1.bf16.msra.mxu0 %v6178
        %6201 = vmatprep.subr.bf16.mxu0 0
        %6202 = vmatpush1.bf16.msra.mxu0 %v6179
        %6203 = vmatprep.subr.bf16.mxu0 0
        %6204 = vmatpush1.bf16.msra.mxu0 %v6180
        %6205 = vmatprep.subr.bf16.mxu0 0
        %6206 = vmatpush1.bf16.msra.mxu0 0
        %6207 = vmatprep.subr.bf16.mxu0 0
        %6208 = vmatpush1.bf16.msra.mxu0 0
        %6209 = vmatprep.subr.bf16.mxu0 0
        %6210 = vmatpush1.bf16.msra.mxu0 0
        %6211 = vmatprep.subr.bf16.mxu0 0
        %6212 = vmatpush1.bf16.msra.mxu0 0
        %6213 = vmatprep.subr.bf16.mxu0 0
        %6214 = vmatpush1.bf16.msra.mxu0 0
        %6215 = vmatprep.subr.bf16.mxu0 0
        %6216 = vmatpush1.bf16.msra.mxu0 0
        %6217 = vmatprep.subr.bf16.mxu0 0
        %6218 = vmatpush1.bf16.msra.mxu0 0
        %6219 = vmatprep.subr.bf16.mxu0 0
        %6220 = vmatpush1.bf16.msra.mxu0 0
        %6221 = vmatprep.mubr.bf16.mxu0 0
        %6222 = vmatmul.mubr.bf16.gmra.mrb[0].mxu0 %v6133
        %v6223 = vpop.f32.mrb[0].mxu0
        %v6224 = vadd.f32 0.0, %v6223
        %v6225 = vpop.f32.mrb[0].mxu0
        %v6226 = vpop.f32.mrb[0].mxu0
        %v6227 = vadd.f32 0.0, %v6226
        %v6228 = vpop.f32.mrb[0].mxu0
        %6229 = vmatprep.mubr.bf16.mxu0 0
        %6230 = vmatmul.mubr.bf16.gmra.mrb[0].mxu0 %v6134
        %v6231 = vpop.f32.mrb[0].mxu0
        %v6232 = vadd.f32 0.0, %v6231
        %v6233 = vpop.f32.mrb[0].mxu0
        %v6234 = vpop.f32.mrb[0].mxu0
        %v6235 = vadd.f32 0.0, %v6234
        %v6236 = vpop.f32.mrb[0].mxu0
        %6237 = vmatprep.mubr.bf16.mxu0 0
        %6238 = vmatmul.mubr.bf16.gmra.mrb[0].mxu0 %v6135
        %v6239 = vpop.f32.mrb[0].mxu0
        %v6240 = vadd.f32 0.0, %v6239
        %v6241 = vpop.f32.mrb[0].mxu0
        %v6242 = vpop.f32.mrb[0].mxu0
        %v6243 = vadd.f32 0.0, %v6242
        %v6244 = vpop.f32.mrb[0].mxu0
        %6245 = vmatprep.mubr.bf16.mxu0 0
        %6246 = vmatmul.mubr.bf16.gmra.mrb[0].mxu0 %v6136
        %v6247 = vpop.f32.mrb[0].mxu0
        %v6248 = vadd.f32 0.0, %v6247
        %v6249 = vpop.f32.mrb[0].mxu0
        %v6250 = vpop.f32.mrb[0].mxu0
        %v6251 = vadd.f32 0.0, %v6250
        %v6252 = vpop.f32.mrb[0].mxu0
        %6253 = vdwg.mxu0
        %v6254 = vadd.f32 %v5762, %v6224
        %v6255 = vadd.f32 %v5763, %v6227
        %v6256 = vadd.f32 %v5764, %v6232
        %v6257 = vadd.f32 %v5765, %v6235
        %v6258 = vadd.f32 %v5766, %v6240
        %v6259 = vadd.f32 %v5767, %v6243
        %v6260 = vadd.f32 %v5768, %v6248
        %v6261 = vadd.f32 %v5769, %v6251
        %v6262 = vadd.f32 %v6254, %v6044
        %v6263 = vadd.f32 %v6255, %v6045
        %v6264 = vadd.f32 %v6256, %v6046
        %v6265 = vadd.f32 %v6257, %v6047
        %v6266 = vadd.f32 %v6258, %v6048
        %v6267 = vadd.f32 %v6259, %v6049
        %v6268 = vadd.f32 %v6260, %v6050
        %v6269 = vadd.f32 %v6261, %v6051
        %v6270 = vld [vmem:[%s6] sm:$0x1]
        %v6272 = vlaneseq
        %v6273 = vshrl.u32 %v6272, 7
        %v6274 = vsub.s32 0, %v6273
        %v6275 = vrot.slane %v6270, %v6274
        %v6277 = vadd.f32 %v6262, %v6275
        %v6278 = vadd.f32 %v6263, %v6275
        %v6279 = vadd.f32 %v6264, %v6275
        %v6280 = vadd.f32 %v6265, %v6275
        %v6281 = vadd.f32 %v6266, %v6275
        %v6282 = vadd.f32 %v6267, %v6275
        %v6283 = vadd.f32 %v6268, %v6275
        %v6284 = vadd.f32 %v6269, %v6275
        %v6285 = vmax.f32 %v6277, 0.0
        %v6286 = vmax.f32 %v6278, 0.0
        %v6287 = vmax.f32 %v6279, 0.0
        %v6288 = vmax.f32 %v6280, 0.0
        %v6289 = vmax.f32 %v6281, 0.0
        %v6290 = vmax.f32 %v6282, 0.0
        %v6291 = vmax.f32 %v6283, 0.0
        %v6292 = vmax.f32 %v6284, 0.0
        %v6293 = vld [vmem:[%s2067] sm:$0xf]
        %v6294 = vld [vmem:[%s2067 + $0x4] sm:$0x1]
        %v6295 = vld [vmem:[%s2067 + $0x8] sm:$0xf]
        %v6296 = vld [vmem:[%s2067 + $0xc] sm:$0x1]
        %v6297 = vld [vmem:[%s2067 + $0x10] sm:$0xf]
        %v6298 = vld [vmem:[%s2067 + $0x14] sm:$0x1]
        %v6299 = vld [vmem:[%s2067 + $0x18] sm:$0xf]
        %v6300 = vld [vmem:[%s2067 + $0x1c] sm:$0x1]
        %v6301 = vld [vmem:[%s2067 + $0x20] sm:$0xf]
        %v6302 = vld [vmem:[%s2067 + $0x24] sm:$0x1]
        %v6303 = vld [vmem:[%s2067 + $0x28] sm:$0xf]
        %v6304 = vld [vmem:[%s2067 + $0x2c] sm:$0x1]
        %v6305 = vld [vmem:[%s2067 + $0x30] sm:$0xf]
        %v6306 = vld [vmem:[%s2067 + $0x34] sm:$0x1]
        %v6307 = vld [vmem:[%s2067 + $0x38] sm:$0xf]
        %v6308 = vld [vmem:[%s2067 + $0x3c] sm:$0x1]
        %v6310 = vshrl.u32 %v6293, 16
        %v6312 = vrot.slane %v6310, 4
        %v6313 = vshll.u32 %v6293, 16
        %v6315 = vrot.slane %v6313, 5
        %v6316 = vor.u32 %v6312, %v6315
        %v6317 = vrot.slane %v6316, 4
        %v6319 = vshll.u32 %v6294, 16
        %v6321 = vrot.slane %v6319, 5
        %v6322 = vsel %vm1050, %v6317, %v6321
        %v6324 = vshrl.u32 %v6295, 16
        %v6326 = vrot.slane %v6324, 4
        %v6327 = vshll.u32 %v6295, 16
        %v6329 = vrot.slane %v6327, 5
        %v6330 = vor.u32 %v6326, %v6329
        %v6331 = vrot.slane %v6330, 4
        %v6333 = vshll.u32 %v6296, 16
        %v6335 = vrot.slane %v6333, 5
        %v6336 = vsel %vm1050, %v6331, %v6335
        %v6338 = vshrl.u32 %v6297, 16
        %v6340 = vrot.slane %v6338, 4
        %v6341 = vshll.u32 %v6297, 16
        %v6343 = vrot.slane %v6341, 5
        %v6344 = vor.u32 %v6340, %v6343
        %v6345 = vrot.slane %v6344, 4
        %v6347 = vshll.u32 %v6298, 16
        %v6349 = vrot.slane %v6347, 5
        %v6350 = vsel %vm1050, %v6345, %v6349
        %v6352 = vshrl.u32 %v6299, 16
        %v6354 = vrot.slane %v6352, 4
        %v6355 = vshll.u32 %v6299, 16
        %v6357 = vrot.slane %v6355, 5
        %v6358 = vor.u32 %v6354, %v6357
        %v6359 = vrot.slane %v6358, 4
        %v6361 = vshll.u32 %v6300, 16
        %v6363 = vrot.slane %v6361, 5
        %v6364 = vsel %vm1050, %v6359, %v6363
        %v6366 = vshrl.u32 %v6301, 16
        %v6368 = vrot.slane %v6366, 4
        %v6369 = vshll.u32 %v6301, 16
        %v6371 = vrot.slane %v6369, 5
        %v6372 = vor.u32 %v6368, %v6371
        %v6373 = vrot.slane %v6372, 4
        %v6375 = vshll.u32 %v6302, 16
        %v6377 = vrot.slane %v6375, 5
        %v6378 = vsel %vm1050, %v6373, %v6377
        %v6380 = vshrl.u32 %v6303, 16
        %v6382 = vrot.slane %v6380, 4
        %v6383 = vshll.u32 %v6303, 16
        %v6385 = vrot.slane %v6383, 5
        %v6386 = vor.u32 %v6382, %v6385
        %v6387 = vrot.slane %v6386, 4
        %v6389 = vshll.u32 %v6304, 16
        %v6391 = vrot.slane %v6389, 5
        %v6392 = vsel %vm1050, %v6387, %v6391
        %v6394 = vshrl.u32 %v6305, 16
        %v6396 = vrot.slane %v6394, 4
        %v6397 = vshll.u32 %v6305, 16
        %v6399 = vrot.slane %v6397, 5
        %v6400 = vor.u32 %v6396, %v6399
        %v6401 = vrot.slane %v6400, 4
        %v6403 = vshll.u32 %v6306, 16
        %v6405 = vrot.slane %v6403, 5
        %v6406 = vsel %vm1050, %v6401, %v6405
        %v6408 = vshrl.u32 %v6307, 16
        %v6410 = vrot.slane %v6408, 4
        %v6411 = vshll.u32 %v6307, 16
        %v6413 = vrot.slane %v6411, 5
        %v6414 = vor.u32 %v6410, %v6413
        %v6415 = vrot.slane %v6414, 4
        %v6417 = vshll.u32 %v6308, 16
        %v6419 = vrot.slane %v6417, 5
        %v6420 = vsel %vm1050, %v6415, %v6419
        %v6429 = vunpack.c.l.bf16 %v6322
        %v6430 = vunpack.c.l.bf16 %v6336
        %v6431 = vunpack.c.l.bf16 %v6350
        %v6432 = vunpack.c.l.bf16 %v6364
        %v6433 = vunpack.c.l.bf16 %v6378
        %v6434 = vunpack.c.l.bf16 %v6392
        %v6435 = vunpack.c.l.bf16 %v6406
        %v6436 = vunpack.c.l.bf16 %v6420
        %v6437 = vadd.f32 %v6285, %v6429
        %v6438 = vadd.f32 %v6286, %v6430
        %v6439 = vadd.f32 %v6287, %v6431
        %v6440 = vadd.f32 %v6288, %v6432
        %v6441 = vadd.f32 %v6289, %v6433
        %v6442 = vadd.f32 %v6290, %v6434
        %v6443 = vadd.f32 %v6291, %v6435
        %v6444 = vadd.f32 %v6292, %v6436
        %v6445 = vpack.c.bf16 %v6438, %v6437
        %v6446 = vpack.c.bf16 %v6440, %v6439
        %v6447 = vpack.c.bf16 %v6442, %v6441
        %v6448 = vpack.c.bf16 %v6444, %v6443
        %v6453 = vunpack.c.l.b16 %v6445
        %v6454 = vunpack.c.h.b16 %v6445
        %v6455 = vunpack.c.l.b16 %v6446
        %v6456 = vunpack.c.h.b16 %v6446
        %v6457 = vunpack.c.l.b16 %v6447
        %v6458 = vunpack.c.h.b16 %v6447
        %v6459 = vunpack.c.l.b16 %v6448
        %v6460 = vunpack.c.h.b16 %v6448
        %v6461 = vpack.c.b16 %v6453, %v6453
        %v6462 = vpack.c.b16 %v6454, %v6454
        %v6463 = vpack.c.b16 %v6455, %v6455
        %v6464 = vpack.c.b16 %v6456, %v6456
        %v6465 = vpack.c.b16 %v6457, %v6457
        %v6466 = vpack.c.b16 %v6458, %v6458
        %v6467 = vpack.c.b16 %v6459, %v6459
        %v6468 = vpack.c.b16 %v6460, %v6460
        %6477 = vst [vmem:[%s301] sm:$0xf] %v6461
        %6478 = vst [vmem:[%s301 + $0x4] sm:$0xf] %v6462
        %6479 = vst [vmem:[%s301 + $0x8] sm:$0xf] %v6463
        %6480 = vst [vmem:[%s301 + $0xc] sm:$0xf] %v6464
        %6481 = vst [vmem:[%s301 + $0x10] sm:$0xf] %v6465
        %6482 = vst [vmem:[%s301 + $0x14] sm:$0xf] %v6466
        %6483 = vst [vmem:[%s301 + $0x18] sm:$0xf] %v6467
        %6484 = vst [vmem:[%s301 + $0x1c] sm:$0xf] %v6468
        %s6485 = sand.u32 %s183, 1
        %s6486 = scalar_lea.sflag [#allocation6], %s6485
        %s6487 = sand.u32 %s183, 1
        %s6488 = smul.addr %s6487, 32
        %s6489 = scalar_lea.vmem [#allocation9], %s6488
        // Predicated region
        $region57: #{tpu_custom_call.1} parent=47 // pred_check
          %p6490 = pneg %p193
        $region58: #{tpu_custom_call.1} parent=47 // pred_check_branch
          %6492 = sbr.rel (%p6490) target = $region60
        $region59: #{tpu_custom_call.1} parent=47 // pred_region
          %s6494 = ssub.s32 512, 512
          %6495 = vsyncadd %s6486, %s6494
          %s6496 = smul.addr %s23, 8
          %s6497 = smul.addr %s6496, 64
          %s6498 = scalar_lea.hbm %s7, %s6497
          %s6499 = sshll.u32 %s6489, 4
          %s6500 = int_to_ptr.vmem [resolvable:$true] %s6499
          %6505 = dma.vmem_to_hbm [thread:$0]  %s6500, 512, %s6498, %s6486, 64, 64, 4
        $region60: #{tpu_custom_call.1} parent=47 // pred_fallthru
          _
      $region48: #{tpu_custom_call.1} parent=5 // pred_fallthru
        _
      %p6506 = scmp.le.s32.totalorder 2, %s18
      // Predicated region
      $region61: #{tpu_custom_call.1} parent=5 // pred_check
        %p6507 = pneg %p6506
      $region62: #{tpu_custom_call.1} parent=5 // pred_check_branch
        %6509 = sbr.rel (%p6507) target = $region64
      $region63: #{tpu_custom_call.1} parent=5 // pred_region
        %s6510 = ssub.s32 %s18, 2
        // Predicated region
        $region65: #{tpu_custom_call.1} parent=63 // pred_check
          %p6511 = pneg %p199
        $region66: #{tpu_custom_call.1} parent=63 // pred_check_branch
          %6513 = sbr.rel (%p6511) target = $region68
        $region67: #{tpu_custom_call.1} parent=63 // pred_region
          %s6514 = sand.u32 %s184, 1
          %s6515 = scalar_lea.sflag [#allocation6], %s6514
          %s6516 = sand.u32 %s184, 1
          %s6517 = smul.addr %s6516, 32
          %s6518 = scalar_lea.vmem [#allocation9], %s6517
          %6519 = dma.done %s6515, 512
        $region68: #{tpu_custom_call.1} parent=63 // pred_fallthru
          _
      $region64: #{tpu_custom_call.1} parent=5 // pred_fallthru
        _
    $region6: #{tpu_custom_call.1} parent=1 // loop_footer
      %s22 = sadd.s32 1, %s18
    $region7: #{tpu_custom_call.1} parent=1 // loop_footer_branch
      %17 = sbr.rel target = $region3
    $region8: #{tpu_custom_call.1} parent=1 // loop_exit
      _
    %6520 = vsyncpa [#allocation5], 1
    %s6521 = scalar_lea.sflag [#allocation5], 1
    %6522 = vsyncpa %s6521, 1
    %6523 = vsyncpa [#allocation8], 1
    %6524 = vsyncpa [#allocation6], 1
    %s6525 = scalar_lea.sflag [#allocation6], 1
    %6526 = vsyncpa %s6525, 1

</llo_original>
